<compile_context>
chip_gen: v7x
topology: tpu7x:2x2x1
jax: 0.10.0
libtpu: 0.0.40
codegen_flags: <defaults>
</compile_context>

<pallas_src>
import functools

import jax
import jax.numpy as jnp
from jax.experimental import pallas as pl
from jax.experimental.pallas import tpu as pltpu

IN_FEATURES = 8192
HIDDEN = 4096
OUT_FEATURES = 1
N_BLOCKS = 2  # HIDDEN split; maps to the "parallel" grid axis (2 TensorCores on v7x)


def mlp_kernel(x_ref, w1_ref, b1_ref, w2r_ref, o_ref, acc_ref):
    """Grid = (n, k): n splits HIDDEN ("parallel"), k walks the fc1 contraction ("arbitrary").

    x_ref   : (K//block_k, B, block_k)  resident, pre-tiled input
    w1_ref  : (block_k, block_n)        streamed W1 tile
    b1_ref  : (1, block_n)              fc1 bias slice (resident per n-column)
    w2r_ref : (1, block_n)              fc2 weight row slice (resident per n-column)
    o_ref   : (1, B, 1)                 per-n partial output
    acc_ref : (B, block_n) f32          fc1 accumulator scratch
    """
    k = pl.program_id(1)

    @pl.when(k == 0)
    def _():
        acc_ref[...] = jnp.zeros_like(acc_ref)

    x_tile = x_ref[k]  # (B, block_k), dynamic index along leading axis
    acc_ref[...] += jnp.dot(x_tile, w1_ref[...], preferred_element_type=jnp.float32)

    @pl.when(k == pl.num_programs(1) - 1)
    def _():
        h = jnp.maximum(acc_ref[...] + b1_ref[...], 0.0)        # ReLU(fc1) slice
        y = jnp.sum(h * w2r_ref[...], axis=-1, keepdims=True)   # partial fc2 (VPU/XLU)
        o_ref[...] = y[None].astype(o_ref.dtype)


@functools.partial(jax.jit, static_argnames=("block_k",))
def mlp_block_forward(x, w1_t, b1, w2_t, b2, *, block_k=1024):
    """x: (B, 8192) f32; w1_t: (8192, 4096); b1: (4096,); w2_t: (4096, 1); b2: (1,)."""
    B, K = x.shape
    assert K == IN_FEATURES and K % block_k == 0
    assert HIDDEN % N_BLOCKS == 0
    block_n = HIDDEN // N_BLOCKS
    n_k = K // block_k

    # Pre-tile x so the kernel slices it along the leading axis (cheap: 256 KiB).
    x_tiled = jnp.swapaxes(x.reshape(B, n_k, block_k), 0, 1)   # (n_k, B, block_k)
    b1_2d = b1.reshape(1, HIDDEN)
    w2_row = w2_t.reshape(1, HIDDEN)                           # lane-dense fc2 weights

    flops = 2 * B * K * HIDDEN + 2 * B * HIDDEN
    bytes_accessed = 4 * (K * HIDDEN + B * K + 2 * HIDDEN + N_BLOCKS * B)

    partials = pl.pallas_call(
        mlp_kernel,
        out_shape=jax.ShapeDtypeStruct((N_BLOCKS, B, OUT_FEATURES), x.dtype),
        grid_spec=pltpu.PrefetchScalarGridSpec(
            num_scalar_prefetch=0,
            grid=(N_BLOCKS, n_k),
            in_specs=[
                pl.BlockSpec((n_k, B, block_k), lambda n, k: (0, 0, 0)),   # x (resident)
                pl.BlockSpec((block_k, block_n), lambda n, k: (k, n)),     # W1 tile (streamed)
                pl.BlockSpec((1, block_n), lambda n, k: (0, n)),           # b1 slice
                pl.BlockSpec((1, block_n), lambda n, k: (0, n)),           # w2 row slice
            ],
            out_specs=pl.BlockSpec((1, B, OUT_FEATURES), lambda n, k: (n, 0, 0)),
            scratch_shapes=[pltpu.VMEM((B, block_n), jnp.float32)],
        ),
        compiler_params=pltpu.CompilerParams(
            dimension_semantics=("parallel", "arbitrary"),   # n across cores, k = reduction
            vmem_limit_bytes=40 * 1024 * 1024,               # fits v7x's 64 MiB physical VMEM
        ),
        cost_estimate=pl.CostEstimate(
            flops=flops, transcendentals=0, bytes_accessed=bytes_accessed),
    )(x_tiled, w1_t, b1_2d, w2_row)

    # Combine the per-column partial fc2 results and add the fc2 bias.
    return partials.sum(axis=0) + b2.reshape(1, OUT_FEATURES)


def init_params(key):
    """Deterministic init mirroring torch.nn.Linear default (U(-1/sqrt(fan_in), +))."""
    k1, k2, k3, k4 = jax.random.split(key, 4)
    bound1 = 1.0 / (IN_FEATURES ** 0.5)
    bound2 = 1.0 / (HIDDEN ** 0.5)
    # Stored already transposed: (in_features, out_features).
    w1_t = jax.random.uniform(k1, (IN_FEATURES, HIDDEN), jnp.float32, -bound1, bound1)
    b1 = jax.random.uniform(k2, (HIDDEN,), jnp.float32, -bound1, bound1)
    w2_t = jax.random.uniform(k3, (HIDDEN, OUT_FEATURES), jnp.float32, -bound2, bound2)
    b2 = jax.random.uniform(k4, (OUT_FEATURES,), jnp.float32, -bound2, bound2)
    return w1_t, b1, w2_t, b2


if __name__ == "__main__":
    key = jax.random.PRNGKey(0)
    kx, kp = jax.random.split(key)

    B = 8  # small batch; feature dims are fixed by the module (8192 -> 4096 -> 1)
    x = jax.random.normal(kx, (B, IN_FEATURES), jnp.float32)
    w1_t, b1, w2_t, b2 = init_params(kp)

    out = mlp_block_forward(x, w1_t, b1, w2_t, b2)
    out = jax.block_until_ready(out)

    # Pure-JAX reference for sanity.
    ref = jnp.maximum(x @ w1_t + b1, 0.0) @ w2_t + b2
    assert out.shape == (B, OUT_FEATURES)
    assert jnp.allclose(out, ref, atol=2e-3, rtol=2e-3), "mismatch vs reference"

    print("KERNEL_OK")
</pallas_src>

<mosaic_0001>
module attributes {stable_mosaic.version = 11 : i64} {
  func.func @mlp_kernel(%arg0: i32, %arg1: i32, %arg2: memref<8x8x1024xf32, #tpu.memory_space<vmem>>, %arg3: memref<1024x2048xf32, #tpu.memory_space<vmem>>, %arg4: memref<1x2048xf32, #tpu.memory_space<vmem>>, %arg5: memref<1x2048xf32, #tpu.memory_space<vmem>>, %arg6: memref<1x8x1xf32, #tpu.memory_space<vmem>>, %arg7: memref<8x2048xf32, #tpu.memory_space<vmem>>) attributes {dimension_semantics = [#tpu.dimension_semantics<parallel>, #tpu.dimension_semantics<arbitrary>], iteration_bounds = array<i64: 2, 8>, scalar_prefetch = 0 : i64, scratch_operands = 1 : i64, tpu.core_type = #tpu.core_type<tc>, window_params = [{pipeline_mode = #tpu.pipeline_mode<synchronous>, transform_indices = @transform_0, window_bounds = array<i64: 8, 8, 1024>}, {transform_indices = @transform_1, window_bounds = array<i64: 1024, 2048>}, {transform_indices = @transform_2, window_bounds = array<i64: 1, 2048>}, {transform_indices = @transform_3, window_bounds = array<i64: 1, 2048>}, {transform_indices = @transform_4, window_bounds = array<i64: 1, 8, 1>}]} {
    %c0_i32 = arith.constant 0 : i32
    %0 = arith.cmpi eq, %arg1, %c0_i32 : i32
    %1 = arith.extui %0 : i1 to i32
    %c0_i32_0 = arith.constant 0 : i32
    %2 = arith.cmpi ne, %1, %c0_i32_0 : i32
    scf.if %2 {
      %cst_9 = arith.constant 0.000000e+00 : f32
      %14 = vector.broadcast %cst_9 : f32 to vector<8x2048xf32>
      %c0_10 = arith.constant 0 : index
      %c0_11 = arith.constant 0 : index
      %15 = vector.load %arg7[%c0_10, %c0_11] : memref<8x2048xf32, #tpu.memory_space<vmem>>, vector<8x2048xf32>
      tpu.vector_store %arg7[%c0_10, %c0_11], %14 {strides = array<i32>} : memref<8x2048xf32, #tpu.memory_space<vmem>>, vector<8x2048xf32>,
    } else {
    }
    %3 = arith.index_cast %arg1 : i32 to index
    %c0 = arith.constant 0 : index
    %c0_1 = arith.constant 0 : index
    %4 = vector.load %arg2[%3, %c0, %c0_1] : memref<8x8x1024xf32, #tpu.memory_space<vmem>>, vector<1x8x1024xf32>
    %5 = vector.shape_cast %4 : vector<1x8x1024xf32> to vector<8x1024xf32>
    %c0_2 = arith.constant 0 : index
    %c0_3 = arith.constant 0 : index
    %6 = vector.load %arg7[%c0_2, %c0_3] : memref<8x2048xf32, #tpu.memory_space<vmem>>, vector<8x2048xf32>
    %c0_4 = arith.constant 0 : index
    %c0_5 = arith.constant 0 : index
    %7 = vector.load %arg3[%c0_4, %c0_5] : memref<1024x2048xf32, #tpu.memory_space<vmem>>, vector<1024x2048xf32>
    %cst = arith.constant dense<0.000000e+00> : vector<8x2048xf32>
    %8 = tpu.matmul %5, %7, %cst {dimension_numbers = #tpu.dot_dimension_numbers<[1], [0], [0], [1], [0, 0, 1, 1], [], []>} : vector<8x1024xf32>, vector<1024x2048xf32>, vector<8x2048xf32> -> vector<8x2048xf32>
    %9 = arith.addf %6, %8 : vector<8x2048xf32>
    %c0_6 = arith.constant 0 : index
    %c0_7 = arith.constant 0 : index
    %10 = vector.load %arg7[%c0_6, %c0_7] : memref<8x2048xf32, #tpu.memory_space<vmem>>, vector<8x2048xf32>
    tpu.vector_store %arg7[%c0_6, %c0_7], %9 {strides = array<i32>} : memref<8x2048xf32, #tpu.memory_space<vmem>>, vector<8x2048xf32>,
    %c7_i32 = arith.constant 7 : i32
    %11 = arith.cmpi eq, %arg1, %c7_i32 : i32
    %12 = arith.extui %11 : i1 to i32
    %c0_i32_8 = arith.constant 0 : i32
    %13 = arith.cmpi ne, %12, %c0_i32_8 : i32
    scf.if %13 {
      %c0_9 = arith.constant 0 : index
      %c0_10 = arith.constant 0 : index
      %14 = vector.load %arg7[%c0_9, %c0_10] : memref<8x2048xf32, #tpu.memory_space<vmem>>, vector<8x2048xf32>
      %c0_11 = arith.constant 0 : index
      %c0_12 = arith.constant 0 : index
      %15 = vector.load %arg4[%c0_11, %c0_12] : memref<1x2048xf32, #tpu.memory_space<vmem>>, vector<1x2048xf32>
      %16 = vector.broadcast %15 : vector<1x2048xf32> to vector<8x2048xf32>
      %17 = arith.addf %14, %16 : vector<8x2048xf32>
      %cst_13 = arith.constant 0.000000e+00 : f32
      %18 = vector.broadcast %cst_13 : f32 to vector<8x2048xf32>
      %19 = arith.maximumf %17, %18 : vector<8x2048xf32>
      %c0_14 = arith.constant 0 : index
      %c0_15 = arith.constant 0 : index
      %20 = vector.load %arg5[%c0_14, %c0_15] : memref<1x2048xf32, #tpu.memory_space<vmem>>, vector<1x2048xf32>
      %21 = vector.broadcast %20 : vector<1x2048xf32> to vector<8x2048xf32>
      %22 = arith.mulf %19, %21 : vector<8x2048xf32>
      %cst_16 = arith.constant dense<0.000000e+00> : vector<8xf32>
      %23 = vector.multi_reduction <add>, %22, %cst_16 [1] : vector<8x2048xf32> to vector<8xf32>
      %24 = vector.shape_cast %23 : vector<8xf32> to vector<8x1xf32>
      %25 = vector.shape_cast %24 : vector<8x1xf32> to vector<1x8x1xf32>
      %c0_17 = arith.constant 0 : index
      %c0_18 = arith.constant 0 : index
      %c0_19 = arith.constant 0 : index
      %26 = vector.load %arg6[%c0_17, %c0_18, %c0_19] : memref<1x8x1xf32, #tpu.memory_space<vmem>>, vector<1x8x1xf32>
      tpu.vector_store %arg6[%c0_17, %c0_18, %c0_19], %25 {strides = array<i32>} : memref<1x8x1xf32, #tpu.memory_space<vmem>>, vector<1x8x1xf32>,
    } else {
    }
    return
  }
  func.func @transform_0(%arg0: i32, %arg1: i32) -> (i32, i32, i32) {
    %c0_i32 = arith.constant 0 : i32
    %c0_i32_0 = arith.constant 0 : i32
    %c0_i32_1 = arith.constant 0 : i32
    %c0_i32_2 = arith.constant 0 : i32
    return %c0_i32, %c0_i32_0, %c0_i32_1 : i32, i32, i32
  }
  func.func @transform_1(%arg0: i32, %arg1: i32) -> (i32, i32) {
    %c0_i32 = arith.constant 0 : i32
    return %arg1, %arg0 : i32, i32
  }
  func.func @transform_2(%arg0: i32, %arg1: i32) -> (i32, i32) {
    %c0_i32 = arith.constant 0 : i32
    %c0_i32_0 = arith.constant 0 : i32
    return %c0_i32, %arg0 : i32, i32
  }
  func.func @transform_3(%arg0: i32, %arg1: i32) -> (i32, i32) {
    %c0_i32 = arith.constant 0 : i32
    %c0_i32_0 = arith.constant 0 : i32
    return %c0_i32, %arg0 : i32, i32
  }
  func.func @transform_4(%arg0: i32, %arg1: i32) -> (i32, i32, i32) {
    %c0_i32 = arith.constant 0 : i32
    %c0_i32_0 = arith.constant 0 : i32
    %c0_i32_1 = arith.constant 0 : i32
    return %arg0, %c0_i32, %c0_i32_0 : i32, i32, i32
  }
}

</mosaic_0001>

<llo_original>
// kernel: mlp_block_forward.1
$region0: #{mlp_block_forward.1}
  #allocation0 [shape = 'u32[]', space=smem, size = 0x4, offset = 0x4, fixed_abs, tag = 'smem constant byte address 0x4 - core index']
  #allocation1 [shape = 'u32[144,128]{1,0:T(1,128)}', space=vmem, size = 0x12000, scoped, tag = 'internal scratch']
  #allocation2 [shape = 'f32[8,2048]{1,0:T(8,128)}', space=vmem, size = 0x10000, scoped, tag = 'scratch operand']
  %s0 = inlined_call_operand.hbm [shape: f32[8,8,1024], index: 0, kind: input, shape index: {}]
  %s1 = inlined_call_operand.hbm [shape: f32[8192,4096], index: 1, kind: input, shape index: {}]
  %s2 = inlined_call_operand.hbm [shape: f32[1,4096], index: 2, kind: input, shape index: {}]
  %s3 = inlined_call_operand.hbm [shape: f32[1,4096], index: 3, kind: input, shape index: {}]
  %s4 = inlined_call_operand.vmem [shape: f32[2,8,1], index: 4, kind: output, shape index: {}]
  %s5 = sld [smem:[#allocation0]]
  $region73: #{mlp_block_forward.1} parent=0
    _
  %s7 = ssub.s32 1, %s5
  %s8 = scalar_select 0, %s7, %s5
  $region1: #{mlp_block_forward.1} parent=0
    #allocation3 [shape = 'u8[262144]{0}', space=vmem, size = 0x40000, scoped, tag = 'input window, operand 0, single buffered']
    #allocation4 [shape = 's32[2]{0}', space=sflag, size = 0x8, scoped, tag = 'scoped memory for mlp_block_forward.1']
    #allocation5 [shape = 'u8[16777216]{0}', space=vmem, size = 0x1000000, scoped, tag = 'input window, operand 1']
    #allocation6 [shape = 's32[2]{0}', space=sflag, size = 0x8, scoped, tag = 'scoped memory for mlp_block_forward.1']
    #allocation7 [shape = 'u8[16384]{0}', space=vmem, size = 0x4000, scoped, tag = 'input window, operand 2']
    #allocation8 [shape = 'u8[16384]{0}', space=vmem, size = 0x4000, scoped, tag = 'input window, operand 3']
    #allocation9 [shape = 's32[2]{0}', space=sflag, size = 0x8, scoped, tag = 'scoped memory for mlp_block_forward.1']
    %9 = vsyncpa [#allocation4], 0
    %10 = vsyncpa [#allocation6], 0
    %s11 = scalar_lea.sflag [#allocation6], 1
    %12 = vsyncpa %s11, 0
    %13 = vsyncpa [#allocation9], 0
    %s14 = scalar_lea.sflag [#allocation9], 1
    %15 = vsyncpa %s14, 0
    loop: start=0, step=1, limit=18
    $region2: #{mlp_block_forward.1} parent=1 // loop_pre_header
      _
    $region3: #{mlp_block_forward.1} parent=1 // loop_header
      %s17 = sphi 0, %s21
      %p18 = scmp.ge.s32.totalorder %s17, 18
      %s24 = sphi 0, %s36
      %s25 = sphi 0, %s32
      %s26 = sphi 0, %s24
      %s27 = sphi 0, %s25
      %s28 = sphi 0, %s26
      %s29 = sphi 0, %s27
      %s37 = sphi 0, %s37
      %s39 = sphi 0, %s37
      %s40 = sphi 0, %s39
      %s54 = sphi 0, %s40
      %s62 = sphi 0, %s64
      %s65 = sphi 0, %s62
      %s66 = sphi 0, %s65
      %s82 = sphi 0, %s66
      %s88 = sphi 0, %s90
      %s91 = sphi 0, %s88
      %s92 = sphi 0, %s91
      %s108 = sphi 0, %s92
      %s114 = sphi 0, %s116
      %s117 = sphi 0, %s114
      %s118 = sphi 0, %s117
      %s134 = sphi 0, %s118
      %s140 = sphi 0, %s142
      %s143 = sphi 0, %s140
      %s144 = sphi 0, %s143
      %s160 = sphi 0, %s144
    $region4: #{mlp_block_forward.1} parent=1 // loop_header_branch
      %20 = sbr.rel (%p18) target = $region8
    $region5: #{mlp_block_forward.1} parent=1 // loop_body
      %s22 = ssub.s32 %s17, 1
      %s23 = ssub.s32 %s17, 2
      %s30 = sadd.s32 1, %s25
      %p31 = scmp.ge.s32.totalorder %s30, 8
      %s32 = scalar_select %p31, 0, %s30
      %s33 = sadd.s32 1, %s24
      %s34 = scalar_select %p31, %s33, %s24
      %p35 = scmp.ge.s32.totalorder %s34, 2
      %s36 = scalar_select %p35, 0, %s34
      %s38 = sadd.s32 %s37, 1
      %p41 = scmp.eq.s32.totalorder %s17, 15
      %p42 = scmp.ne.s32.totalorder %s37, %s39
      %p43 = scmp.eq.s32.totalorder %s17, 0
      %p44 = por %p42, %p43
      %p45 = scmp.ne.s32.totalorder %s37, %s39
      %p46 = scmp.eq.s32.totalorder %s22, 15
      %p47 = por %p45, %p46
      %p48 = scmp.ne.s32.totalorder %s39, %s40
      %p49 = scmp.eq.s32.totalorder %s22, 0
      %p50 = por %p48, %p49
      %p51 = scmp.ne.s32.totalorder %s39, %s40
      %p52 = scmp.eq.s32.totalorder %s23, 15
      %p53 = por %p51, %p52
      %p55 = scmp.ne.s32.totalorder %s40, %s54
      %p56 = scmp.eq.s32.totalorder %s23, 0
      %p57 = por %p55, %p56
      %s58 = ssub.s32 %s25, %s32
      %s59 = ssub.s32 %s24, %s36
      %s60 = sor.u32 %s58, %s59
      %p61 = scmp.eq.s32.totalorder %s60, 0
      %s63 = sadd.s32 %s62, 1
      %s64 = scalar_select %p61, %s62, %s63
      %p67 = pneg %p61
      %p68 = scmp.eq.s32.totalorder %s17, 15
      %p69 = por %p67, %p68
      %p70 = scmp.ne.s32.totalorder %s62, %s65
      %p71 = scmp.eq.s32.totalorder %s17, 0
      %p72 = por %p70, %p71
      %p73 = scmp.ne.s32.totalorder %s62, %s65
      %p74 = scmp.eq.s32.totalorder %s22, 15
      %p75 = por %p73, %p74
      %p76 = scmp.ne.s32.totalorder %s65, %s66
      %p77 = scmp.eq.s32.totalorder %s22, 0
      %p78 = por %p76, %p77
      %p79 = scmp.ne.s32.totalorder %s65, %s66
      %p80 = scmp.eq.s32.totalorder %s23, 15
      %p81 = por %p79, %p80
      %p83 = scmp.ne.s32.totalorder %s66, %s82
      %p84 = scmp.eq.s32.totalorder %s23, 0
      %p85 = por %p83, %p84
      %s86 = ssub.s32 %s24, %s36
      %p87 = scmp.eq.s32.totalorder %s86, 0
      %s89 = sadd.s32 %s88, 1
      %s90 = scalar_select %p87, %s88, %s89
      %p93 = pneg %p87
      %p94 = scmp.eq.s32.totalorder %s17, 15
      %p95 = por %p93, %p94
      %p96 = scmp.ne.s32.totalorder %s88, %s91
      %p97 = scmp.eq.s32.totalorder %s17, 0
      %p98 = por %p96, %p97
      %p99 = scmp.ne.s32.totalorder %s88, %s91
      %p100 = scmp.eq.s32.totalorder %s22, 15
      %p101 = por %p99, %p100
      %p102 = scmp.ne.s32.totalorder %s91, %s92
      %p103 = scmp.eq.s32.totalorder %s22, 0
      %p104 = por %p102, %p103
      %p105 = scmp.ne.s32.totalorder %s91, %s92
      %p106 = scmp.eq.s32.totalorder %s23, 15
      %p107 = por %p105, %p106
      %p109 = scmp.ne.s32.totalorder %s92, %s108
      %p110 = scmp.eq.s32.totalorder %s23, 0
      %p111 = por %p109, %p110
      %s112 = ssub.s32 %s24, %s36
      %p113 = scmp.eq.s32.totalorder %s112, 0
      %s115 = sadd.s32 %s114, 1
      %s116 = scalar_select %p113, %s114, %s115
      %p119 = pneg %p113
      %p120 = scmp.eq.s32.totalorder %s17, 15
      %p121 = por %p119, %p120
      %p122 = scmp.ne.s32.totalorder %s114, %s117
      %p123 = scmp.eq.s32.totalorder %s17, 0
      %p124 = por %p122, %p123
      %p125 = scmp.ne.s32.totalorder %s114, %s117
      %p126 = scmp.eq.s32.totalorder %s22, 15
      %p127 = por %p125, %p126
      %p128 = scmp.ne.s32.totalorder %s117, %s118
      %p129 = scmp.eq.s32.totalorder %s22, 0
      %p130 = por %p128, %p129
      %p131 = scmp.ne.s32.totalorder %s117, %s118
      %p132 = scmp.eq.s32.totalorder %s23, 15
      %p133 = por %p131, %p132
      %p135 = scmp.ne.s32.totalorder %s118, %s134
      %p136 = scmp.eq.s32.totalorder %s23, 0
      %p137 = por %p135, %p136
      %s138 = ssub.s32 %s24, %s36
      %p139 = scmp.eq.s32.totalorder %s138, 0
      %s141 = sadd.s32 %s140, 1
      %s142 = scalar_select %p139, %s140, %s141
      %p145 = pneg %p139
      %p146 = scmp.eq.s32.totalorder %s17, 15
      %p147 = por %p145, %p146
      %p148 = scmp.ne.s32.totalorder %s140, %s143
      %p149 = scmp.eq.s32.totalorder %s17, 0
      %p150 = por %p148, %p149
      %p151 = scmp.ne.s32.totalorder %s140, %s143
      %p152 = scmp.eq.s32.totalorder %s22, 15
      %p153 = por %p151, %p152
      %p154 = scmp.ne.s32.totalorder %s143, %s144
      %p155 = scmp.eq.s32.totalorder %s22, 0
      %p156 = por %p154, %p155
      %p157 = scmp.ne.s32.totalorder %s143, %s144
      %p158 = scmp.eq.s32.totalorder %s23, 15
      %p159 = por %p157, %p158
      %p161 = scmp.ne.s32.totalorder %s144, %s160
      %p162 = scmp.eq.s32.totalorder %s23, 0
      %p163 = por %p161, %p162
      %p164 = scmp.le.s32.totalorder 1, %s17
      %p165 = scmp.lt.s32.totalorder %s17, 17
      %p166 = pnand %p164, %p165
      %p167 = pneg %p166
      // Predicated region
      $region9: #{mlp_block_forward.1} parent=5 // pred_check
        _
      $region10: #{mlp_block_forward.1} parent=5 // pred_check_branch
        %169 = sbr.rel (%p166) target = $region12
      $region11: #{mlp_block_forward.1} parent=5 // pred_region
        %s170 = ssub.s32 %s17, 1
        // Predicated region
        $region13: #{mlp_block_forward.1} parent=11 // pred_check
          %p171 = pneg %p50
        $region14: #{mlp_block_forward.1} parent=11 // pred_check_branch
          %173 = sbr.rel (%p171) target = $region16
        $region15: #{mlp_block_forward.1} parent=11 // pred_region
          %s175 = ssub.s32 8192, 8192
          %176 = vsyncadd [#allocation4], %s175
          %s177 = sshll.u32 [#allocation3], 4
          %s178 = int_to_ptr.vmem [resolvable:$true] %s177
          %183 = dma.hbm_to_vmem [thread:$0]  %s0, 8192, %s178, [#allocation4], 1024, 1024, 64
        $region16: #{mlp_block_forward.1} parent=11 // pred_fallthru
          _
      $region12: #{mlp_block_forward.1} parent=5 // pred_fallthru
        _
      %p184 = scmp.lt.s32.totalorder %s17, 16
      // Predicated region
      $region17: #{mlp_block_forward.1} parent=5 // pred_check
        %p185 = pneg %p184
      $region18: #{mlp_block_forward.1} parent=5 // pred_check_branch
        %187 = sbr.rel (%p185) target = $region20
      $region19: #{mlp_block_forward.1} parent=5 // pred_region
        // Predicated region
        $region21: #{mlp_block_forward.1} parent=19 // pred_check
          %p188 = pneg %p72
        $region22: #{mlp_block_forward.1} parent=19 // pred_check_branch
          %190 = sbr.rel (%p188) target = $region24
        $region23: #{mlp_block_forward.1} parent=19 // pred_region
          %s191 = sand.u32 %s17, 1
          %s192 = scalar_lea.sflag [#allocation6], %s191
          %s193 = sand.u32 %s62, 1
          %s194 = smul.addr %s193, 16384
          %s195 = scalar_lea.vmem [#allocation5], %s194
          %s196 = smul.u32 128, %s25
          %s197 = smul.u32 16, %s24
          %s199 = ssub.s32 262144, 262144
          %200 = vsyncadd %s192, %s199
          %s201 = smul.addr %s196, 32
          %s202 = sadd.s32 %s197, %s201
          %s203 = smul.addr %s202, 128
          %s204 = scalar_lea.hbm %s1, %s203
          %s205 = sshll.u32 %s195, 4
          %s206 = int_to_ptr.vmem [resolvable:$true] %s205
          %211 = dma.hbm_to_vmem [thread:$0]  %s204, 262144, %s206, %s192, 4096, 2048, 128
        $region24: #{mlp_block_forward.1} parent=19 // pred_fallthru
          _
        // Predicated region
        $region25: #{mlp_block_forward.1} parent=19 // pred_check
          %p212 = pneg %p98
        $region26: #{mlp_block_forward.1} parent=19 // pred_check_branch
          %214 = sbr.rel (%p212) target = $region28
        $region27: #{mlp_block_forward.1} parent=19 // pred_region
          %s215 = sand.u32 %s17, 1
          %s216 = scalar_lea.sflag [#allocation6], %s215
          %s217 = sand.u32 %s88, 1
          %s218 = smul.addr %s217, 16
          %s219 = scalar_lea.vmem [#allocation7], %s218
          %s220 = smul.u32 16, %s24
          %s222 = ssub.s32 256, 256
          %223 = vsyncadd %s216, %s222
          %s224 = smul.addr %s220, 16
          %s225 = scalar_lea.hbm %s2, %s224
          %s227 = sshll.u32 %s219, 4
          %s228 = int_to_ptr.vmem [resolvable:$true] %s227
          %230 = dma.hbm_to_vmem [thread:$0]  %s225, 256, %s228, %s216
        $region28: #{mlp_block_forward.1} parent=19 // pred_fallthru
          _
        // Predicated region
        $region29: #{mlp_block_forward.1} parent=19 // pred_check
          %p231 = pneg %p124
        $region30: #{mlp_block_forward.1} parent=19 // pred_check_branch
          %233 = sbr.rel (%p231) target = $region32
        $region31: #{mlp_block_forward.1} parent=19 // pred_region
          %s234 = sand.u32 %s114, 1
          %s235 = scalar_lea.sflag [#allocation9], %s234
          %s236 = sand.u32 %s114, 1
          %s237 = smul.addr %s236, 16
          %s238 = scalar_lea.vmem [#allocation8], %s237
          %s239 = smul.u32 16, %s24
          %s241 = ssub.s32 256, 256
          %242 = vsyncadd %s235, %s241
          %s243 = smul.addr %s239, 16
          %s244 = scalar_lea.hbm %s3, %s243
          %s246 = sshll.u32 %s238, 4
          %s247 = int_to_ptr.vmem [resolvable:$true] %s246
          %249 = dma.hbm_to_vmem [thread:$0]  %s244, 256, %s247, %s235
        $region32: #{mlp_block_forward.1} parent=19 // pred_fallthru
          _
      $region20: #{mlp_block_forward.1} parent=5 // pred_fallthru
        _
      %p250 = scmp.le.s32.totalorder 1, %s17
      %p251 = scmp.lt.s32.totalorder %s17, 17
      %p252 = pnand %p250, %p251
      %p253 = pneg %p252
      // Predicated region
      $region33: #{mlp_block_forward.1} parent=5 // pred_check
        _
      $region34: #{mlp_block_forward.1} parent=5 // pred_check_branch
        %255 = sbr.rel (%p252) target = $region36
      $region35: #{mlp_block_forward.1} parent=5 // pred_region
        %s256 = ssub.s32 %s17, 1
        // Predicated region
        $region37: #{mlp_block_forward.1} parent=35 // pred_check
          %p257 = pneg %p50
        $region38: #{mlp_block_forward.1} parent=35 // pred_check_branch
          %259 = sbr.rel (%p257) target = $region40
        $region39: #{mlp_block_forward.1} parent=35 // pred_region
          %260 = dma.done [#allocation4], 8192
        $region40: #{mlp_block_forward.1} parent=35 // pred_fallthru
          _
        %s261 = sand.u32 %s22, 1
        %s262 = scalar_lea.sflag [#allocation6], %s261
        %s263 = sand.u32 %s65, 1
        %s264 = smul.addr %s263, 16384
        %s265 = scalar_lea.vmem [#allocation5], %s264
        // Predicated region
        $region41: #{mlp_block_forward.1} parent=35 // pred_check
          %p266 = pneg %p78
        $region42: #{mlp_block_forward.1} parent=35 // pred_check_branch
          %268 = sbr.rel (%p266) target = $region44
        $region43: #{mlp_block_forward.1} parent=35 // pred_region
          %269 = dma.done %s262, 262144
        $region44: #{mlp_block_forward.1} parent=35 // pred_fallthru
          _
        %s270 = sand.u32 %s22, 1
        %s271 = scalar_lea.sflag [#allocation6], %s270
        %s272 = sand.u32 %s91, 1
        %s273 = smul.addr %s272, 16
        %s274 = scalar_lea.vmem [#allocation7], %s273
        // Predicated region
        $region45: #{mlp_block_forward.1} parent=35 // pred_check
          %p275 = pneg %p104
        $region46: #{mlp_block_forward.1} parent=35 // pred_check_branch
          %277 = sbr.rel (%p275) target = $region48
        $region47: #{mlp_block_forward.1} parent=35 // pred_region
          %278 = dma.done %s271, 256
        $region48: #{mlp_block_forward.1} parent=35 // pred_fallthru
          _
        %s279 = sand.u32 %s117, 1
        %s280 = scalar_lea.sflag [#allocation9], %s279
        %s281 = sand.u32 %s117, 1
        %s282 = smul.addr %s281, 16
        %s283 = scalar_lea.vmem [#allocation8], %s282
        // Predicated region
        $region49: #{mlp_block_forward.1} parent=35 // pred_check
          %p284 = pneg %p130
        $region50: #{mlp_block_forward.1} parent=35 // pred_check_branch
          %286 = sbr.rel (%p284) target = $region52
        $region51: #{mlp_block_forward.1} parent=35 // pred_region
          %287 = dma.done %s280, 256
        $region52: #{mlp_block_forward.1} parent=35 // pred_fallthru
          _
        %p288 = pneg %p50
        %p289 = pneg %p47
        %s290 = sand.u32 %s22, 1
        %s291 = scalar_lea.sflag [#allocation6], %s290
        %s292 = sand.u32 %s65, 1
        %s293 = smul.addr %s292, 16384
        %s294 = scalar_lea.vmem [#allocation5], %s293
        %p295 = pneg %p78
        %p296 = pneg %p75
        %s297 = sand.u32 %s22, 1
        %s298 = scalar_lea.sflag [#allocation6], %s297
        %s299 = sand.u32 %s91, 1
        %s300 = smul.addr %s299, 16
        %s301 = scalar_lea.vmem [#allocation7], %s300
        %p302 = pneg %p104
        %p303 = pneg %p101
        %s304 = sand.u32 %s117, 1
        %s305 = scalar_lea.sflag [#allocation9], %s304
        %s306 = sand.u32 %s117, 1
        %s307 = smul.addr %s306, 16
        %s308 = scalar_lea.vmem [#allocation8], %s307
        %p309 = pneg %p130
        %p310 = pneg %p127
        %p311 = pneg %p156
        %p312 = pneg %p153
        %p313 = scmp.lt.s32.totalorder %s26, 1
        %s314 = scalar_select %p313, %s26, 1
        %s315 = smul.addr %s314, 8
        %s316 = scalar_lea.vmem %s4, %s315
        %s317 = smul.u32 128, %s27
        %s318 = smul.u32 16, %s26
        %s319 = smul.u32 16, %s26
        %s320 = smul.u32 16, %s26
        %p321 = scmp.lt.s32.totalorder %s26, 1
        %s322 = scalar_select %p321, %s26, 1
        %s323 = smul.addr %s322, 8
        %s324 = scalar_lea.vmem %s4, %s323
        %p325 = scmp.eq.s32.totalorder %s27, 0
        // Predicated region
        $region53: #{mlp_block_forward.1} parent=35 // pred_check
          %p326 = pneg %p325
        $region54: #{mlp_block_forward.1} parent=35 // pred_check_branch
          %328 = sbr.rel (%p326) target = $region56
        $region55: #{mlp_block_forward.1} parent=35 // pred_region
          %329 = vst [vmem:[#allocation2] sm:$0xff] 0.0
          %330 = vst [vmem:[#allocation2 + $0x8] sm:$0xff] 0.0
          %331 = vst [vmem:[#allocation2 + $0x10] sm:$0xff] 0.0
          %332 = vst [vmem:[#allocation2 + $0x18] sm:$0xff] 0.0
          %333 = vst [vmem:[#allocation2 + $0x20] sm:$0xff] 0.0
          %334 = vst [vmem:[#allocation2 + $0x28] sm:$0xff] 0.0
          %335 = vst [vmem:[#allocation2 + $0x30] sm:$0xff] 0.0
          %336 = vst [vmem:[#allocation2 + $0x38] sm:$0xff] 0.0
          %337 = vst [vmem:[#allocation2 + $0x40] sm:$0xff] 0.0
          %338 = vst [vmem:[#allocation2 + $0x48] sm:$0xff] 0.0
          %339 = vst [vmem:[#allocation2 + $0x50] sm:$0xff] 0.0
          %340 = vst [vmem:[#allocation2 + $0x58] sm:$0xff] 0.0
          %341 = vst [vmem:[#allocation2 + $0x60] sm:$0xff] 0.0
          %342 = vst [vmem:[#allocation2 + $0x68] sm:$0xff] 0.0
          %343 = vst [vmem:[#allocation2 + $0x70] sm:$0xff] 0.0
          %344 = vst [vmem:[#allocation2 + $0x78] sm:$0xff] 0.0
        $region56: #{mlp_block_forward.1} parent=35 // pred_fallthru
          _
        %s345 = smul.u32 %s27, 8
        %s346 = smul.addr %s345, 8
        %s347 = scalar_lea.vmem [#allocation3], %s346
        %v348 = vld [vmem:[%s347] sm:$0xff]
        %v349 = vld [vmem:[%s347 + $0x8] sm:$0xff]
        %v350 = vld [vmem:[%s347 + $0x10] sm:$0xff]
        %v351 = vld [vmem:[%s347 + $0x18] sm:$0xff]
        %v352 = vld [vmem:[%s347 + $0x20] sm:$0xff]
        %v353 = vld [vmem:[%s347 + $0x28] sm:$0xff]
        %v354 = vld [vmem:[%s347 + $0x30] sm:$0xff]
        %v355 = vld [vmem:[%s347 + $0x38] sm:$0xff]
        %v356 = vld [vmem:[#allocation2] sm:$0xff]
        %v357 = vld [vmem:[#allocation2 + $0x8] sm:$0xff]
        %v358 = vld [vmem:[#allocation2 + $0x10] sm:$0xff]
        %v359 = vld [vmem:[#allocation2 + $0x18] sm:$0xff]
        %v360 = vld [vmem:[#allocation2 + $0x20] sm:$0xff]
        %v361 = vld [vmem:[#allocation2 + $0x28] sm:$0xff]
        %v362 = vld [vmem:[#allocation2 + $0x30] sm:$0xff]
        %v363 = vld [vmem:[#allocation2 + $0x38] sm:$0xff]
        %v364 = vld [vmem:[#allocation2 + $0x40] sm:$0xff]
        %v365 = vld [vmem:[#allocation2 + $0x48] sm:$0xff]
        %v366 = vld [vmem:[#allocation2 + $0x50] sm:$0xff]
        %v367 = vld [vmem:[#allocation2 + $0x58] sm:$0xff]
        %v368 = vld [vmem:[#allocation2 + $0x60] sm:$0xff]
        %v369 = vld [vmem:[#allocation2 + $0x68] sm:$0xff]
        %v370 = vld [vmem:[#allocation2 + $0x70] sm:$0xff]
        %v371 = vld [vmem:[#allocation2 + $0x78] sm:$0xff]
        %v372 = vld [vmem:[%s265] sm:$0xff]
        %v373 = vld [vmem:[%s265 + $0x8] sm:$0xff]
        %v374 = vld [vmem:[%s265 + $0x10] sm:$0xff]
        %v375 = vld [vmem:[%s265 + $0x18] sm:$0xff]
        %v376 = vld [vmem:[%s265 + $0x20] sm:$0xff]
        %v377 = vld [vmem:[%s265 + $0x28] sm:$0xff]
        %v378 = vld [vmem:[%s265 + $0x30] sm:$0xff]
        %v379 = vld [vmem:[%s265 + $0x38] sm:$0xff]
        %v380 = vld [vmem:[%s265 + $0x40] sm:$0xff]
        %v381 = vld [vmem:[%s265 + $0x48] sm:$0xff]
        %v382 = vld [vmem:[%s265 + $0x50] sm:$0xff]
        %v383 = vld [vmem:[%s265 + $0x58] sm:$0xff]
        %v384 = vld [vmem:[%s265 + $0x60] sm:$0xff]
        %v385 = vld [vmem:[%s265 + $0x68] sm:$0xff]
        %v386 = vld [vmem:[%s265 + $0x70] sm:$0xff]
        %v387 = vld [vmem:[%s265 + $0x78] sm:$0xff]
        %v388 = vld [vmem:[%s265 + $0x80] sm:$0xff]
        %v389 = vld [vmem:[%s265 + $0x88] sm:$0xff]
        %v390 = vld [vmem:[%s265 + $0x90] sm:$0xff]
        %v391 = vld [vmem:[%s265 + $0x98] sm:$0xff]
        %v392 = vld [vmem:[%s265 + $0xa0] sm:$0xff]
        %v393 = vld [vmem:[%s265 + $0xa8] sm:$0xff]
        %v394 = vld [vmem:[%s265 + $0xb0] sm:$0xff]
        %v395 = vld [vmem:[%s265 + $0xb8] sm:$0xff]
        %v396 = vld [vmem:[%s265 + $0xc0] sm:$0xff]
        %v397 = vld [vmem:[%s265 + $0xc8] sm:$0xff]
        %v398 = vld [vmem:[%s265 + $0xd0] sm:$0xff]
        %v399 = vld [vmem:[%s265 + $0xd8] sm:$0xff]
        %v400 = vld [vmem:[%s265 + $0xe0] sm:$0xff]
        %v401 = vld [vmem:[%s265 + $0xe8] sm:$0xff]
        %v402 = vld [vmem:[%s265 + $0xf0] sm:$0xff]
        %v403 = vld [vmem:[%s265 + $0xf8] sm:$0xff]
        %v404 = vld [vmem:[%s265 + $0x100] sm:$0xff]
        %v405 = vld [vmem:[%s265 + $0x108] sm:$0xff]
        %v406 = vld [vmem:[%s265 + $0x110] sm:$0xff]
        %v407 = vld [vmem:[%s265 + $0x118] sm:$0xff]
        %v408 = vld [vmem:[%s265 + $0x120] sm:$0xff]
        %v409 = vld [vmem:[%s265 + $0x128] sm:$0xff]
        %v410 = vld [vmem:[%s265 + $0x130] sm:$0xff]
        %v411 = vld [vmem:[%s265 + $0x138] sm:$0xff]
        %v412 = vld [vmem:[%s265 + $0x140] sm:$0xff]
        %v413 = vld [vmem:[%s265 + $0x148] sm:$0xff]
        %v414 = vld [vmem:[%s265 + $0x150] sm:$0xff]
        %v415 = vld [vmem:[%s265 + $0x158] sm:$0xff]
        %v416 = vld [vmem:[%s265 + $0x160] sm:$0xff]
        %v417 = vld [vmem:[%s265 + $0x168] sm:$0xff]
        %v418 = vld [vmem:[%s265 + $0x170] sm:$0xff]
        %v419 = vld [vmem:[%s265 + $0x178] sm:$0xff]
        %v420 = vld [vmem:[%s265 + $0x180] sm:$0xff]
        %v421 = vld [vmem:[%s265 + $0x188] sm:$0xff]
        %v422 = vld [vmem:[%s265 + $0x190] sm:$0xff]
        %v423 = vld [vmem:[%s265 + $0x198] sm:$0xff]
        %v424 = vld [vmem:[%s265 + $0x1a0] sm:$0xff]
        %v425 = vld [vmem:[%s265 + $0x1a8] sm:$0xff]
        %v426 = vld [vmem:[%s265 + $0x1b0] sm:$0xff]
        %v427 = vld [vmem:[%s265 + $0x1b8] sm:$0xff]
        %v428 = vld [vmem:[%s265 + $0x1c0] sm:$0xff]
        %v429 = vld [vmem:[%s265 + $0x1c8] sm:$0xff]
        %v430 = vld [vmem:[%s265 + $0x1d0] sm:$0xff]
        %v431 = vld [vmem:[%s265 + $0x1d8] sm:$0xff]
        %v432 = vld [vmem:[%s265 + $0x1e0] sm:$0xff]
        %v433 = vld [vmem:[%s265 + $0x1e8] sm:$0xff]
        %v434 = vld [vmem:[%s265 + $0x1f0] sm:$0xff]
        %v435 = vld [vmem:[%s265 + $0x1f8] sm:$0xff]
        %v436 = vld [vmem:[%s265 + $0x200] sm:$0xff]
        %v437 = vld [vmem:[%s265 + $0x208] sm:$0xff]
        %v438 = vld [vmem:[%s265 + $0x210] sm:$0xff]
        %v439 = vld [vmem:[%s265 + $0x218] sm:$0xff]
        %v440 = vld [vmem:[%s265 + $0x220] sm:$0xff]
        %v441 = vld [vmem:[%s265 + $0x228] sm:$0xff]
        %v442 = vld [vmem:[%s265 + $0x230] sm:$0xff]
        %v443 = vld [vmem:[%s265 + $0x238] sm:$0xff]
        %v444 = vld [vmem:[%s265 + $0x240] sm:$0xff]
        %v445 = vld [vmem:[%s265 + $0x248] sm:$0xff]
        %v446 = vld [vmem:[%s265 + $0x250] sm:$0xff]
        %v447 = vld [vmem:[%s265 + $0x258] sm:$0xff]
        %v448 = vld [vmem:[%s265 + $0x260] sm:$0xff]
        %v449 = vld [vmem:[%s265 + $0x268] sm:$0xff]
        %v450 = vld [vmem:[%s265 + $0x270] sm:$0xff]
        %v451 = vld [vmem:[%s265 + $0x278] sm:$0xff]
        %v452 = vld [vmem:[%s265 + $0x280] sm:$0xff]
        %v453 = vld [vmem:[%s265 + $0x288] sm:$0xff]
        %v454 = vld [vmem:[%s265 + $0x290] sm:$0xff]
        %v455 = vld [vmem:[%s265 + $0x298] sm:$0xff]
        %v456 = vld [vmem:[%s265 + $0x2a0] sm:$0xff]
        %v457 = vld [vmem:[%s265 + $0x2a8] sm:$0xff]
        %v458 = vld [vmem:[%s265 + $0x2b0] sm:$0xff]
        %v459 = vld [vmem:[%s265 + $0x2b8] sm:$0xff]
        %v460 = vld [vmem:[%s265 + $0x2c0] sm:$0xff]
        %v461 = vld [vmem:[%s265 + $0x2c8] sm:$0xff]
        %v462 = vld [vmem:[%s265 + $0x2d0] sm:$0xff]
        %v463 = vld [vmem:[%s265 + $0x2d8] sm:$0xff]
        %v464 = vld [vmem:[%s265 + $0x2e0] sm:$0xff]
        %v465 = vld [vmem:[%s265 + $0x2e8] sm:$0xff]
        %v466 = vld [vmem:[%s265 + $0x2f0] sm:$0xff]
        %v467 = vld [vmem:[%s265 + $0x2f8] sm:$0xff]
        %v468 = vld [vmem:[%s265 + $0x300] sm:$0xff]
        %v469 = vld [vmem:[%s265 + $0x308] sm:$0xff]
        %v470 = vld [vmem:[%s265 + $0x310] sm:$0xff]
        %v471 = vld [vmem:[%s265 + $0x318] sm:$0xff]
        %v472 = vld [vmem:[%s265 + $0x320] sm:$0xff]
        %v473 = vld [vmem:[%s265 + $0x328] sm:$0xff]
        %v474 = vld [vmem:[%s265 + $0x330] sm:$0xff]
        %v475 = vld [vmem:[%s265 + $0x338] sm:$0xff]
        %v476 = vld [vmem:[%s265 + $0x340] sm:$0xff]
        %v477 = vld [vmem:[%s265 + $0x348] sm:$0xff]
        %v478 = vld [vmem:[%s265 + $0x350] sm:$0xff]
        %v479 = vld [vmem:[%s265 + $0x358] sm:$0xff]
        %v480 = vld [vmem:[%s265 + $0x360] sm:$0xff]
        %v481 = vld [vmem:[%s265 + $0x368] sm:$0xff]
        %v482 = vld [vmem:[%s265 + $0x370] sm:$0xff]
        %v483 = vld [vmem:[%s265 + $0x378] sm:$0xff]
        %v484 = vld [vmem:[%s265 + $0x380] sm:$0xff]
        %v485 = vld [vmem:[%s265 + $0x388] sm:$0xff]
        %v486 = vld [vmem:[%s265 + $0x390] sm:$0xff]
        %v487 = vld [vmem:[%s265 + $0x398] sm:$0xff]
        %v488 = vld [vmem:[%s265 + $0x3a0] sm:$0xff]
        %v489 = vld [vmem:[%s265 + $0x3a8] sm:$0xff]
        %v490 = vld [vmem:[%s265 + $0x3b0] sm:$0xff]
        %v491 = vld [vmem:[%s265 + $0x3b8] sm:$0xff]
        %v492 = vld [vmem:[%s265 + $0x3c0] sm:$0xff]
        %v493 = vld [vmem:[%s265 + $0x3c8] sm:$0xff]
        %v494 = vld [vmem:[%s265 + $0x3d0] sm:$0xff]
        %v495 = vld [vmem:[%s265 + $0x3d8] sm:$0xff]
        %v496 = vld [vmem:[%s265 + $0x3e0] sm:$0xff]
        %v497 = vld [vmem:[%s265 + $0x3e8] sm:$0xff]
        %v498 = vld [vmem:[%s265 + $0x3f0] sm:$0xff]
        %v499 = vld [vmem:[%s265 + $0x3f8] sm:$0xff]
        %v500 = vld [vmem:[%s265 + $0x400] sm:$0xff]
        %v501 = vld [vmem:[%s265 + $0x408] sm:$0xff]
        %v502 = vld [vmem:[%s265 + $0x410] sm:$0xff]
        %v503 = vld [vmem:[%s265 + $0x418] sm:$0xff]
        %v504 = vld [vmem:[%s265 + $0x420] sm:$0xff]
        %v505 = vld [vmem:[%s265 + $0x428] sm:$0xff]
        %v506 = vld [vmem:[%s265 + $0x430] sm:$0xff]
        %v507 = vld [vmem:[%s265 + $0x438] sm:$0xff]
        %v508 = vld [vmem:[%s265 + $0x440] sm:$0xff]
        %v509 = vld [vmem:[%s265 + $0x448] sm:$0xff]
        %v510 = vld [vmem:[%s265 + $0x450] sm:$0xff]
        %v511 = vld [vmem:[%s265 + $0x458] sm:$0xff]
        %v512 = vld [vmem:[%s265 + $0x460] sm:$0xff]
        %v513 = vld [vmem:[%s265 + $0x468] sm:$0xff]
        %v514 = vld [vmem:[%s265 + $0x470] sm:$0xff]
        %v515 = vld [vmem:[%s265 + $0x478] sm:$0xff]
        %v516 = vld [vmem:[%s265 + $0x480] sm:$0xff]
        %v517 = vld [vmem:[%s265 + $0x488] sm:$0xff]
        %v518 = vld [vmem:[%s265 + $0x490] sm:$0xff]
        %v519 = vld [vmem:[%s265 + $0x498] sm:$0xff]
        %v520 = vld [vmem:[%s265 + $0x4a0] sm:$0xff]
        %v521 = vld [vmem:[%s265 + $0x4a8] sm:$0xff]
        %v522 = vld [vmem:[%s265 + $0x4b0] sm:$0xff]
        %v523 = vld [vmem:[%s265 + $0x4b8] sm:$0xff]
        %v524 = vld [vmem:[%s265 + $0x4c0] sm:$0xff]
        %v525 = vld [vmem:[%s265 + $0x4c8] sm:$0xff]
        %v526 = vld [vmem:[%s265 + $0x4d0] sm:$0xff]
        %v527 = vld [vmem:[%s265 + $0x4d8] sm:$0xff]
        %v528 = vld [vmem:[%s265 + $0x4e0] sm:$0xff]
        %v529 = vld [vmem:[%s265 + $0x4e8] sm:$0xff]
        %v530 = vld [vmem:[%s265 + $0x4f0] sm:$0xff]
        %v531 = vld [vmem:[%s265 + $0x4f8] sm:$0xff]
        %v532 = vld [vmem:[%s265 + $0x500] sm:$0xff]
        %v533 = vld [vmem:[%s265 + $0x508] sm:$0xff]
        %v534 = vld [vmem:[%s265 + $0x510] sm:$0xff]
        %v535 = vld [vmem:[%s265 + $0x518] sm:$0xff]
        %v536 = vld [vmem:[%s265 + $0x520] sm:$0xff]
        %v537 = vld [vmem:[%s265 + $0x528] sm:$0xff]
        %v538 = vld [vmem:[%s265 + $0x530] sm:$0xff]
        %v539 = vld [vmem:[%s265 + $0x538] sm:$0xff]
        %v540 = vld [vmem:[%s265 + $0x540] sm:$0xff]
        %v541 = vld [vmem:[%s265 + $0x548] sm:$0xff]
        %v542 = vld [vmem:[%s265 + $0x550] sm:$0xff]
        %v543 = vld [vmem:[%s265 + $0x558] sm:$0xff]
        %v544 = vld [vmem:[%s265 + $0x560] sm:$0xff]
        %v545 = vld [vmem:[%s265 + $0x568] sm:$0xff]
        %v546 = vld [vmem:[%s265 + $0x570] sm:$0xff]
        %v547 = vld [vmem:[%s265 + $0x578] sm:$0xff]
        %v548 = vld [vmem:[%s265 + $0x580] sm:$0xff]
        %v549 = vld [vmem:[%s265 + $0x588] sm:$0xff]
        %v550 = vld [vmem:[%s265 + $0x590] sm:$0xff]
        %v551 = vld [vmem:[%s265 + $0x598] sm:$0xff]
        %v552 = vld [vmem:[%s265 + $0x5a0] sm:$0xff]
        %v553 = vld [vmem:[%s265 + $0x5a8] sm:$0xff]
        %v554 = vld [vmem:[%s265 + $0x5b0] sm:$0xff]
        %v555 = vld [vmem:[%s265 + $0x5b8] sm:$0xff]
        %v556 = vld [vmem:[%s265 + $0x5c0] sm:$0xff]
        %v557 = vld [vmem:[%s265 + $0x5c8] sm:$0xff]
        %v558 = vld [vmem:[%s265 + $0x5d0] sm:$0xff]
        %v559 = vld [vmem:[%s265 + $0x5d8] sm:$0xff]
        %v560 = vld [vmem:[%s265 + $0x5e0] sm:$0xff]
        %v561 = vld [vmem:[%s265 + $0x5e8] sm:$0xff]
        %v562 = vld [vmem:[%s265 + $0x5f0] sm:$0xff]
        %v563 = vld [vmem:[%s265 + $0x5f8] sm:$0xff]
        %v564 = vld [vmem:[%s265 + $0x600] sm:$0xff]
        %v565 = vld [vmem:[%s265 + $0x608] sm:$0xff]
        %v566 = vld [vmem:[%s265 + $0x610] sm:$0xff]
        %v567 = vld [vmem:[%s265 + $0x618] sm:$0xff]
        %v568 = vld [vmem:[%s265 + $0x620] sm:$0xff]
        %v569 = vld [vmem:[%s265 + $0x628] sm:$0xff]
        %v570 = vld [vmem:[%s265 + $0x630] sm:$0xff]
        %v571 = vld [vmem:[%s265 + $0x638] sm:$0xff]
        %v572 = vld [vmem:[%s265 + $0x640] sm:$0xff]
        %v573 = vld [vmem:[%s265 + $0x648] sm:$0xff]
        %v574 = vld [vmem:[%s265 + $0x650] sm:$0xff]
        %v575 = vld [vmem:[%s265 + $0x658] sm:$0xff]
        %v576 = vld [vmem:[%s265 + $0x660] sm:$0xff]
        %v577 = vld [vmem:[%s265 + $0x668] sm:$0xff]
        %v578 = vld [vmem:[%s265 + $0x670] sm:$0xff]
        %v579 = vld [vmem:[%s265 + $0x678] sm:$0xff]
        %v580 = vld [vmem:[%s265 + $0x680] sm:$0xff]
        %v581 = vld [vmem:[%s265 + $0x688] sm:$0xff]
        %v582 = vld [vmem:[%s265 + $0x690] sm:$0xff]
        %v583 = vld [vmem:[%s265 + $0x698] sm:$0xff]
        %v584 = vld [vmem:[%s265 + $0x6a0] sm:$0xff]
        %v585 = vld [vmem:[%s265 + $0x6a8] sm:$0xff]
        %v586 = vld [vmem:[%s265 + $0x6b0] sm:$0xff]
        %v587 = vld [vmem:[%s265 + $0x6b8] sm:$0xff]
        %v588 = vld [vmem:[%s265 + $0x6c0] sm:$0xff]
        %v589 = vld [vmem:[%s265 + $0x6c8] sm:$0xff]
        %v590 = vld [vmem:[%s265 + $0x6d0] sm:$0xff]
        %v591 = vld [vmem:[%s265 + $0x6d8] sm:$0xff]
        %v592 = vld [vmem:[%s265 + $0x6e0] sm:$0xff]
        %v593 = vld [vmem:[%s265 + $0x6e8] sm:$0xff]
        %v594 = vld [vmem:[%s265 + $0x6f0] sm:$0xff]
        %v595 = vld [vmem:[%s265 + $0x6f8] sm:$0xff]
        %v596 = vld [vmem:[%s265 + $0x700] sm:$0xff]
        %v597 = vld [vmem:[%s265 + $0x708] sm:$0xff]
        %v598 = vld [vmem:[%s265 + $0x710] sm:$0xff]
        %v599 = vld [vmem:[%s265 + $0x718] sm:$0xff]
        %v600 = vld [vmem:[%s265 + $0x720] sm:$0xff]
        %v601 = vld [vmem:[%s265 + $0x728] sm:$0xff]
        %v602 = vld [vmem:[%s265 + $0x730] sm:$0xff]
        %v603 = vld [vmem:[%s265 + $0x738] sm:$0xff]
        %v604 = vld [vmem:[%s265 + $0x740] sm:$0xff]
        %v605 = vld [vmem:[%s265 + $0x748] sm:$0xff]
        %v606 = vld [vmem:[%s265 + $0x750] sm:$0xff]
        %v607 = vld [vmem:[%s265 + $0x758] sm:$0xff]
        %v608 = vld [vmem:[%s265 + $0x760] sm:$0xff]
        %v609 = vld [vmem:[%s265 + $0x768] sm:$0xff]
        %v610 = vld [vmem:[%s265 + $0x770] sm:$0xff]
        %v611 = vld [vmem:[%s265 + $0x778] sm:$0xff]
        %v612 = vld [vmem:[%s265 + $0x780] sm:$0xff]
        %v613 = vld [vmem:[%s265 + $0x788] sm:$0xff]
        %v614 = vld [vmem:[%s265 + $0x790] sm:$0xff]
        %v615 = vld [vmem:[%s265 + $0x798] sm:$0xff]
        %v616 = vld [vmem:[%s265 + $0x7a0] sm:$0xff]
        %v617 = vld [vmem:[%s265 + $0x7a8] sm:$0xff]
        %v618 = vld [vmem:[%s265 + $0x7b0] sm:$0xff]
        %v619 = vld [vmem:[%s265 + $0x7b8] sm:$0xff]
        %v620 = vld [vmem:[%s265 + $0x7c0] sm:$0xff]
        %v621 = vld [vmem:[%s265 + $0x7c8] sm:$0xff]
        %v622 = vld [vmem:[%s265 + $0x7d0] sm:$0xff]
        %v623 = vld [vmem:[%s265 + $0x7d8] sm:$0xff]
        %v624 = vld [vmem:[%s265 + $0x7e0] sm:$0xff]
        %v625 = vld [vmem:[%s265 + $0x7e8] sm:$0xff]
        %v626 = vld [vmem:[%s265 + $0x7f0] sm:$0xff]
        %v627 = vld [vmem:[%s265 + $0x7f8] sm:$0xff]
        %v628 = vld [vmem:[%s265 + $0x800] sm:$0xff]
        %v629 = vld [vmem:[%s265 + $0x808] sm:$0xff]
        %v630 = vld [vmem:[%s265 + $0x810] sm:$0xff]
        %v631 = vld [vmem:[%s265 + $0x818] sm:$0xff]
        %v632 = vld [vmem:[%s265 + $0x820] sm:$0xff]
        %v633 = vld [vmem:[%s265 + $0x828] sm:$0xff]
        %v634 = vld [vmem:[%s265 + $0x830] sm:$0xff]
        %v635 = vld [vmem:[%s265 + $0x838] sm:$0xff]
        %v636 = vld [vmem:[%s265 + $0x840] sm:$0xff]
        %v637 = vld [vmem:[%s265 + $0x848] sm:$0xff]
        %v638 = vld [vmem:[%s265 + $0x850] sm:$0xff]
        %v639 = vld [vmem:[%s265 + $0x858] sm:$0xff]
        %v640 = vld [vmem:[%s265 + $0x860] sm:$0xff]
        %v641 = vld [vmem:[%s265 + $0x868] sm:$0xff]
        %v642 = vld [vmem:[%s265 + $0x870] sm:$0xff]
        %v643 = vld [vmem:[%s265 + $0x878] sm:$0xff]
        %v644 = vld [vmem:[%s265 + $0x880] sm:$0xff]
        %v645 = vld [vmem:[%s265 + $0x888] sm:$0xff]
        %v646 = vld [vmem:[%s265 + $0x890] sm:$0xff]
        %v647 = vld [vmem:[%s265 + $0x898] sm:$0xff]
        %v648 = vld [vmem:[%s265 + $0x8a0] sm:$0xff]
        %v649 = vld [vmem:[%s265 + $0x8a8] sm:$0xff]
        %v650 = vld [vmem:[%s265 + $0x8b0] sm:$0xff]
        %v651 = vld [vmem:[%s265 + $0x8b8] sm:$0xff]
        %v652 = vld [vmem:[%s265 + $0x8c0] sm:$0xff]
        %v653 = vld [vmem:[%s265 + $0x8c8] sm:$0xff]
        %v654 = vld [vmem:[%s265 + $0x8d0] sm:$0xff]
        %v655 = vld [vmem:[%s265 + $0x8d8] sm:$0xff]
        %v656 = vld [vmem:[%s265 + $0x8e0] sm:$0xff]
        %v657 = vld [vmem:[%s265 + $0x8e8] sm:$0xff]
        %v658 = vld [vmem:[%s265 + $0x8f0] sm:$0xff]
        %v659 = vld [vmem:[%s265 + $0x8f8] sm:$0xff]
        %v660 = vld [vmem:[%s265 + $0x900] sm:$0xff]
        %v661 = vld [vmem:[%s265 + $0x908] sm:$0xff]
        %v662 = vld [vmem:[%s265 + $0x910] sm:$0xff]
        %v663 = vld [vmem:[%s265 + $0x918] sm:$0xff]
        %v664 = vld [vmem:[%s265 + $0x920] sm:$0xff]
        %v665 = vld [vmem:[%s265 + $0x928] sm:$0xff]
        %v666 = vld [vmem:[%s265 + $0x930] sm:$0xff]
        %v667 = vld [vmem:[%s265 + $0x938] sm:$0xff]
        %v668 = vld [vmem:[%s265 + $0x940] sm:$0xff]
        %v669 = vld [vmem:[%s265 + $0x948] sm:$0xff]
        %v670 = vld [vmem:[%s265 + $0x950] sm:$0xff]
        %v671 = vld [vmem:[%s265 + $0x958] sm:$0xff]
        %v672 = vld [vmem:[%s265 + $0x960] sm:$0xff]
        %v673 = vld [vmem:[%s265 + $0x968] sm:$0xff]
        %v674 = vld [vmem:[%s265 + $0x970] sm:$0xff]
        %v675 = vld [vmem:[%s265 + $0x978] sm:$0xff]
        %v676 = vld [vmem:[%s265 + $0x980] sm:$0xff]
        %v677 = vld [vmem:[%s265 + $0x988] sm:$0xff]
        %v678 = vld [vmem:[%s265 + $0x990] sm:$0xff]
        %v679 = vld [vmem:[%s265 + $0x998] sm:$0xff]
        %v680 = vld [vmem:[%s265 + $0x9a0] sm:$0xff]
        %v681 = vld [vmem:[%s265 + $0x9a8] sm:$0xff]
        %v682 = vld [vmem:[%s265 + $0x9b0] sm:$0xff]
        %v683 = vld [vmem:[%s265 + $0x9b8] sm:$0xff]
        %v684 = vld [vmem:[%s265 + $0x9c0] sm:$0xff]
        %v685 = vld [vmem:[%s265 + $0x9c8] sm:$0xff]
        %v686 = vld [vmem:[%s265 + $0x9d0] sm:$0xff]
        %v687 = vld [vmem:[%s265 + $0x9d8] sm:$0xff]
        %v688 = vld [vmem:[%s265 + $0x9e0] sm:$0xff]
        %v689 = vld [vmem:[%s265 + $0x9e8] sm:$0xff]
        %v690 = vld [vmem:[%s265 + $0x9f0] sm:$0xff]
        %v691 = vld [vmem:[%s265 + $0x9f8] sm:$0xff]
        %v692 = vld [vmem:[%s265 + $0xa00] sm:$0xff]
        %v693 = vld [vmem:[%s265 + $0xa08] sm:$0xff]
        %v694 = vld [vmem:[%s265 + $0xa10] sm:$0xff]
        %v695 = vld [vmem:[%s265 + $0xa18] sm:$0xff]
        %v696 = vld [vmem:[%s265 + $0xa20] sm:$0xff]
        %v697 = vld [vmem:[%s265 + $0xa28] sm:$0xff]
        %v698 = vld [vmem:[%s265 + $0xa30] sm:$0xff]
        %v699 = vld [vmem:[%s265 + $0xa38] sm:$0xff]
        %v700 = vld [vmem:[%s265 + $0xa40] sm:$0xff]
        %v701 = vld [vmem:[%s265 + $0xa48] sm:$0xff]
        %v702 = vld [vmem:[%s265 + $0xa50] sm:$0xff]
        %v703 = vld [vmem:[%s265 + $0xa58] sm:$0xff]
        %v704 = vld [vmem:[%s265 + $0xa60] sm:$0xff]
        %v705 = vld [vmem:[%s265 + $0xa68] sm:$0xff]
        %v706 = vld [vmem:[%s265 + $0xa70] sm:$0xff]
        %v707 = vld [vmem:[%s265 + $0xa78] sm:$0xff]
        %v708 = vld [vmem:[%s265 + $0xa80] sm:$0xff]
        %v709 = vld [vmem:[%s265 + $0xa88] sm:$0xff]
        %v710 = vld [vmem:[%s265 + $0xa90] sm:$0xff]
        %v711 = vld [vmem:[%s265 + $0xa98] sm:$0xff]
        %v712 = vld [vmem:[%s265 + $0xaa0] sm:$0xff]
        %v713 = vld [vmem:[%s265 + $0xaa8] sm:$0xff]
        %v714 = vld [vmem:[%s265 + $0xab0] sm:$0xff]
        %v715 = vld [vmem:[%s265 + $0xab8] sm:$0xff]
        %v716 = vld [vmem:[%s265 + $0xac0] sm:$0xff]
        %v717 = vld [vmem:[%s265 + $0xac8] sm:$0xff]
        %v718 = vld [vmem:[%s265 + $0xad0] sm:$0xff]
        %v719 = vld [vmem:[%s265 + $0xad8] sm:$0xff]
        %v720 = vld [vmem:[%s265 + $0xae0] sm:$0xff]
        %v721 = vld [vmem:[%s265 + $0xae8] sm:$0xff]
        %v722 = vld [vmem:[%s265 + $0xaf0] sm:$0xff]
        %v723 = vld [vmem:[%s265 + $0xaf8] sm:$0xff]
        %v724 = vld [vmem:[%s265 + $0xb00] sm:$0xff]
        %v725 = vld [vmem:[%s265 + $0xb08] sm:$0xff]
        %v726 = vld [vmem:[%s265 + $0xb10] sm:$0xff]
        %v727 = vld [vmem:[%s265 + $0xb18] sm:$0xff]
        %v728 = vld [vmem:[%s265 + $0xb20] sm:$0xff]
        %v729 = vld [vmem:[%s265 + $0xb28] sm:$0xff]
        %v730 = vld [vmem:[%s265 + $0xb30] sm:$0xff]
        %v731 = vld [vmem:[%s265 + $0xb38] sm:$0xff]
        %v732 = vld [vmem:[%s265 + $0xb40] sm:$0xff]
        %v733 = vld [vmem:[%s265 + $0xb48] sm:$0xff]
        %v734 = vld [vmem:[%s265 + $0xb50] sm:$0xff]
        %v735 = vld [vmem:[%s265 + $0xb58] sm:$0xff]
        %v736 = vld [vmem:[%s265 + $0xb60] sm:$0xff]
        %v737 = vld [vmem:[%s265 + $0xb68] sm:$0xff]
        %v738 = vld [vmem:[%s265 + $0xb70] sm:$0xff]
        %v739 = vld [vmem:[%s265 + $0xb78] sm:$0xff]
        %v740 = vld [vmem:[%s265 + $0xb80] sm:$0xff]
        %v741 = vld [vmem:[%s265 + $0xb88] sm:$0xff]
        %v742 = vld [vmem:[%s265 + $0xb90] sm:$0xff]
        %v743 = vld [vmem:[%s265 + $0xb98] sm:$0xff]
        %v744 = vld [vmem:[%s265 + $0xba0] sm:$0xff]
        %v745 = vld [vmem:[%s265 + $0xba8] sm:$0xff]
        %v746 = vld [vmem:[%s265 + $0xbb0] sm:$0xff]
        %v747 = vld [vmem:[%s265 + $0xbb8] sm:$0xff]
        %v748 = vld [vmem:[%s265 + $0xbc0] sm:$0xff]
        %v749 = vld [vmem:[%s265 + $0xbc8] sm:$0xff]
        %v750 = vld [vmem:[%s265 + $0xbd0] sm:$0xff]
        %v751 = vld [vmem:[%s265 + $0xbd8] sm:$0xff]
        %v752 = vld [vmem:[%s265 + $0xbe0] sm:$0xff]
        %v753 = vld [vmem:[%s265 + $0xbe8] sm:$0xff]
        %v754 = vld [vmem:[%s265 + $0xbf0] sm:$0xff]
        %v755 = vld [vmem:[%s265 + $0xbf8] sm:$0xff]
        %v756 = vld [vmem:[%s265 + $0xc00] sm:$0xff]
        %v757 = vld [vmem:[%s265 + $0xc08] sm:$0xff]
        %v758 = vld [vmem:[%s265 + $0xc10] sm:$0xff]
        %v759 = vld [vmem:[%s265 + $0xc18] sm:$0xff]
        %v760 = vld [vmem:[%s265 + $0xc20] sm:$0xff]
        %v761 = vld [vmem:[%s265 + $0xc28] sm:$0xff]
        %v762 = vld [vmem:[%s265 + $0xc30] sm:$0xff]
        %v763 = vld [vmem:[%s265 + $0xc38] sm:$0xff]
        %v764 = vld [vmem:[%s265 + $0xc40] sm:$0xff]
        %v765 = vld [vmem:[%s265 + $0xc48] sm:$0xff]
        %v766 = vld [vmem:[%s265 + $0xc50] sm:$0xff]
        %v767 = vld [vmem:[%s265 + $0xc58] sm:$0xff]
        %v768 = vld [vmem:[%s265 + $0xc60] sm:$0xff]
        %v769 = vld [vmem:[%s265 + $0xc68] sm:$0xff]
        %v770 = vld [vmem:[%s265 + $0xc70] sm:$0xff]
        %v771 = vld [vmem:[%s265 + $0xc78] sm:$0xff]
        %v772 = vld [vmem:[%s265 + $0xc80] sm:$0xff]
        %v773 = vld [vmem:[%s265 + $0xc88] sm:$0xff]
        %v774 = vld [vmem:[%s265 + $0xc90] sm:$0xff]
        %v775 = vld [vmem:[%s265 + $0xc98] sm:$0xff]
        %v776 = vld [vmem:[%s265 + $0xca0] sm:$0xff]
        %v777 = vld [vmem:[%s265 + $0xca8] sm:$0xff]
        %v778 = vld [vmem:[%s265 + $0xcb0] sm:$0xff]
        %v779 = vld [vmem:[%s265 + $0xcb8] sm:$0xff]
        %v780 = vld [vmem:[%s265 + $0xcc0] sm:$0xff]
        %v781 = vld [vmem:[%s265 + $0xcc8] sm:$0xff]
        %v782 = vld [vmem:[%s265 + $0xcd0] sm:$0xff]
        %v783 = vld [vmem:[%s265 + $0xcd8] sm:$0xff]
        %v784 = vld [vmem:[%s265 + $0xce0] sm:$0xff]
        %v785 = vld [vmem:[%s265 + $0xce8] sm:$0xff]
        %v786 = vld [vmem:[%s265 + $0xcf0] sm:$0xff]
        %v787 = vld [vmem:[%s265 + $0xcf8] sm:$0xff]
        %v788 = vld [vmem:[%s265 + $0xd00] sm:$0xff]
        %v789 = vld [vmem:[%s265 + $0xd08] sm:$0xff]
        %v790 = vld [vmem:[%s265 + $0xd10] sm:$0xff]
        %v791 = vld [vmem:[%s265 + $0xd18] sm:$0xff]
        %v792 = vld [vmem:[%s265 + $0xd20] sm:$0xff]
        %v793 = vld [vmem:[%s265 + $0xd28] sm:$0xff]
        %v794 = vld [vmem:[%s265 + $0xd30] sm:$0xff]
        %v795 = vld [vmem:[%s265 + $0xd38] sm:$0xff]
        %v796 = vld [vmem:[%s265 + $0xd40] sm:$0xff]
        %v797 = vld [vmem:[%s265 + $0xd48] sm:$0xff]
        %v798 = vld [vmem:[%s265 + $0xd50] sm:$0xff]
        %v799 = vld [vmem:[%s265 + $0xd58] sm:$0xff]
        %v800 = vld [vmem:[%s265 + $0xd60] sm:$0xff]
        %v801 = vld [vmem:[%s265 + $0xd68] sm:$0xff]
        %v802 = vld [vmem:[%s265 + $0xd70] sm:$0xff]
        %v803 = vld [vmem:[%s265 + $0xd78] sm:$0xff]
        %v804 = vld [vmem:[%s265 + $0xd80] sm:$0xff]
        %v805 = vld [vmem:[%s265 + $0xd88] sm:$0xff]
        %v806 = vld [vmem:[%s265 + $0xd90] sm:$0xff]
        %v807 = vld [vmem:[%s265 + $0xd98] sm:$0xff]
        %v808 = vld [vmem:[%s265 + $0xda0] sm:$0xff]
        %v809 = vld [vmem:[%s265 + $0xda8] sm:$0xff]
        %v810 = vld [vmem:[%s265 + $0xdb0] sm:$0xff]
        %v811 = vld [vmem:[%s265 + $0xdb8] sm:$0xff]
        %v812 = vld [vmem:[%s265 + $0xdc0] sm:$0xff]
        %v813 = vld [vmem:[%s265 + $0xdc8] sm:$0xff]
        %v814 = vld [vmem:[%s265 + $0xdd0] sm:$0xff]
        %v815 = vld [vmem:[%s265 + $0xdd8] sm:$0xff]
        %v816 = vld [vmem:[%s265 + $0xde0] sm:$0xff]
        %v817 = vld [vmem:[%s265 + $0xde8] sm:$0xff]
        %v818 = vld [vmem:[%s265 + $0xdf0] sm:$0xff]
        %v819 = vld [vmem:[%s265 + $0xdf8] sm:$0xff]
        %v820 = vld [vmem:[%s265 + $0xe00] sm:$0xff]
        %v821 = vld [vmem:[%s265 + $0xe08] sm:$0xff]
        %v822 = vld [vmem:[%s265 + $0xe10] sm:$0xff]
        %v823 = vld [vmem:[%s265 + $0xe18] sm:$0xff]
        %v824 = vld [vmem:[%s265 + $0xe20] sm:$0xff]
        %v825 = vld [vmem:[%s265 + $0xe28] sm:$0xff]
        %v826 = vld [vmem:[%s265 + $0xe30] sm:$0xff]
        %v827 = vld [vmem:[%s265 + $0xe38] sm:$0xff]
        %v828 = vld [vmem:[%s265 + $0xe40] sm:$0xff]
        %v829 = vld [vmem:[%s265 + $0xe48] sm:$0xff]
        %v830 = vld [vmem:[%s265 + $0xe50] sm:$0xff]
        %v831 = vld [vmem:[%s265 + $0xe58] sm:$0xff]
        %v832 = vld [vmem:[%s265 + $0xe60] sm:$0xff]
        %v833 = vld [vmem:[%s265 + $0xe68] sm:$0xff]
        %v834 = vld [vmem:[%s265 + $0xe70] sm:$0xff]
        %v835 = vld [vmem:[%s265 + $0xe78] sm:$0xff]
        %v836 = vld [vmem:[%s265 + $0xe80] sm:$0xff]
        %v837 = vld [vmem:[%s265 + $0xe88] sm:$0xff]
        %v838 = vld [vmem:[%s265 + $0xe90] sm:$0xff]
        %v839 = vld [vmem:[%s265 + $0xe98] sm:$0xff]
        %v840 = vld [vmem:[%s265 + $0xea0] sm:$0xff]
        %v841 = vld [vmem:[%s265 + $0xea8] sm:$0xff]
        %v842 = vld [vmem:[%s265 + $0xeb0] sm:$0xff]
        %v843 = vld [vmem:[%s265 + $0xeb8] sm:$0xff]
        %v844 = vld [vmem:[%s265 + $0xec0] sm:$0xff]
        %v845 = vld [vmem:[%s265 + $0xec8] sm:$0xff]
        %v846 = vld [vmem:[%s265 + $0xed0] sm:$0xff]
        %v847 = vld [vmem:[%s265 + $0xed8] sm:$0xff]
        %v848 = vld [vmem:[%s265 + $0xee0] sm:$0xff]
        %v849 = vld [vmem:[%s265 + $0xee8] sm:$0xff]
        %v850 = vld [vmem:[%s265 + $0xef0] sm:$0xff]
        %v851 = vld [vmem:[%s265 + $0xef8] sm:$0xff]
        %v852 = vld [vmem:[%s265 + $0xf00] sm:$0xff]
        %v853 = vld [vmem:[%s265 + $0xf08] sm:$0xff]
        %v854 = vld [vmem:[%s265 + $0xf10] sm:$0xff]
        %v855 = vld [vmem:[%s265 + $0xf18] sm:$0xff]
        %v856 = vld [vmem:[%s265 + $0xf20] sm:$0xff]
        %v857 = vld [vmem:[%s265 + $0xf28] sm:$0xff]
        %v858 = vld [vmem:[%s265 + $0xf30] sm:$0xff]
        %v859 = vld [vmem:[%s265 + $0xf38] sm:$0xff]
        %v860 = vld [vmem:[%s265 + $0xf40] sm:$0xff]
        %v861 = vld [vmem:[%s265 + $0xf48] sm:$0xff]
        %v862 = vld [vmem:[%s265 + $0xf50] sm:$0xff]
        %v863 = vld [vmem:[%s265 + $0xf58] sm:$0xff]
        %v864 = vld [vmem:[%s265 + $0xf60] sm:$0xff]
        %v865 = vld [vmem:[%s265 + $0xf68] sm:$0xff]
        %v866 = vld [vmem:[%s265 + $0xf70] sm:$0xff]
        %v867 = vld [vmem:[%s265 + $0xf78] sm:$0xff]
        %v868 = vld [vmem:[%s265 + $0xf80] sm:$0xff]
        %v869 = vld [vmem:[%s265 + $0xf88] sm:$0xff]
        %v870 = vld [vmem:[%s265 + $0xf90] sm:$0xff]
        %v871 = vld [vmem:[%s265 + $0xf98] sm:$0xff]
        %v872 = vld [vmem:[%s265 + $0xfa0] sm:$0xff]
        %v873 = vld [vmem:[%s265 + $0xfa8] sm:$0xff]
        %v874 = vld [vmem:[%s265 + $0xfb0] sm:$0xff]
        %v875 = vld [vmem:[%s265 + $0xfb8] sm:$0xff]
        %v876 = vld [vmem:[%s265 + $0xfc0] sm:$0xff]
        %v877 = vld [vmem:[%s265 + $0xfc8] sm:$0xff]
        %v878 = vld [vmem:[%s265 + $0xfd0] sm:$0xff]
        %v879 = vld [vmem:[%s265 + $0xfd8] sm:$0xff]
        %v880 = vld [vmem:[%s265 + $0xfe0] sm:$0xff]
        %v881 = vld [vmem:[%s265 + $0xfe8] sm:$0xff]
        %v882 = vld [vmem:[%s265 + $0xff0] sm:$0xff]
        %v883 = vld [vmem:[%s265 + $0xff8] sm:$0xff]
        %v884 = vld [vmem:[%s265 + $0x1000] sm:$0xff]
        %v885 = vld [vmem:[%s265 + $0x1008] sm:$0xff]
        %v886 = vld [vmem:[%s265 + $0x1010] sm:$0xff]
        %v887 = vld [vmem:[%s265 + $0x1018] sm:$0xff]
        %v888 = vld [vmem:[%s265 + $0x1020] sm:$0xff]
        %v889 = vld [vmem:[%s265 + $0x1028] sm:$0xff]
        %v890 = vld [vmem:[%s265 + $0x1030] sm:$0xff]
        %v891 = vld [vmem:[%s265 + $0x1038] sm:$0xff]
        %v892 = vld [vmem:[%s265 + $0x1040] sm:$0xff]
        %v893 = vld [vmem:[%s265 + $0x1048] sm:$0xff]
        %v894 = vld [vmem:[%s265 + $0x1050] sm:$0xff]
        %v895 = vld [vmem:[%s265 + $0x1058] sm:$0xff]
        %v896 = vld [vmem:[%s265 + $0x1060] sm:$0xff]
        %v897 = vld [vmem:[%s265 + $0x1068] sm:$0xff]
        %v898 = vld [vmem:[%s265 + $0x1070] sm:$0xff]
        %v899 = vld [vmem:[%s265 + $0x1078] sm:$0xff]
        %v900 = vld [vmem:[%s265 + $0x1080] sm:$0xff]
        %v901 = vld [vmem:[%s265 + $0x1088] sm:$0xff]
        %v902 = vld [vmem:[%s265 + $0x1090] sm:$0xff]
        %v903 = vld [vmem:[%s265 + $0x1098] sm:$0xff]
        %v904 = vld [vmem:[%s265 + $0x10a0] sm:$0xff]
        %v905 = vld [vmem:[%s265 + $0x10a8] sm:$0xff]
        %v906 = vld [vmem:[%s265 + $0x10b0] sm:$0xff]
        %v907 = vld [vmem:[%s265 + $0x10b8] sm:$0xff]
        %v908 = vld [vmem:[%s265 + $0x10c0] sm:$0xff]
        %v909 = vld [vmem:[%s265 + $0x10c8] sm:$0xff]
        %v910 = vld [vmem:[%s265 + $0x10d0] sm:$0xff]
        %v911 = vld [vmem:[%s265 + $0x10d8] sm:$0xff]
        %v912 = vld [vmem:[%s265 + $0x10e0] sm:$0xff]
        %v913 = vld [vmem:[%s265 + $0x10e8] sm:$0xff]
        %v914 = vld [vmem:[%s265 + $0x10f0] sm:$0xff]
        %v915 = vld [vmem:[%s265 + $0x10f8] sm:$0xff]
        %v916 = vld [vmem:[%s265 + $0x1100] sm:$0xff]
        %v917 = vld [vmem:[%s265 + $0x1108] sm:$0xff]
        %v918 = vld [vmem:[%s265 + $0x1110] sm:$0xff]
        %v919 = vld [vmem:[%s265 + $0x1118] sm:$0xff]
        %v920 = vld [vmem:[%s265 + $0x1120] sm:$0xff]
        %v921 = vld [vmem:[%s265 + $0x1128] sm:$0xff]
        %v922 = vld [vmem:[%s265 + $0x1130] sm:$0xff]
        %v923 = vld [vmem:[%s265 + $0x1138] sm:$0xff]
        %v924 = vld [vmem:[%s265 + $0x1140] sm:$0xff]
        %v925 = vld [vmem:[%s265 + $0x1148] sm:$0xff]
        %v926 = vld [vmem:[%s265 + $0x1150] sm:$0xff]
        %v927 = vld [vmem:[%s265 + $0x1158] sm:$0xff]
        %v928 = vld [vmem:[%s265 + $0x1160] sm:$0xff]
        %v929 = vld [vmem:[%s265 + $0x1168] sm:$0xff]
        %v930 = vld [vmem:[%s265 + $0x1170] sm:$0xff]
        %v931 = vld [vmem:[%s265 + $0x1178] sm:$0xff]
        %v932 = vld [vmem:[%s265 + $0x1180] sm:$0xff]
        %v933 = vld [vmem:[%s265 + $0x1188] sm:$0xff]
        %v934 = vld [vmem:[%s265 + $0x1190] sm:$0xff]
        %v935 = vld [vmem:[%s265 + $0x1198] sm:$0xff]
        %v936 = vld [vmem:[%s265 + $0x11a0] sm:$0xff]
        %v937 = vld [vmem:[%s265 + $0x11a8] sm:$0xff]
        %v938 = vld [vmem:[%s265 + $0x11b0] sm:$0xff]
        %v939 = vld [vmem:[%s265 + $0x11b8] sm:$0xff]
        %v940 = vld [vmem:[%s265 + $0x11c0] sm:$0xff]
        %v941 = vld [vmem:[%s265 + $0x11c8] sm:$0xff]
        %v942 = vld [vmem:[%s265 + $0x11d0] sm:$0xff]
        %v943 = vld [vmem:[%s265 + $0x11d8] sm:$0xff]
        %v944 = vld [vmem:[%s265 + $0x11e0] sm:$0xff]
        %v945 = vld [vmem:[%s265 + $0x11e8] sm:$0xff]
        %v946 = vld [vmem:[%s265 + $0x11f0] sm:$0xff]
        %v947 = vld [vmem:[%s265 + $0x11f8] sm:$0xff]
        %v948 = vld [vmem:[%s265 + $0x1200] sm:$0xff]
        %v949 = vld [vmem:[%s265 + $0x1208] sm:$0xff]
        %v950 = vld [vmem:[%s265 + $0x1210] sm:$0xff]
        %v951 = vld [vmem:[%s265 + $0x1218] sm:$0xff]
        %v952 = vld [vmem:[%s265 + $0x1220] sm:$0xff]
        %v953 = vld [vmem:[%s265 + $0x1228] sm:$0xff]
        %v954 = vld [vmem:[%s265 + $0x1230] sm:$0xff]
        %v955 = vld [vmem:[%s265 + $0x1238] sm:$0xff]
        %v956 = vld [vmem:[%s265 + $0x1240] sm:$0xff]
        %v957 = vld [vmem:[%s265 + $0x1248] sm:$0xff]
        %v958 = vld [vmem:[%s265 + $0x1250] sm:$0xff]
        %v959 = vld [vmem:[%s265 + $0x1258] sm:$0xff]
        %v960 = vld [vmem:[%s265 + $0x1260] sm:$0xff]
        %v961 = vld [vmem:[%s265 + $0x1268] sm:$0xff]
        %v962 = vld [vmem:[%s265 + $0x1270] sm:$0xff]
        %v963 = vld [vmem:[%s265 + $0x1278] sm:$0xff]
        %v964 = vld [vmem:[%s265 + $0x1280] sm:$0xff]
        %v965 = vld [vmem:[%s265 + $0x1288] sm:$0xff]
        %v966 = vld [vmem:[%s265 + $0x1290] sm:$0xff]
        %v967 = vld [vmem:[%s265 + $0x1298] sm:$0xff]
        %v968 = vld [vmem:[%s265 + $0x12a0] sm:$0xff]
        %v969 = vld [vmem:[%s265 + $0x12a8] sm:$0xff]
        %v970 = vld [vmem:[%s265 + $0x12b0] sm:$0xff]
        %v971 = vld [vmem:[%s265 + $0x12b8] sm:$0xff]
        %v972 = vld [vmem:[%s265 + $0x12c0] sm:$0xff]
        %v973 = vld [vmem:[%s265 + $0x12c8] sm:$0xff]
        %v974 = vld [vmem:[%s265 + $0x12d0] sm:$0xff]
        %v975 = vld [vmem:[%s265 + $0x12d8] sm:$0xff]
        %v976 = vld [vmem:[%s265 + $0x12e0] sm:$0xff]
        %v977 = vld [vmem:[%s265 + $0x12e8] sm:$0xff]
        %v978 = vld [vmem:[%s265 + $0x12f0] sm:$0xff]
        %v979 = vld [vmem:[%s265 + $0x12f8] sm:$0xff]
        %v980 = vld [vmem:[%s265 + $0x1300] sm:$0xff]
        %v981 = vld [vmem:[%s265 + $0x1308] sm:$0xff]
        %v982 = vld [vmem:[%s265 + $0x1310] sm:$0xff]
        %v983 = vld [vmem:[%s265 + $0x1318] sm:$0xff]
        %v984 = vld [vmem:[%s265 + $0x1320] sm:$0xff]
        %v985 = vld [vmem:[%s265 + $0x1328] sm:$0xff]
        %v986 = vld [vmem:[%s265 + $0x1330] sm:$0xff]
        %v987 = vld [vmem:[%s265 + $0x1338] sm:$0xff]
        %v988 = vld [vmem:[%s265 + $0x1340] sm:$0xff]
        %v989 = vld [vmem:[%s265 + $0x1348] sm:$0xff]
        %v990 = vld [vmem:[%s265 + $0x1350] sm:$0xff]
        %v991 = vld [vmem:[%s265 + $0x1358] sm:$0xff]
        %v992 = vld [vmem:[%s265 + $0x1360] sm:$0xff]
        %v993 = vld [vmem:[%s265 + $0x1368] sm:$0xff]
        %v994 = vld [vmem:[%s265 + $0x1370] sm:$0xff]
        %v995 = vld [vmem:[%s265 + $0x1378] sm:$0xff]
        %v996 = vld [vmem:[%s265 + $0x1380] sm:$0xff]
        %v997 = vld [vmem:[%s265 + $0x1388] sm:$0xff]
        %v998 = vld [vmem:[%s265 + $0x1390] sm:$0xff]
        %v999 = vld [vmem:[%s265 + $0x1398] sm:$0xff]
        %v1000 = vld [vmem:[%s265 + $0x13a0] sm:$0xff]
        %v1001 = vld [vmem:[%s265 + $0x13a8] sm:$0xff]
        %v1002 = vld [vmem:[%s265 + $0x13b0] sm:$0xff]
        %v1003 = vld [vmem:[%s265 + $0x13b8] sm:$0xff]
        %v1004 = vld [vmem:[%s265 + $0x13c0] sm:$0xff]
        %v1005 = vld [vmem:[%s265 + $0x13c8] sm:$0xff]
        %v1006 = vld [vmem:[%s265 + $0x13d0] sm:$0xff]
        %v1007 = vld [vmem:[%s265 + $0x13d8] sm:$0xff]
        %v1008 = vld [vmem:[%s265 + $0x13e0] sm:$0xff]
        %v1009 = vld [vmem:[%s265 + $0x13e8] sm:$0xff]
        %v1010 = vld [vmem:[%s265 + $0x13f0] sm:$0xff]
        %v1011 = vld [vmem:[%s265 + $0x13f8] sm:$0xff]
        %v1012 = vld [vmem:[%s265 + $0x1400] sm:$0xff]
        %v1013 = vld [vmem:[%s265 + $0x1408] sm:$0xff]
        %v1014 = vld [vmem:[%s265 + $0x1410] sm:$0xff]
        %v1015 = vld [vmem:[%s265 + $0x1418] sm:$0xff]
        %v1016 = vld [vmem:[%s265 + $0x1420] sm:$0xff]
        %v1017 = vld [vmem:[%s265 + $0x1428] sm:$0xff]
        %v1018 = vld [vmem:[%s265 + $0x1430] sm:$0xff]
        %v1019 = vld [vmem:[%s265 + $0x1438] sm:$0xff]
        %v1020 = vld [vmem:[%s265 + $0x1440] sm:$0xff]
        %v1021 = vld [vmem:[%s265 + $0x1448] sm:$0xff]
        %v1022 = vld [vmem:[%s265 + $0x1450] sm:$0xff]
        %v1023 = vld [vmem:[%s265 + $0x1458] sm:$0xff]
        %v1024 = vld [vmem:[%s265 + $0x1460] sm:$0xff]
        %v1025 = vld [vmem:[%s265 + $0x1468] sm:$0xff]
        %v1026 = vld [vmem:[%s265 + $0x1470] sm:$0xff]
        %v1027 = vld [vmem:[%s265 + $0x1478] sm:$0xff]
        %v1028 = vld [vmem:[%s265 + $0x1480] sm:$0xff]
        %v1029 = vld [vmem:[%s265 + $0x1488] sm:$0xff]
        %v1030 = vld [vmem:[%s265 + $0x1490] sm:$0xff]
        %v1031 = vld [vmem:[%s265 + $0x1498] sm:$0xff]
        %v1032 = vld [vmem:[%s265 + $0x14a0] sm:$0xff]
        %v1033 = vld [vmem:[%s265 + $0x14a8] sm:$0xff]
        %v1034 = vld [vmem:[%s265 + $0x14b0] sm:$0xff]
        %v1035 = vld [vmem:[%s265 + $0x14b8] sm:$0xff]
        %v1036 = vld [vmem:[%s265 + $0x14c0] sm:$0xff]
        %v1037 = vld [vmem:[%s265 + $0x14c8] sm:$0xff]
        %v1038 = vld [vmem:[%s265 + $0x14d0] sm:$0xff]
        %v1039 = vld [vmem:[%s265 + $0x14d8] sm:$0xff]
        %v1040 = vld [vmem:[%s265 + $0x14e0] sm:$0xff]
        %v1041 = vld [vmem:[%s265 + $0x14e8] sm:$0xff]
        %v1042 = vld [vmem:[%s265 + $0x14f0] sm:$0xff]
        %v1043 = vld [vmem:[%s265 + $0x14f8] sm:$0xff]
        %v1044 = vld [vmem:[%s265 + $0x1500] sm:$0xff]
        %v1045 = vld [vmem:[%s265 + $0x1508] sm:$0xff]
        %v1046 = vld [vmem:[%s265 + $0x1510] sm:$0xff]
        %v1047 = vld [vmem:[%s265 + $0x1518] sm:$0xff]
        %v1048 = vld [vmem:[%s265 + $0x1520] sm:$0xff]
        %v1049 = vld [vmem:[%s265 + $0x1528] sm:$0xff]
        %v1050 = vld [vmem:[%s265 + $0x1530] sm:$0xff]
        %v1051 = vld [vmem:[%s265 + $0x1538] sm:$0xff]
        %v1052 = vld [vmem:[%s265 + $0x1540] sm:$0xff]
        %v1053 = vld [vmem:[%s265 + $0x1548] sm:$0xff]
        %v1054 = vld [vmem:[%s265 + $0x1550] sm:$0xff]
        %v1055 = vld [vmem:[%s265 + $0x1558] sm:$0xff]
        %v1056 = vld [vmem:[%s265 + $0x1560] sm:$0xff]
        %v1057 = vld [vmem:[%s265 + $0x1568] sm:$0xff]
        %v1058 = vld [vmem:[%s265 + $0x1570] sm:$0xff]
        %v1059 = vld [vmem:[%s265 + $0x1578] sm:$0xff]
        %v1060 = vld [vmem:[%s265 + $0x1580] sm:$0xff]
        %v1061 = vld [vmem:[%s265 + $0x1588] sm:$0xff]
        %v1062 = vld [vmem:[%s265 + $0x1590] sm:$0xff]
        %v1063 = vld [vmem:[%s265 + $0x1598] sm:$0xff]
        %v1064 = vld [vmem:[%s265 + $0x15a0] sm:$0xff]
        %v1065 = vld [vmem:[%s265 + $0x15a8] sm:$0xff]
        %v1066 = vld [vmem:[%s265 + $0x15b0] sm:$0xff]
        %v1067 = vld [vmem:[%s265 + $0x15b8] sm:$0xff]
        %v1068 = vld [vmem:[%s265 + $0x15c0] sm:$0xff]
        %v1069 = vld [vmem:[%s265 + $0x15c8] sm:$0xff]
        %v1070 = vld [vmem:[%s265 + $0x15d0] sm:$0xff]
        %v1071 = vld [vmem:[%s265 + $0x15d8] sm:$0xff]
        %v1072 = vld [vmem:[%s265 + $0x15e0] sm:$0xff]
        %v1073 = vld [vmem:[%s265 + $0x15e8] sm:$0xff]
        %v1074 = vld [vmem:[%s265 + $0x15f0] sm:$0xff]
        %v1075 = vld [vmem:[%s265 + $0x15f8] sm:$0xff]
        %v1076 = vld [vmem:[%s265 + $0x1600] sm:$0xff]
        %v1077 = vld [vmem:[%s265 + $0x1608] sm:$0xff]
        %v1078 = vld [vmem:[%s265 + $0x1610] sm:$0xff]
        %v1079 = vld [vmem:[%s265 + $0x1618] sm:$0xff]
        %v1080 = vld [vmem:[%s265 + $0x1620] sm:$0xff]
        %v1081 = vld [vmem:[%s265 + $0x1628] sm:$0xff]
        %v1082 = vld [vmem:[%s265 + $0x1630] sm:$0xff]
        %v1083 = vld [vmem:[%s265 + $0x1638] sm:$0xff]
        %v1084 = vld [vmem:[%s265 + $0x1640] sm:$0xff]
        %v1085 = vld [vmem:[%s265 + $0x1648] sm:$0xff]
        %v1086 = vld [vmem:[%s265 + $0x1650] sm:$0xff]
        %v1087 = vld [vmem:[%s265 + $0x1658] sm:$0xff]
        %v1088 = vld [vmem:[%s265 + $0x1660] sm:$0xff]
        %v1089 = vld [vmem:[%s265 + $0x1668] sm:$0xff]
        %v1090 = vld [vmem:[%s265 + $0x1670] sm:$0xff]
        %v1091 = vld [vmem:[%s265 + $0x1678] sm:$0xff]
        %v1092 = vld [vmem:[%s265 + $0x1680] sm:$0xff]
        %v1093 = vld [vmem:[%s265 + $0x1688] sm:$0xff]
        %v1094 = vld [vmem:[%s265 + $0x1690] sm:$0xff]
        %v1095 = vld [vmem:[%s265 + $0x1698] sm:$0xff]
        %v1096 = vld [vmem:[%s265 + $0x16a0] sm:$0xff]
        %v1097 = vld [vmem:[%s265 + $0x16a8] sm:$0xff]
        %v1098 = vld [vmem:[%s265 + $0x16b0] sm:$0xff]
        %v1099 = vld [vmem:[%s265 + $0x16b8] sm:$0xff]
        %v1100 = vld [vmem:[%s265 + $0x16c0] sm:$0xff]
        %v1101 = vld [vmem:[%s265 + $0x16c8] sm:$0xff]
        %v1102 = vld [vmem:[%s265 + $0x16d0] sm:$0xff]
        %v1103 = vld [vmem:[%s265 + $0x16d8] sm:$0xff]
        %v1104 = vld [vmem:[%s265 + $0x16e0] sm:$0xff]
        %v1105 = vld [vmem:[%s265 + $0x16e8] sm:$0xff]
        %v1106 = vld [vmem:[%s265 + $0x16f0] sm:$0xff]
        %v1107 = vld [vmem:[%s265 + $0x16f8] sm:$0xff]
        %v1108 = vld [vmem:[%s265 + $0x1700] sm:$0xff]
        %v1109 = vld [vmem:[%s265 + $0x1708] sm:$0xff]
        %v1110 = vld [vmem:[%s265 + $0x1710] sm:$0xff]
        %v1111 = vld [vmem:[%s265 + $0x1718] sm:$0xff]
        %v1112 = vld [vmem:[%s265 + $0x1720] sm:$0xff]
        %v1113 = vld [vmem:[%s265 + $0x1728] sm:$0xff]
        %v1114 = vld [vmem:[%s265 + $0x1730] sm:$0xff]
        %v1115 = vld [vmem:[%s265 + $0x1738] sm:$0xff]
        %v1116 = vld [vmem:[%s265 + $0x1740] sm:$0xff]
        %v1117 = vld [vmem:[%s265 + $0x1748] sm:$0xff]
        %v1118 = vld [vmem:[%s265 + $0x1750] sm:$0xff]
        %v1119 = vld [vmem:[%s265 + $0x1758] sm:$0xff]
        %v1120 = vld [vmem:[%s265 + $0x1760] sm:$0xff]
        %v1121 = vld [vmem:[%s265 + $0x1768] sm:$0xff]
        %v1122 = vld [vmem:[%s265 + $0x1770] sm:$0xff]
        %v1123 = vld [vmem:[%s265 + $0x1778] sm:$0xff]
        %v1124 = vld [vmem:[%s265 + $0x1780] sm:$0xff]
        %v1125 = vld [vmem:[%s265 + $0x1788] sm:$0xff]
        %v1126 = vld [vmem:[%s265 + $0x1790] sm:$0xff]
        %v1127 = vld [vmem:[%s265 + $0x1798] sm:$0xff]
        %v1128 = vld [vmem:[%s265 + $0x17a0] sm:$0xff]
        %v1129 = vld [vmem:[%s265 + $0x17a8] sm:$0xff]
        %v1130 = vld [vmem:[%s265 + $0x17b0] sm:$0xff]
        %v1131 = vld [vmem:[%s265 + $0x17b8] sm:$0xff]
        %v1132 = vld [vmem:[%s265 + $0x17c0] sm:$0xff]
        %v1133 = vld [vmem:[%s265 + $0x17c8] sm:$0xff]
        %v1134 = vld [vmem:[%s265 + $0x17d0] sm:$0xff]
        %v1135 = vld [vmem:[%s265 + $0x17d8] sm:$0xff]
        %v1136 = vld [vmem:[%s265 + $0x17e0] sm:$0xff]
        %v1137 = vld [vmem:[%s265 + $0x17e8] sm:$0xff]
        %v1138 = vld [vmem:[%s265 + $0x17f0] sm:$0xff]
        %v1139 = vld [vmem:[%s265 + $0x17f8] sm:$0xff]
        %v1140 = vld [vmem:[%s265 + $0x1800] sm:$0xff]
        %v1141 = vld [vmem:[%s265 + $0x1808] sm:$0xff]
        %v1142 = vld [vmem:[%s265 + $0x1810] sm:$0xff]
        %v1143 = vld [vmem:[%s265 + $0x1818] sm:$0xff]
        %v1144 = vld [vmem:[%s265 + $0x1820] sm:$0xff]
        %v1145 = vld [vmem:[%s265 + $0x1828] sm:$0xff]
        %v1146 = vld [vmem:[%s265 + $0x1830] sm:$0xff]
        %v1147 = vld [vmem:[%s265 + $0x1838] sm:$0xff]
        %v1148 = vld [vmem:[%s265 + $0x1840] sm:$0xff]
        %v1149 = vld [vmem:[%s265 + $0x1848] sm:$0xff]
        %v1150 = vld [vmem:[%s265 + $0x1850] sm:$0xff]
        %v1151 = vld [vmem:[%s265 + $0x1858] sm:$0xff]
        %v1152 = vld [vmem:[%s265 + $0x1860] sm:$0xff]
        %v1153 = vld [vmem:[%s265 + $0x1868] sm:$0xff]
        %v1154 = vld [vmem:[%s265 + $0x1870] sm:$0xff]
        %v1155 = vld [vmem:[%s265 + $0x1878] sm:$0xff]
        %v1156 = vld [vmem:[%s265 + $0x1880] sm:$0xff]
        %v1157 = vld [vmem:[%s265 + $0x1888] sm:$0xff]
        %v1158 = vld [vmem:[%s265 + $0x1890] sm:$0xff]
        %v1159 = vld [vmem:[%s265 + $0x1898] sm:$0xff]
        %v1160 = vld [vmem:[%s265 + $0x18a0] sm:$0xff]
        %v1161 = vld [vmem:[%s265 + $0x18a8] sm:$0xff]
        %v1162 = vld [vmem:[%s265 + $0x18b0] sm:$0xff]
        %v1163 = vld [vmem:[%s265 + $0x18b8] sm:$0xff]
        %v1164 = vld [vmem:[%s265 + $0x18c0] sm:$0xff]
        %v1165 = vld [vmem:[%s265 + $0x18c8] sm:$0xff]
        %v1166 = vld [vmem:[%s265 + $0x18d0] sm:$0xff]
        %v1167 = vld [vmem:[%s265 + $0x18d8] sm:$0xff]
        %v1168 = vld [vmem:[%s265 + $0x18e0] sm:$0xff]
        %v1169 = vld [vmem:[%s265 + $0x18e8] sm:$0xff]
        %v1170 = vld [vmem:[%s265 + $0x18f0] sm:$0xff]
        %v1171 = vld [vmem:[%s265 + $0x18f8] sm:$0xff]
        %v1172 = vld [vmem:[%s265 + $0x1900] sm:$0xff]
        %v1173 = vld [vmem:[%s265 + $0x1908] sm:$0xff]
        %v1174 = vld [vmem:[%s265 + $0x1910] sm:$0xff]
        %v1175 = vld [vmem:[%s265 + $0x1918] sm:$0xff]
        %v1176 = vld [vmem:[%s265 + $0x1920] sm:$0xff]
        %v1177 = vld [vmem:[%s265 + $0x1928] sm:$0xff]
        %v1178 = vld [vmem:[%s265 + $0x1930] sm:$0xff]
        %v1179 = vld [vmem:[%s265 + $0x1938] sm:$0xff]
        %v1180 = vld [vmem:[%s265 + $0x1940] sm:$0xff]
        %v1181 = vld [vmem:[%s265 + $0x1948] sm:$0xff]
        %v1182 = vld [vmem:[%s265 + $0x1950] sm:$0xff]
        %v1183 = vld [vmem:[%s265 + $0x1958] sm:$0xff]
        %v1184 = vld [vmem:[%s265 + $0x1960] sm:$0xff]
        %v1185 = vld [vmem:[%s265 + $0x1968] sm:$0xff]
        %v1186 = vld [vmem:[%s265 + $0x1970] sm:$0xff]
        %v1187 = vld [vmem:[%s265 + $0x1978] sm:$0xff]
        %v1188 = vld [vmem:[%s265 + $0x1980] sm:$0xff]
        %v1189 = vld [vmem:[%s265 + $0x1988] sm:$0xff]
        %v1190 = vld [vmem:[%s265 + $0x1990] sm:$0xff]
        %v1191 = vld [vmem:[%s265 + $0x1998] sm:$0xff]
        %v1192 = vld [vmem:[%s265 + $0x19a0] sm:$0xff]
        %v1193 = vld [vmem:[%s265 + $0x19a8] sm:$0xff]
        %v1194 = vld [vmem:[%s265 + $0x19b0] sm:$0xff]
        %v1195 = vld [vmem:[%s265 + $0x19b8] sm:$0xff]
        %v1196 = vld [vmem:[%s265 + $0x19c0] sm:$0xff]
        %v1197 = vld [vmem:[%s265 + $0x19c8] sm:$0xff]
        %v1198 = vld [vmem:[%s265 + $0x19d0] sm:$0xff]
        %v1199 = vld [vmem:[%s265 + $0x19d8] sm:$0xff]
        %v1200 = vld [vmem:[%s265 + $0x19e0] sm:$0xff]
        %v1201 = vld [vmem:[%s265 + $0x19e8] sm:$0xff]
        %v1202 = vld [vmem:[%s265 + $0x19f0] sm:$0xff]
        %v1203 = vld [vmem:[%s265 + $0x19f8] sm:$0xff]
        %v1204 = vld [vmem:[%s265 + $0x1a00] sm:$0xff]
        %v1205 = vld [vmem:[%s265 + $0x1a08] sm:$0xff]
        %v1206 = vld [vmem:[%s265 + $0x1a10] sm:$0xff]
        %v1207 = vld [vmem:[%s265 + $0x1a18] sm:$0xff]
        %v1208 = vld [vmem:[%s265 + $0x1a20] sm:$0xff]
        %v1209 = vld [vmem:[%s265 + $0x1a28] sm:$0xff]
        %v1210 = vld [vmem:[%s265 + $0x1a30] sm:$0xff]
        %v1211 = vld [vmem:[%s265 + $0x1a38] sm:$0xff]
        %v1212 = vld [vmem:[%s265 + $0x1a40] sm:$0xff]
        %v1213 = vld [vmem:[%s265 + $0x1a48] sm:$0xff]
        %v1214 = vld [vmem:[%s265 + $0x1a50] sm:$0xff]
        %v1215 = vld [vmem:[%s265 + $0x1a58] sm:$0xff]
        %v1216 = vld [vmem:[%s265 + $0x1a60] sm:$0xff]
        %v1217 = vld [vmem:[%s265 + $0x1a68] sm:$0xff]
        %v1218 = vld [vmem:[%s265 + $0x1a70] sm:$0xff]
        %v1219 = vld [vmem:[%s265 + $0x1a78] sm:$0xff]
        %v1220 = vld [vmem:[%s265 + $0x1a80] sm:$0xff]
        %v1221 = vld [vmem:[%s265 + $0x1a88] sm:$0xff]
        %v1222 = vld [vmem:[%s265 + $0x1a90] sm:$0xff]
        %v1223 = vld [vmem:[%s265 + $0x1a98] sm:$0xff]
        %v1224 = vld [vmem:[%s265 + $0x1aa0] sm:$0xff]
        %v1225 = vld [vmem:[%s265 + $0x1aa8] sm:$0xff]
        %v1226 = vld [vmem:[%s265 + $0x1ab0] sm:$0xff]
        %v1227 = vld [vmem:[%s265 + $0x1ab8] sm:$0xff]
        %v1228 = vld [vmem:[%s265 + $0x1ac0] sm:$0xff]
        %v1229 = vld [vmem:[%s265 + $0x1ac8] sm:$0xff]
        %v1230 = vld [vmem:[%s265 + $0x1ad0] sm:$0xff]
        %v1231 = vld [vmem:[%s265 + $0x1ad8] sm:$0xff]
        %v1232 = vld [vmem:[%s265 + $0x1ae0] sm:$0xff]
        %v1233 = vld [vmem:[%s265 + $0x1ae8] sm:$0xff]
        %v1234 = vld [vmem:[%s265 + $0x1af0] sm:$0xff]
        %v1235 = vld [vmem:[%s265 + $0x1af8] sm:$0xff]
        %v1236 = vld [vmem:[%s265 + $0x1b00] sm:$0xff]
        %v1237 = vld [vmem:[%s265 + $0x1b08] sm:$0xff]
        %v1238 = vld [vmem:[%s265 + $0x1b10] sm:$0xff]
        %v1239 = vld [vmem:[%s265 + $0x1b18] sm:$0xff]
        %v1240 = vld [vmem:[%s265 + $0x1b20] sm:$0xff]
        %v1241 = vld [vmem:[%s265 + $0x1b28] sm:$0xff]
        %v1242 = vld [vmem:[%s265 + $0x1b30] sm:$0xff]
        %v1243 = vld [vmem:[%s265 + $0x1b38] sm:$0xff]
        %v1244 = vld [vmem:[%s265 + $0x1b40] sm:$0xff]
        %v1245 = vld [vmem:[%s265 + $0x1b48] sm:$0xff]
        %v1246 = vld [vmem:[%s265 + $0x1b50] sm:$0xff]
        %v1247 = vld [vmem:[%s265 + $0x1b58] sm:$0xff]
        %v1248 = vld [vmem:[%s265 + $0x1b60] sm:$0xff]
        %v1249 = vld [vmem:[%s265 + $0x1b68] sm:$0xff]
        %v1250 = vld [vmem:[%s265 + $0x1b70] sm:$0xff]
        %v1251 = vld [vmem:[%s265 + $0x1b78] sm:$0xff]
        %v1252 = vld [vmem:[%s265 + $0x1b80] sm:$0xff]
        %v1253 = vld [vmem:[%s265 + $0x1b88] sm:$0xff]
        %v1254 = vld [vmem:[%s265 + $0x1b90] sm:$0xff]
        %v1255 = vld [vmem:[%s265 + $0x1b98] sm:$0xff]
        %v1256 = vld [vmem:[%s265 + $0x1ba0] sm:$0xff]
        %v1257 = vld [vmem:[%s265 + $0x1ba8] sm:$0xff]
        %v1258 = vld [vmem:[%s265 + $0x1bb0] sm:$0xff]
        %v1259 = vld [vmem:[%s265 + $0x1bb8] sm:$0xff]
        %v1260 = vld [vmem:[%s265 + $0x1bc0] sm:$0xff]
        %v1261 = vld [vmem:[%s265 + $0x1bc8] sm:$0xff]
        %v1262 = vld [vmem:[%s265 + $0x1bd0] sm:$0xff]
        %v1263 = vld [vmem:[%s265 + $0x1bd8] sm:$0xff]
        %v1264 = vld [vmem:[%s265 + $0x1be0] sm:$0xff]
        %v1265 = vld [vmem:[%s265 + $0x1be8] sm:$0xff]
        %v1266 = vld [vmem:[%s265 + $0x1bf0] sm:$0xff]
        %v1267 = vld [vmem:[%s265 + $0x1bf8] sm:$0xff]
        %v1268 = vld [vmem:[%s265 + $0x1c00] sm:$0xff]
        %v1269 = vld [vmem:[%s265 + $0x1c08] sm:$0xff]
        %v1270 = vld [vmem:[%s265 + $0x1c10] sm:$0xff]
        %v1271 = vld [vmem:[%s265 + $0x1c18] sm:$0xff]
        %v1272 = vld [vmem:[%s265 + $0x1c20] sm:$0xff]
        %v1273 = vld [vmem:[%s265 + $0x1c28] sm:$0xff]
        %v1274 = vld [vmem:[%s265 + $0x1c30] sm:$0xff]
        %v1275 = vld [vmem:[%s265 + $0x1c38] sm:$0xff]
        %v1276 = vld [vmem:[%s265 + $0x1c40] sm:$0xff]
        %v1277 = vld [vmem:[%s265 + $0x1c48] sm:$0xff]
        %v1278 = vld [vmem:[%s265 + $0x1c50] sm:$0xff]
        %v1279 = vld [vmem:[%s265 + $0x1c58] sm:$0xff]
        %v1280 = vld [vmem:[%s265 + $0x1c60] sm:$0xff]
        %v1281 = vld [vmem:[%s265 + $0x1c68] sm:$0xff]
        %v1282 = vld [vmem:[%s265 + $0x1c70] sm:$0xff]
        %v1283 = vld [vmem:[%s265 + $0x1c78] sm:$0xff]
        %v1284 = vld [vmem:[%s265 + $0x1c80] sm:$0xff]
        %v1285 = vld [vmem:[%s265 + $0x1c88] sm:$0xff]
        %v1286 = vld [vmem:[%s265 + $0x1c90] sm:$0xff]
        %v1287 = vld [vmem:[%s265 + $0x1c98] sm:$0xff]
        %v1288 = vld [vmem:[%s265 + $0x1ca0] sm:$0xff]
        %v1289 = vld [vmem:[%s265 + $0x1ca8] sm:$0xff]
        %v1290 = vld [vmem:[%s265 + $0x1cb0] sm:$0xff]
        %v1291 = vld [vmem:[%s265 + $0x1cb8] sm:$0xff]
        %v1292 = vld [vmem:[%s265 + $0x1cc0] sm:$0xff]
        %v1293 = vld [vmem:[%s265 + $0x1cc8] sm:$0xff]
        %v1294 = vld [vmem:[%s265 + $0x1cd0] sm:$0xff]
        %v1295 = vld [vmem:[%s265 + $0x1cd8] sm:$0xff]
        %v1296 = vld [vmem:[%s265 + $0x1ce0] sm:$0xff]
        %v1297 = vld [vmem:[%s265 + $0x1ce8] sm:$0xff]
        %v1298 = vld [vmem:[%s265 + $0x1cf0] sm:$0xff]
        %v1299 = vld [vmem:[%s265 + $0x1cf8] sm:$0xff]
        %v1300 = vld [vmem:[%s265 + $0x1d00] sm:$0xff]
        %v1301 = vld [vmem:[%s265 + $0x1d08] sm:$0xff]
        %v1302 = vld [vmem:[%s265 + $0x1d10] sm:$0xff]
        %v1303 = vld [vmem:[%s265 + $0x1d18] sm:$0xff]
        %v1304 = vld [vmem:[%s265 + $0x1d20] sm:$0xff]
        %v1305 = vld [vmem:[%s265 + $0x1d28] sm:$0xff]
        %v1306 = vld [vmem:[%s265 + $0x1d30] sm:$0xff]
        %v1307 = vld [vmem:[%s265 + $0x1d38] sm:$0xff]
        %v1308 = vld [vmem:[%s265 + $0x1d40] sm:$0xff]
        %v1309 = vld [vmem:[%s265 + $0x1d48] sm:$0xff]
        %v1310 = vld [vmem:[%s265 + $0x1d50] sm:$0xff]
        %v1311 = vld [vmem:[%s265 + $0x1d58] sm:$0xff]
        %v1312 = vld [vmem:[%s265 + $0x1d60] sm:$0xff]
        %v1313 = vld [vmem:[%s265 + $0x1d68] sm:$0xff]
        %v1314 = vld [vmem:[%s265 + $0x1d70] sm:$0xff]
        %v1315 = vld [vmem:[%s265 + $0x1d78] sm:$0xff]
        %v1316 = vld [vmem:[%s265 + $0x1d80] sm:$0xff]
        %v1317 = vld [vmem:[%s265 + $0x1d88] sm:$0xff]
        %v1318 = vld [vmem:[%s265 + $0x1d90] sm:$0xff]
        %v1319 = vld [vmem:[%s265 + $0x1d98] sm:$0xff]
        %v1320 = vld [vmem:[%s265 + $0x1da0] sm:$0xff]
        %v1321 = vld [vmem:[%s265 + $0x1da8] sm:$0xff]
        %v1322 = vld [vmem:[%s265 + $0x1db0] sm:$0xff]
        %v1323 = vld [vmem:[%s265 + $0x1db8] sm:$0xff]
        %v1324 = vld [vmem:[%s265 + $0x1dc0] sm:$0xff]
        %v1325 = vld [vmem:[%s265 + $0x1dc8] sm:$0xff]
        %v1326 = vld [vmem:[%s265 + $0x1dd0] sm:$0xff]
        %v1327 = vld [vmem:[%s265 + $0x1dd8] sm:$0xff]
        %v1328 = vld [vmem:[%s265 + $0x1de0] sm:$0xff]
        %v1329 = vld [vmem:[%s265 + $0x1de8] sm:$0xff]
        %v1330 = vld [vmem:[%s265 + $0x1df0] sm:$0xff]
        %v1331 = vld [vmem:[%s265 + $0x1df8] sm:$0xff]
        %v1332 = vld [vmem:[%s265 + $0x1e00] sm:$0xff]
        %v1333 = vld [vmem:[%s265 + $0x1e08] sm:$0xff]
        %v1334 = vld [vmem:[%s265 + $0x1e10] sm:$0xff]
        %v1335 = vld [vmem:[%s265 + $0x1e18] sm:$0xff]
        %v1336 = vld [vmem:[%s265 + $0x1e20] sm:$0xff]
        %v1337 = vld [vmem:[%s265 + $0x1e28] sm:$0xff]
        %v1338 = vld [vmem:[%s265 + $0x1e30] sm:$0xff]
        %v1339 = vld [vmem:[%s265 + $0x1e38] sm:$0xff]
        %v1340 = vld [vmem:[%s265 + $0x1e40] sm:$0xff]
        %v1341 = vld [vmem:[%s265 + $0x1e48] sm:$0xff]
        %v1342 = vld [vmem:[%s265 + $0x1e50] sm:$0xff]
        %v1343 = vld [vmem:[%s265 + $0x1e58] sm:$0xff]
        %v1344 = vld [vmem:[%s265 + $0x1e60] sm:$0xff]
        %v1345 = vld [vmem:[%s265 + $0x1e68] sm:$0xff]
        %v1346 = vld [vmem:[%s265 + $0x1e70] sm:$0xff]
        %v1347 = vld [vmem:[%s265 + $0x1e78] sm:$0xff]
        %v1348 = vld [vmem:[%s265 + $0x1e80] sm:$0xff]
        %v1349 = vld [vmem:[%s265 + $0x1e88] sm:$0xff]
        %v1350 = vld [vmem:[%s265 + $0x1e90] sm:$0xff]
        %v1351 = vld [vmem:[%s265 + $0x1e98] sm:$0xff]
        %v1352 = vld [vmem:[%s265 + $0x1ea0] sm:$0xff]
        %v1353 = vld [vmem:[%s265 + $0x1ea8] sm:$0xff]
        %v1354 = vld [vmem:[%s265 + $0x1eb0] sm:$0xff]
        %v1355 = vld [vmem:[%s265 + $0x1eb8] sm:$0xff]
        %v1356 = vld [vmem:[%s265 + $0x1ec0] sm:$0xff]
        %v1357 = vld [vmem:[%s265 + $0x1ec8] sm:$0xff]
        %v1358 = vld [vmem:[%s265 + $0x1ed0] sm:$0xff]
        %v1359 = vld [vmem:[%s265 + $0x1ed8] sm:$0xff]
        %v1360 = vld [vmem:[%s265 + $0x1ee0] sm:$0xff]
        %v1361 = vld [vmem:[%s265 + $0x1ee8] sm:$0xff]
        %v1362 = vld [vmem:[%s265 + $0x1ef0] sm:$0xff]
        %v1363 = vld [vmem:[%s265 + $0x1ef8] sm:$0xff]
        %v1364 = vld [vmem:[%s265 + $0x1f00] sm:$0xff]
        %v1365 = vld [vmem:[%s265 + $0x1f08] sm:$0xff]
        %v1366 = vld [vmem:[%s265 + $0x1f10] sm:$0xff]
        %v1367 = vld [vmem:[%s265 + $0x1f18] sm:$0xff]
        %v1368 = vld [vmem:[%s265 + $0x1f20] sm:$0xff]
        %v1369 = vld [vmem:[%s265 + $0x1f28] sm:$0xff]
        %v1370 = vld [vmem:[%s265 + $0x1f30] sm:$0xff]
        %v1371 = vld [vmem:[%s265 + $0x1f38] sm:$0xff]
        %v1372 = vld [vmem:[%s265 + $0x1f40] sm:$0xff]
        %v1373 = vld [vmem:[%s265 + $0x1f48] sm:$0xff]
        %v1374 = vld [vmem:[%s265 + $0x1f50] sm:$0xff]
        %v1375 = vld [vmem:[%s265 + $0x1f58] sm:$0xff]
        %v1376 = vld [vmem:[%s265 + $0x1f60] sm:$0xff]
        %v1377 = vld [vmem:[%s265 + $0x1f68] sm:$0xff]
        %v1378 = vld [vmem:[%s265 + $0x1f70] sm:$0xff]
        %v1379 = vld [vmem:[%s265 + $0x1f78] sm:$0xff]
        %v1380 = vld [vmem:[%s265 + $0x1f80] sm:$0xff]
        %v1381 = vld [vmem:[%s265 + $0x1f88] sm:$0xff]
        %v1382 = vld [vmem:[%s265 + $0x1f90] sm:$0xff]
        %v1383 = vld [vmem:[%s265 + $0x1f98] sm:$0xff]
        %v1384 = vld [vmem:[%s265 + $0x1fa0] sm:$0xff]
        %v1385 = vld [vmem:[%s265 + $0x1fa8] sm:$0xff]
        %v1386 = vld [vmem:[%s265 + $0x1fb0] sm:$0xff]
        %v1387 = vld [vmem:[%s265 + $0x1fb8] sm:$0xff]
        %v1388 = vld [vmem:[%s265 + $0x1fc0] sm:$0xff]
        %v1389 = vld [vmem:[%s265 + $0x1fc8] sm:$0xff]
        %v1390 = vld [vmem:[%s265 + $0x1fd0] sm:$0xff]
        %v1391 = vld [vmem:[%s265 + $0x1fd8] sm:$0xff]
        %v1392 = vld [vmem:[%s265 + $0x1fe0] sm:$0xff]
        %v1393 = vld [vmem:[%s265 + $0x1fe8] sm:$0xff]
        %v1394 = vld [vmem:[%s265 + $0x1ff0] sm:$0xff]
        %v1395 = vld [vmem:[%s265 + $0x1ff8] sm:$0xff]
        %v1396 = vld [vmem:[%s265 + $0x2000] sm:$0xff]
        %v1397 = vld [vmem:[%s265 + $0x2008] sm:$0xff]
        %v1398 = vld [vmem:[%s265 + $0x2010] sm:$0xff]
        %v1399 = vld [vmem:[%s265 + $0x2018] sm:$0xff]
        %v1400 = vld [vmem:[%s265 + $0x2020] sm:$0xff]
        %v1401 = vld [vmem:[%s265 + $0x2028] sm:$0xff]
        %v1402 = vld [vmem:[%s265 + $0x2030] sm:$0xff]
        %v1403 = vld [vmem:[%s265 + $0x2038] sm:$0xff]
        %v1404 = vld [vmem:[%s265 + $0x2040] sm:$0xff]
        %v1405 = vld [vmem:[%s265 + $0x2048] sm:$0xff]
        %v1406 = vld [vmem:[%s265 + $0x2050] sm:$0xff]
        %v1407 = vld [vmem:[%s265 + $0x2058] sm:$0xff]
        %v1408 = vld [vmem:[%s265 + $0x2060] sm:$0xff]
        %v1409 = vld [vmem:[%s265 + $0x2068] sm:$0xff]
        %v1410 = vld [vmem:[%s265 + $0x2070] sm:$0xff]
        %v1411 = vld [vmem:[%s265 + $0x2078] sm:$0xff]
        %v1412 = vld [vmem:[%s265 + $0x2080] sm:$0xff]
        %v1413 = vld [vmem:[%s265 + $0x2088] sm:$0xff]
        %v1414 = vld [vmem:[%s265 + $0x2090] sm:$0xff]
        %v1415 = vld [vmem:[%s265 + $0x2098] sm:$0xff]
        %v1416 = vld [vmem:[%s265 + $0x20a0] sm:$0xff]
        %v1417 = vld [vmem:[%s265 + $0x20a8] sm:$0xff]
        %v1418 = vld [vmem:[%s265 + $0x20b0] sm:$0xff]
        %v1419 = vld [vmem:[%s265 + $0x20b8] sm:$0xff]
        %v1420 = vld [vmem:[%s265 + $0x20c0] sm:$0xff]
        %v1421 = vld [vmem:[%s265 + $0x20c8] sm:$0xff]
        %v1422 = vld [vmem:[%s265 + $0x20d0] sm:$0xff]
        %v1423 = vld [vmem:[%s265 + $0x20d8] sm:$0xff]
        %v1424 = vld [vmem:[%s265 + $0x20e0] sm:$0xff]
        %v1425 = vld [vmem:[%s265 + $0x20e8] sm:$0xff]
        %v1426 = vld [vmem:[%s265 + $0x20f0] sm:$0xff]
        %v1427 = vld [vmem:[%s265 + $0x20f8] sm:$0xff]
        %v1428 = vld [vmem:[%s265 + $0x2100] sm:$0xff]
        %v1429 = vld [vmem:[%s265 + $0x2108] sm:$0xff]
        %v1430 = vld [vmem:[%s265 + $0x2110] sm:$0xff]
        %v1431 = vld [vmem:[%s265 + $0x2118] sm:$0xff]
        %v1432 = vld [vmem:[%s265 + $0x2120] sm:$0xff]
        %v1433 = vld [vmem:[%s265 + $0x2128] sm:$0xff]
        %v1434 = vld [vmem:[%s265 + $0x2130] sm:$0xff]
        %v1435 = vld [vmem:[%s265 + $0x2138] sm:$0xff]
        %v1436 = vld [vmem:[%s265 + $0x2140] sm:$0xff]
        %v1437 = vld [vmem:[%s265 + $0x2148] sm:$0xff]
        %v1438 = vld [vmem:[%s265 + $0x2150] sm:$0xff]
        %v1439 = vld [vmem:[%s265 + $0x2158] sm:$0xff]
        %v1440 = vld [vmem:[%s265 + $0x2160] sm:$0xff]
        %v1441 = vld [vmem:[%s265 + $0x2168] sm:$0xff]
        %v1442 = vld [vmem:[%s265 + $0x2170] sm:$0xff]
        %v1443 = vld [vmem:[%s265 + $0x2178] sm:$0xff]
        %v1444 = vld [vmem:[%s265 + $0x2180] sm:$0xff]
        %v1445 = vld [vmem:[%s265 + $0x2188] sm:$0xff]
        %v1446 = vld [vmem:[%s265 + $0x2190] sm:$0xff]
        %v1447 = vld [vmem:[%s265 + $0x2198] sm:$0xff]
        %v1448 = vld [vmem:[%s265 + $0x21a0] sm:$0xff]
        %v1449 = vld [vmem:[%s265 + $0x21a8] sm:$0xff]
        %v1450 = vld [vmem:[%s265 + $0x21b0] sm:$0xff]
        %v1451 = vld [vmem:[%s265 + $0x21b8] sm:$0xff]
        %v1452 = vld [vmem:[%s265 + $0x21c0] sm:$0xff]
        %v1453 = vld [vmem:[%s265 + $0x21c8] sm:$0xff]
        %v1454 = vld [vmem:[%s265 + $0x21d0] sm:$0xff]
        %v1455 = vld [vmem:[%s265 + $0x21d8] sm:$0xff]
        %v1456 = vld [vmem:[%s265 + $0x21e0] sm:$0xff]
        %v1457 = vld [vmem:[%s265 + $0x21e8] sm:$0xff]
        %v1458 = vld [vmem:[%s265 + $0x21f0] sm:$0xff]
        %v1459 = vld [vmem:[%s265 + $0x21f8] sm:$0xff]
        %v1460 = vld [vmem:[%s265 + $0x2200] sm:$0xff]
        %v1461 = vld [vmem:[%s265 + $0x2208] sm:$0xff]
        %v1462 = vld [vmem:[%s265 + $0x2210] sm:$0xff]
        %v1463 = vld [vmem:[%s265 + $0x2218] sm:$0xff]
        %v1464 = vld [vmem:[%s265 + $0x2220] sm:$0xff]
        %v1465 = vld [vmem:[%s265 + $0x2228] sm:$0xff]
        %v1466 = vld [vmem:[%s265 + $0x2230] sm:$0xff]
        %v1467 = vld [vmem:[%s265 + $0x2238] sm:$0xff]
        %v1468 = vld [vmem:[%s265 + $0x2240] sm:$0xff]
        %v1469 = vld [vmem:[%s265 + $0x2248] sm:$0xff]
        %v1470 = vld [vmem:[%s265 + $0x2250] sm:$0xff]
        %v1471 = vld [vmem:[%s265 + $0x2258] sm:$0xff]
        %v1472 = vld [vmem:[%s265 + $0x2260] sm:$0xff]
        %v1473 = vld [vmem:[%s265 + $0x2268] sm:$0xff]
        %v1474 = vld [vmem:[%s265 + $0x2270] sm:$0xff]
        %v1475 = vld [vmem:[%s265 + $0x2278] sm:$0xff]
        %v1476 = vld [vmem:[%s265 + $0x2280] sm:$0xff]
        %v1477 = vld [vmem:[%s265 + $0x2288] sm:$0xff]
        %v1478 = vld [vmem:[%s265 + $0x2290] sm:$0xff]
        %v1479 = vld [vmem:[%s265 + $0x2298] sm:$0xff]
        %v1480 = vld [vmem:[%s265 + $0x22a0] sm:$0xff]
        %v1481 = vld [vmem:[%s265 + $0x22a8] sm:$0xff]
        %v1482 = vld [vmem:[%s265 + $0x22b0] sm:$0xff]
        %v1483 = vld [vmem:[%s265 + $0x22b8] sm:$0xff]
        %v1484 = vld [vmem:[%s265 + $0x22c0] sm:$0xff]
        %v1485 = vld [vmem:[%s265 + $0x22c8] sm:$0xff]
        %v1486 = vld [vmem:[%s265 + $0x22d0] sm:$0xff]
        %v1487 = vld [vmem:[%s265 + $0x22d8] sm:$0xff]
        %v1488 = vld [vmem:[%s265 + $0x22e0] sm:$0xff]
        %v1489 = vld [vmem:[%s265 + $0x22e8] sm:$0xff]
        %v1490 = vld [vmem:[%s265 + $0x22f0] sm:$0xff]
        %v1491 = vld [vmem:[%s265 + $0x22f8] sm:$0xff]
        %v1492 = vld [vmem:[%s265 + $0x2300] sm:$0xff]
        %v1493 = vld [vmem:[%s265 + $0x2308] sm:$0xff]
        %v1494 = vld [vmem:[%s265 + $0x2310] sm:$0xff]
        %v1495 = vld [vmem:[%s265 + $0x2318] sm:$0xff]
        %v1496 = vld [vmem:[%s265 + $0x2320] sm:$0xff]
        %v1497 = vld [vmem:[%s265 + $0x2328] sm:$0xff]
        %v1498 = vld [vmem:[%s265 + $0x2330] sm:$0xff]
        %v1499 = vld [vmem:[%s265 + $0x2338] sm:$0xff]
        %v1500 = vld [vmem:[%s265 + $0x2340] sm:$0xff]
        %v1501 = vld [vmem:[%s265 + $0x2348] sm:$0xff]
        %v1502 = vld [vmem:[%s265 + $0x2350] sm:$0xff]
        %v1503 = vld [vmem:[%s265 + $0x2358] sm:$0xff]
        %v1504 = vld [vmem:[%s265 + $0x2360] sm:$0xff]
        %v1505 = vld [vmem:[%s265 + $0x2368] sm:$0xff]
        %v1506 = vld [vmem:[%s265 + $0x2370] sm:$0xff]
        %v1507 = vld [vmem:[%s265 + $0x2378] sm:$0xff]
        %v1508 = vld [vmem:[%s265 + $0x2380] sm:$0xff]
        %v1509 = vld [vmem:[%s265 + $0x2388] sm:$0xff]
        %v1510 = vld [vmem:[%s265 + $0x2390] sm:$0xff]
        %v1511 = vld [vmem:[%s265 + $0x2398] sm:$0xff]
        %v1512 = vld [vmem:[%s265 + $0x23a0] sm:$0xff]
        %v1513 = vld [vmem:[%s265 + $0x23a8] sm:$0xff]
        %v1514 = vld [vmem:[%s265 + $0x23b0] sm:$0xff]
        %v1515 = vld [vmem:[%s265 + $0x23b8] sm:$0xff]
        %v1516 = vld [vmem:[%s265 + $0x23c0] sm:$0xff]
        %v1517 = vld [vmem:[%s265 + $0x23c8] sm:$0xff]
        %v1518 = vld [vmem:[%s265 + $0x23d0] sm:$0xff]
        %v1519 = vld [vmem:[%s265 + $0x23d8] sm:$0xff]
        %v1520 = vld [vmem:[%s265 + $0x23e0] sm:$0xff]
        %v1521 = vld [vmem:[%s265 + $0x23e8] sm:$0xff]
        %v1522 = vld [vmem:[%s265 + $0x23f0] sm:$0xff]
        %v1523 = vld [vmem:[%s265 + $0x23f8] sm:$0xff]
        %v1524 = vld [vmem:[%s265 + $0x2400] sm:$0xff]
        %v1525 = vld [vmem:[%s265 + $0x2408] sm:$0xff]
        %v1526 = vld [vmem:[%s265 + $0x2410] sm:$0xff]
        %v1527 = vld [vmem:[%s265 + $0x2418] sm:$0xff]
        %v1528 = vld [vmem:[%s265 + $0x2420] sm:$0xff]
        %v1529 = vld [vmem:[%s265 + $0x2428] sm:$0xff]
        %v1530 = vld [vmem:[%s265 + $0x2430] sm:$0xff]
        %v1531 = vld [vmem:[%s265 + $0x2438] sm:$0xff]
        %v1532 = vld [vmem:[%s265 + $0x2440] sm:$0xff]
        %v1533 = vld [vmem:[%s265 + $0x2448] sm:$0xff]
        %v1534 = vld [vmem:[%s265 + $0x2450] sm:$0xff]
        %v1535 = vld [vmem:[%s265 + $0x2458] sm:$0xff]
        %v1536 = vld [vmem:[%s265 + $0x2460] sm:$0xff]
        %v1537 = vld [vmem:[%s265 + $0x2468] sm:$0xff]
        %v1538 = vld [vmem:[%s265 + $0x2470] sm:$0xff]
        %v1539 = vld [vmem:[%s265 + $0x2478] sm:$0xff]
        %v1540 = vld [vmem:[%s265 + $0x2480] sm:$0xff]
        %v1541 = vld [vmem:[%s265 + $0x2488] sm:$0xff]
        %v1542 = vld [vmem:[%s265 + $0x2490] sm:$0xff]
        %v1543 = vld [vmem:[%s265 + $0x2498] sm:$0xff]
        %v1544 = vld [vmem:[%s265 + $0x24a0] sm:$0xff]
        %v1545 = vld [vmem:[%s265 + $0x24a8] sm:$0xff]
        %v1546 = vld [vmem:[%s265 + $0x24b0] sm:$0xff]
        %v1547 = vld [vmem:[%s265 + $0x24b8] sm:$0xff]
        %v1548 = vld [vmem:[%s265 + $0x24c0] sm:$0xff]
        %v1549 = vld [vmem:[%s265 + $0x24c8] sm:$0xff]
        %v1550 = vld [vmem:[%s265 + $0x24d0] sm:$0xff]
        %v1551 = vld [vmem:[%s265 + $0x24d8] sm:$0xff]
        %v1552 = vld [vmem:[%s265 + $0x24e0] sm:$0xff]
        %v1553 = vld [vmem:[%s265 + $0x24e8] sm:$0xff]
        %v1554 = vld [vmem:[%s265 + $0x24f0] sm:$0xff]
        %v1555 = vld [vmem:[%s265 + $0x24f8] sm:$0xff]
        %v1556 = vld [vmem:[%s265 + $0x2500] sm:$0xff]
        %v1557 = vld [vmem:[%s265 + $0x2508] sm:$0xff]
        %v1558 = vld [vmem:[%s265 + $0x2510] sm:$0xff]
        %v1559 = vld [vmem:[%s265 + $0x2518] sm:$0xff]
        %v1560 = vld [vmem:[%s265 + $0x2520] sm:$0xff]
        %v1561 = vld [vmem:[%s265 + $0x2528] sm:$0xff]
        %v1562 = vld [vmem:[%s265 + $0x2530] sm:$0xff]
        %v1563 = vld [vmem:[%s265 + $0x2538] sm:$0xff]
        %v1564 = vld [vmem:[%s265 + $0x2540] sm:$0xff]
        %v1565 = vld [vmem:[%s265 + $0x2548] sm:$0xff]
        %v1566 = vld [vmem:[%s265 + $0x2550] sm:$0xff]
        %v1567 = vld [vmem:[%s265 + $0x2558] sm:$0xff]
        %v1568 = vld [vmem:[%s265 + $0x2560] sm:$0xff]
        %v1569 = vld [vmem:[%s265 + $0x2568] sm:$0xff]
        %v1570 = vld [vmem:[%s265 + $0x2570] sm:$0xff]
        %v1571 = vld [vmem:[%s265 + $0x2578] sm:$0xff]
        %v1572 = vld [vmem:[%s265 + $0x2580] sm:$0xff]
        %v1573 = vld [vmem:[%s265 + $0x2588] sm:$0xff]
        %v1574 = vld [vmem:[%s265 + $0x2590] sm:$0xff]
        %v1575 = vld [vmem:[%s265 + $0x2598] sm:$0xff]
        %v1576 = vld [vmem:[%s265 + $0x25a0] sm:$0xff]
        %v1577 = vld [vmem:[%s265 + $0x25a8] sm:$0xff]
        %v1578 = vld [vmem:[%s265 + $0x25b0] sm:$0xff]
        %v1579 = vld [vmem:[%s265 + $0x25b8] sm:$0xff]
        %v1580 = vld [vmem:[%s265 + $0x25c0] sm:$0xff]
        %v1581 = vld [vmem:[%s265 + $0x25c8] sm:$0xff]
        %v1582 = vld [vmem:[%s265 + $0x25d0] sm:$0xff]
        %v1583 = vld [vmem:[%s265 + $0x25d8] sm:$0xff]
        %v1584 = vld [vmem:[%s265 + $0x25e0] sm:$0xff]
        %v1585 = vld [vmem:[%s265 + $0x25e8] sm:$0xff]
        %v1586 = vld [vmem:[%s265 + $0x25f0] sm:$0xff]
        %v1587 = vld [vmem:[%s265 + $0x25f8] sm:$0xff]
        %v1588 = vld [vmem:[%s265 + $0x2600] sm:$0xff]
        %v1589 = vld [vmem:[%s265 + $0x2608] sm:$0xff]
        %v1590 = vld [vmem:[%s265 + $0x2610] sm:$0xff]
        %v1591 = vld [vmem:[%s265 + $0x2618] sm:$0xff]
        %v1592 = vld [vmem:[%s265 + $0x2620] sm:$0xff]
        %v1593 = vld [vmem:[%s265 + $0x2628] sm:$0xff]
        %v1594 = vld [vmem:[%s265 + $0x2630] sm:$0xff]
        %v1595 = vld [vmem:[%s265 + $0x2638] sm:$0xff]
        %v1596 = vld [vmem:[%s265 + $0x2640] sm:$0xff]
        %v1597 = vld [vmem:[%s265 + $0x2648] sm:$0xff]
        %v1598 = vld [vmem:[%s265 + $0x2650] sm:$0xff]
        %v1599 = vld [vmem:[%s265 + $0x2658] sm:$0xff]
        %v1600 = vld [vmem:[%s265 + $0x2660] sm:$0xff]
        %v1601 = vld [vmem:[%s265 + $0x2668] sm:$0xff]
        %v1602 = vld [vmem:[%s265 + $0x2670] sm:$0xff]
        %v1603 = vld [vmem:[%s265 + $0x2678] sm:$0xff]
        %v1604 = vld [vmem:[%s265 + $0x2680] sm:$0xff]
        %v1605 = vld [vmem:[%s265 + $0x2688] sm:$0xff]
        %v1606 = vld [vmem:[%s265 + $0x2690] sm:$0xff]
        %v1607 = vld [vmem:[%s265 + $0x2698] sm:$0xff]
        %v1608 = vld [vmem:[%s265 + $0x26a0] sm:$0xff]
        %v1609 = vld [vmem:[%s265 + $0x26a8] sm:$0xff]
        %v1610 = vld [vmem:[%s265 + $0x26b0] sm:$0xff]
        %v1611 = vld [vmem:[%s265 + $0x26b8] sm:$0xff]
        %v1612 = vld [vmem:[%s265 + $0x26c0] sm:$0xff]
        %v1613 = vld [vmem:[%s265 + $0x26c8] sm:$0xff]
        %v1614 = vld [vmem:[%s265 + $0x26d0] sm:$0xff]
        %v1615 = vld [vmem:[%s265 + $0x26d8] sm:$0xff]
        %v1616 = vld [vmem:[%s265 + $0x26e0] sm:$0xff]
        %v1617 = vld [vmem:[%s265 + $0x26e8] sm:$0xff]
        %v1618 = vld [vmem:[%s265 + $0x26f0] sm:$0xff]
        %v1619 = vld [vmem:[%s265 + $0x26f8] sm:$0xff]
        %v1620 = vld [vmem:[%s265 + $0x2700] sm:$0xff]
        %v1621 = vld [vmem:[%s265 + $0x2708] sm:$0xff]
        %v1622 = vld [vmem:[%s265 + $0x2710] sm:$0xff]
        %v1623 = vld [vmem:[%s265 + $0x2718] sm:$0xff]
        %v1624 = vld [vmem:[%s265 + $0x2720] sm:$0xff]
        %v1625 = vld [vmem:[%s265 + $0x2728] sm:$0xff]
        %v1626 = vld [vmem:[%s265 + $0x2730] sm:$0xff]
        %v1627 = vld [vmem:[%s265 + $0x2738] sm:$0xff]
        %v1628 = vld [vmem:[%s265 + $0x2740] sm:$0xff]
        %v1629 = vld [vmem:[%s265 + $0x2748] sm:$0xff]
        %v1630 = vld [vmem:[%s265 + $0x2750] sm:$0xff]
        %v1631 = vld [vmem:[%s265 + $0x2758] sm:$0xff]
        %v1632 = vld [vmem:[%s265 + $0x2760] sm:$0xff]
        %v1633 = vld [vmem:[%s265 + $0x2768] sm:$0xff]
        %v1634 = vld [vmem:[%s265 + $0x2770] sm:$0xff]
        %v1635 = vld [vmem:[%s265 + $0x2778] sm:$0xff]
        %v1636 = vld [vmem:[%s265 + $0x2780] sm:$0xff]
        %v1637 = vld [vmem:[%s265 + $0x2788] sm:$0xff]
        %v1638 = vld [vmem:[%s265 + $0x2790] sm:$0xff]
        %v1639 = vld [vmem:[%s265 + $0x2798] sm:$0xff]
        %v1640 = vld [vmem:[%s265 + $0x27a0] sm:$0xff]
        %v1641 = vld [vmem:[%s265 + $0x27a8] sm:$0xff]
        %v1642 = vld [vmem:[%s265 + $0x27b0] sm:$0xff]
        %v1643 = vld [vmem:[%s265 + $0x27b8] sm:$0xff]
        %v1644 = vld [vmem:[%s265 + $0x27c0] sm:$0xff]
        %v1645 = vld [vmem:[%s265 + $0x27c8] sm:$0xff]
        %v1646 = vld [vmem:[%s265 + $0x27d0] sm:$0xff]
        %v1647 = vld [vmem:[%s265 + $0x27d8] sm:$0xff]
        %v1648 = vld [vmem:[%s265 + $0x27e0] sm:$0xff]
        %v1649 = vld [vmem:[%s265 + $0x27e8] sm:$0xff]
        %v1650 = vld [vmem:[%s265 + $0x27f0] sm:$0xff]
        %v1651 = vld [vmem:[%s265 + $0x27f8] sm:$0xff]
        %v1652 = vld [vmem:[%s265 + $0x2800] sm:$0xff]
        %v1653 = vld [vmem:[%s265 + $0x2808] sm:$0xff]
        %v1654 = vld [vmem:[%s265 + $0x2810] sm:$0xff]
        %v1655 = vld [vmem:[%s265 + $0x2818] sm:$0xff]
        %v1656 = vld [vmem:[%s265 + $0x2820] sm:$0xff]
        %v1657 = vld [vmem:[%s265 + $0x2828] sm:$0xff]
        %v1658 = vld [vmem:[%s265 + $0x2830] sm:$0xff]
        %v1659 = vld [vmem:[%s265 + $0x2838] sm:$0xff]
        %v1660 = vld [vmem:[%s265 + $0x2840] sm:$0xff]
        %v1661 = vld [vmem:[%s265 + $0x2848] sm:$0xff]
        %v1662 = vld [vmem:[%s265 + $0x2850] sm:$0xff]
        %v1663 = vld [vmem:[%s265 + $0x2858] sm:$0xff]
        %v1664 = vld [vmem:[%s265 + $0x2860] sm:$0xff]
        %v1665 = vld [vmem:[%s265 + $0x2868] sm:$0xff]
        %v1666 = vld [vmem:[%s265 + $0x2870] sm:$0xff]
        %v1667 = vld [vmem:[%s265 + $0x2878] sm:$0xff]
        %v1668 = vld [vmem:[%s265 + $0x2880] sm:$0xff]
        %v1669 = vld [vmem:[%s265 + $0x2888] sm:$0xff]
        %v1670 = vld [vmem:[%s265 + $0x2890] sm:$0xff]
        %v1671 = vld [vmem:[%s265 + $0x2898] sm:$0xff]
        %v1672 = vld [vmem:[%s265 + $0x28a0] sm:$0xff]
        %v1673 = vld [vmem:[%s265 + $0x28a8] sm:$0xff]
        %v1674 = vld [vmem:[%s265 + $0x28b0] sm:$0xff]
        %v1675 = vld [vmem:[%s265 + $0x28b8] sm:$0xff]
        %v1676 = vld [vmem:[%s265 + $0x28c0] sm:$0xff]
        %v1677 = vld [vmem:[%s265 + $0x28c8] sm:$0xff]
        %v1678 = vld [vmem:[%s265 + $0x28d0] sm:$0xff]
        %v1679 = vld [vmem:[%s265 + $0x28d8] sm:$0xff]
        %v1680 = vld [vmem:[%s265 + $0x28e0] sm:$0xff]
        %v1681 = vld [vmem:[%s265 + $0x28e8] sm:$0xff]
        %v1682 = vld [vmem:[%s265 + $0x28f0] sm:$0xff]
        %v1683 = vld [vmem:[%s265 + $0x28f8] sm:$0xff]
        %v1684 = vld [vmem:[%s265 + $0x2900] sm:$0xff]
        %v1685 = vld [vmem:[%s265 + $0x2908] sm:$0xff]
        %v1686 = vld [vmem:[%s265 + $0x2910] sm:$0xff]
        %v1687 = vld [vmem:[%s265 + $0x2918] sm:$0xff]
        %v1688 = vld [vmem:[%s265 + $0x2920] sm:$0xff]
        %v1689 = vld [vmem:[%s265 + $0x2928] sm:$0xff]
        %v1690 = vld [vmem:[%s265 + $0x2930] sm:$0xff]
        %v1691 = vld [vmem:[%s265 + $0x2938] sm:$0xff]
        %v1692 = vld [vmem:[%s265 + $0x2940] sm:$0xff]
        %v1693 = vld [vmem:[%s265 + $0x2948] sm:$0xff]
        %v1694 = vld [vmem:[%s265 + $0x2950] sm:$0xff]
        %v1695 = vld [vmem:[%s265 + $0x2958] sm:$0xff]
        %v1696 = vld [vmem:[%s265 + $0x2960] sm:$0xff]
        %v1697 = vld [vmem:[%s265 + $0x2968] sm:$0xff]
        %v1698 = vld [vmem:[%s265 + $0x2970] sm:$0xff]
        %v1699 = vld [vmem:[%s265 + $0x2978] sm:$0xff]
        %v1700 = vld [vmem:[%s265 + $0x2980] sm:$0xff]
        %v1701 = vld [vmem:[%s265 + $0x2988] sm:$0xff]
        %v1702 = vld [vmem:[%s265 + $0x2990] sm:$0xff]
        %v1703 = vld [vmem:[%s265 + $0x2998] sm:$0xff]
        %v1704 = vld [vmem:[%s265 + $0x29a0] sm:$0xff]
        %v1705 = vld [vmem:[%s265 + $0x29a8] sm:$0xff]
        %v1706 = vld [vmem:[%s265 + $0x29b0] sm:$0xff]
        %v1707 = vld [vmem:[%s265 + $0x29b8] sm:$0xff]
        %v1708 = vld [vmem:[%s265 + $0x29c0] sm:$0xff]
        %v1709 = vld [vmem:[%s265 + $0x29c8] sm:$0xff]
        %v1710 = vld [vmem:[%s265 + $0x29d0] sm:$0xff]
        %v1711 = vld [vmem:[%s265 + $0x29d8] sm:$0xff]
        %v1712 = vld [vmem:[%s265 + $0x29e0] sm:$0xff]
        %v1713 = vld [vmem:[%s265 + $0x29e8] sm:$0xff]
        %v1714 = vld [vmem:[%s265 + $0x29f0] sm:$0xff]
        %v1715 = vld [vmem:[%s265 + $0x29f8] sm:$0xff]
        %v1716 = vld [vmem:[%s265 + $0x2a00] sm:$0xff]
        %v1717 = vld [vmem:[%s265 + $0x2a08] sm:$0xff]
        %v1718 = vld [vmem:[%s265 + $0x2a10] sm:$0xff]
        %v1719 = vld [vmem:[%s265 + $0x2a18] sm:$0xff]
        %v1720 = vld [vmem:[%s265 + $0x2a20] sm:$0xff]
        %v1721 = vld [vmem:[%s265 + $0x2a28] sm:$0xff]
        %v1722 = vld [vmem:[%s265 + $0x2a30] sm:$0xff]
        %v1723 = vld [vmem:[%s265 + $0x2a38] sm:$0xff]
        %v1724 = vld [vmem:[%s265 + $0x2a40] sm:$0xff]
        %v1725 = vld [vmem:[%s265 + $0x2a48] sm:$0xff]
        %v1726 = vld [vmem:[%s265 + $0x2a50] sm:$0xff]
        %v1727 = vld [vmem:[%s265 + $0x2a58] sm:$0xff]
        %v1728 = vld [vmem:[%s265 + $0x2a60] sm:$0xff]
        %v1729 = vld [vmem:[%s265 + $0x2a68] sm:$0xff]
        %v1730 = vld [vmem:[%s265 + $0x2a70] sm:$0xff]
        %v1731 = vld [vmem:[%s265 + $0x2a78] sm:$0xff]
        %v1732 = vld [vmem:[%s265 + $0x2a80] sm:$0xff]
        %v1733 = vld [vmem:[%s265 + $0x2a88] sm:$0xff]
        %v1734 = vld [vmem:[%s265 + $0x2a90] sm:$0xff]
        %v1735 = vld [vmem:[%s265 + $0x2a98] sm:$0xff]
        %v1736 = vld [vmem:[%s265 + $0x2aa0] sm:$0xff]
        %v1737 = vld [vmem:[%s265 + $0x2aa8] sm:$0xff]
        %v1738 = vld [vmem:[%s265 + $0x2ab0] sm:$0xff]
        %v1739 = vld [vmem:[%s265 + $0x2ab8] sm:$0xff]
        %v1740 = vld [vmem:[%s265 + $0x2ac0] sm:$0xff]
        %v1741 = vld [vmem:[%s265 + $0x2ac8] sm:$0xff]
        %v1742 = vld [vmem:[%s265 + $0x2ad0] sm:$0xff]
        %v1743 = vld [vmem:[%s265 + $0x2ad8] sm:$0xff]
        %v1744 = vld [vmem:[%s265 + $0x2ae0] sm:$0xff]
        %v1745 = vld [vmem:[%s265 + $0x2ae8] sm:$0xff]
        %v1746 = vld [vmem:[%s265 + $0x2af0] sm:$0xff]
        %v1747 = vld [vmem:[%s265 + $0x2af8] sm:$0xff]
        %v1748 = vld [vmem:[%s265 + $0x2b00] sm:$0xff]
        %v1749 = vld [vmem:[%s265 + $0x2b08] sm:$0xff]
        %v1750 = vld [vmem:[%s265 + $0x2b10] sm:$0xff]
        %v1751 = vld [vmem:[%s265 + $0x2b18] sm:$0xff]
        %v1752 = vld [vmem:[%s265 + $0x2b20] sm:$0xff]
        %v1753 = vld [vmem:[%s265 + $0x2b28] sm:$0xff]
        %v1754 = vld [vmem:[%s265 + $0x2b30] sm:$0xff]
        %v1755 = vld [vmem:[%s265 + $0x2b38] sm:$0xff]
        %v1756 = vld [vmem:[%s265 + $0x2b40] sm:$0xff]
        %v1757 = vld [vmem:[%s265 + $0x2b48] sm:$0xff]
        %v1758 = vld [vmem:[%s265 + $0x2b50] sm:$0xff]
        %v1759 = vld [vmem:[%s265 + $0x2b58] sm:$0xff]
        %v1760 = vld [vmem:[%s265 + $0x2b60] sm:$0xff]
        %v1761 = vld [vmem:[%s265 + $0x2b68] sm:$0xff]
        %v1762 = vld [vmem:[%s265 + $0x2b70] sm:$0xff]
        %v1763 = vld [vmem:[%s265 + $0x2b78] sm:$0xff]
        %v1764 = vld [vmem:[%s265 + $0x2b80] sm:$0xff]
        %v1765 = vld [vmem:[%s265 + $0x2b88] sm:$0xff]
        %v1766 = vld [vmem:[%s265 + $0x2b90] sm:$0xff]
        %v1767 = vld [vmem:[%s265 + $0x2b98] sm:$0xff]
        %v1768 = vld [vmem:[%s265 + $0x2ba0] sm:$0xff]
        %v1769 = vld [vmem:[%s265 + $0x2ba8] sm:$0xff]
        %v1770 = vld [vmem:[%s265 + $0x2bb0] sm:$0xff]
        %v1771 = vld [vmem:[%s265 + $0x2bb8] sm:$0xff]
        %v1772 = vld [vmem:[%s265 + $0x2bc0] sm:$0xff]
        %v1773 = vld [vmem:[%s265 + $0x2bc8] sm:$0xff]
        %v1774 = vld [vmem:[%s265 + $0x2bd0] sm:$0xff]
        %v1775 = vld [vmem:[%s265 + $0x2bd8] sm:$0xff]
        %v1776 = vld [vmem:[%s265 + $0x2be0] sm:$0xff]
        %v1777 = vld [vmem:[%s265 + $0x2be8] sm:$0xff]
        %v1778 = vld [vmem:[%s265 + $0x2bf0] sm:$0xff]
        %v1779 = vld [vmem:[%s265 + $0x2bf8] sm:$0xff]
        %v1780 = vld [vmem:[%s265 + $0x2c00] sm:$0xff]
        %v1781 = vld [vmem:[%s265 + $0x2c08] sm:$0xff]
        %v1782 = vld [vmem:[%s265 + $0x2c10] sm:$0xff]
        %v1783 = vld [vmem:[%s265 + $0x2c18] sm:$0xff]
        %v1784 = vld [vmem:[%s265 + $0x2c20] sm:$0xff]
        %v1785 = vld [vmem:[%s265 + $0x2c28] sm:$0xff]
        %v1786 = vld [vmem:[%s265 + $0x2c30] sm:$0xff]
        %v1787 = vld [vmem:[%s265 + $0x2c38] sm:$0xff]
        %v1788 = vld [vmem:[%s265 + $0x2c40] sm:$0xff]
        %v1789 = vld [vmem:[%s265 + $0x2c48] sm:$0xff]
        %v1790 = vld [vmem:[%s265 + $0x2c50] sm:$0xff]
        %v1791 = vld [vmem:[%s265 + $0x2c58] sm:$0xff]
        %v1792 = vld [vmem:[%s265 + $0x2c60] sm:$0xff]
        %v1793 = vld [vmem:[%s265 + $0x2c68] sm:$0xff]
        %v1794 = vld [vmem:[%s265 + $0x2c70] sm:$0xff]
        %v1795 = vld [vmem:[%s265 + $0x2c78] sm:$0xff]
        %v1796 = vld [vmem:[%s265 + $0x2c80] sm:$0xff]
        %v1797 = vld [vmem:[%s265 + $0x2c88] sm:$0xff]
        %v1798 = vld [vmem:[%s265 + $0x2c90] sm:$0xff]
        %v1799 = vld [vmem:[%s265 + $0x2c98] sm:$0xff]
        %v1800 = vld [vmem:[%s265 + $0x2ca0] sm:$0xff]
        %v1801 = vld [vmem:[%s265 + $0x2ca8] sm:$0xff]
        %v1802 = vld [vmem:[%s265 + $0x2cb0] sm:$0xff]
        %v1803 = vld [vmem:[%s265 + $0x2cb8] sm:$0xff]
        %v1804 = vld [vmem:[%s265 + $0x2cc0] sm:$0xff]
        %v1805 = vld [vmem:[%s265 + $0x2cc8] sm:$0xff]
        %v1806 = vld [vmem:[%s265 + $0x2cd0] sm:$0xff]
        %v1807 = vld [vmem:[%s265 + $0x2cd8] sm:$0xff]
        %v1808 = vld [vmem:[%s265 + $0x2ce0] sm:$0xff]
        %v1809 = vld [vmem:[%s265 + $0x2ce8] sm:$0xff]
        %v1810 = vld [vmem:[%s265 + $0x2cf0] sm:$0xff]
        %v1811 = vld [vmem:[%s265 + $0x2cf8] sm:$0xff]
        %v1812 = vld [vmem:[%s265 + $0x2d00] sm:$0xff]
        %v1813 = vld [vmem:[%s265 + $0x2d08] sm:$0xff]
        %v1814 = vld [vmem:[%s265 + $0x2d10] sm:$0xff]
        %v1815 = vld [vmem:[%s265 + $0x2d18] sm:$0xff]
        %v1816 = vld [vmem:[%s265 + $0x2d20] sm:$0xff]
        %v1817 = vld [vmem:[%s265 + $0x2d28] sm:$0xff]
        %v1818 = vld [vmem:[%s265 + $0x2d30] sm:$0xff]
        %v1819 = vld [vmem:[%s265 + $0x2d38] sm:$0xff]
        %v1820 = vld [vmem:[%s265 + $0x2d40] sm:$0xff]
        %v1821 = vld [vmem:[%s265 + $0x2d48] sm:$0xff]
        %v1822 = vld [vmem:[%s265 + $0x2d50] sm:$0xff]
        %v1823 = vld [vmem:[%s265 + $0x2d58] sm:$0xff]
        %v1824 = vld [vmem:[%s265 + $0x2d60] sm:$0xff]
        %v1825 = vld [vmem:[%s265 + $0x2d68] sm:$0xff]
        %v1826 = vld [vmem:[%s265 + $0x2d70] sm:$0xff]
        %v1827 = vld [vmem:[%s265 + $0x2d78] sm:$0xff]
        %v1828 = vld [vmem:[%s265 + $0x2d80] sm:$0xff]
        %v1829 = vld [vmem:[%s265 + $0x2d88] sm:$0xff]
        %v1830 = vld [vmem:[%s265 + $0x2d90] sm:$0xff]
        %v1831 = vld [vmem:[%s265 + $0x2d98] sm:$0xff]
        %v1832 = vld [vmem:[%s265 + $0x2da0] sm:$0xff]
        %v1833 = vld [vmem:[%s265 + $0x2da8] sm:$0xff]
        %v1834 = vld [vmem:[%s265 + $0x2db0] sm:$0xff]
        %v1835 = vld [vmem:[%s265 + $0x2db8] sm:$0xff]
        %v1836 = vld [vmem:[%s265 + $0x2dc0] sm:$0xff]
        %v1837 = vld [vmem:[%s265 + $0x2dc8] sm:$0xff]
        %v1838 = vld [vmem:[%s265 + $0x2dd0] sm:$0xff]
        %v1839 = vld [vmem:[%s265 + $0x2dd8] sm:$0xff]
        %v1840 = vld [vmem:[%s265 + $0x2de0] sm:$0xff]
        %v1841 = vld [vmem:[%s265 + $0x2de8] sm:$0xff]
        %v1842 = vld [vmem:[%s265 + $0x2df0] sm:$0xff]
        %v1843 = vld [vmem:[%s265 + $0x2df8] sm:$0xff]
        %v1844 = vld [vmem:[%s265 + $0x2e00] sm:$0xff]
        %v1845 = vld [vmem:[%s265 + $0x2e08] sm:$0xff]
        %v1846 = vld [vmem:[%s265 + $0x2e10] sm:$0xff]
        %v1847 = vld [vmem:[%s265 + $0x2e18] sm:$0xff]
        %v1848 = vld [vmem:[%s265 + $0x2e20] sm:$0xff]
        %v1849 = vld [vmem:[%s265 + $0x2e28] sm:$0xff]
        %v1850 = vld [vmem:[%s265 + $0x2e30] sm:$0xff]
        %v1851 = vld [vmem:[%s265 + $0x2e38] sm:$0xff]
        %v1852 = vld [vmem:[%s265 + $0x2e40] sm:$0xff]
        %v1853 = vld [vmem:[%s265 + $0x2e48] sm:$0xff]
        %v1854 = vld [vmem:[%s265 + $0x2e50] sm:$0xff]
        %v1855 = vld [vmem:[%s265 + $0x2e58] sm:$0xff]
        %v1856 = vld [vmem:[%s265 + $0x2e60] sm:$0xff]
        %v1857 = vld [vmem:[%s265 + $0x2e68] sm:$0xff]
        %v1858 = vld [vmem:[%s265 + $0x2e70] sm:$0xff]
        %v1859 = vld [vmem:[%s265 + $0x2e78] sm:$0xff]
        %v1860 = vld [vmem:[%s265 + $0x2e80] sm:$0xff]
        %v1861 = vld [vmem:[%s265 + $0x2e88] sm:$0xff]
        %v1862 = vld [vmem:[%s265 + $0x2e90] sm:$0xff]
        %v1863 = vld [vmem:[%s265 + $0x2e98] sm:$0xff]
        %v1864 = vld [vmem:[%s265 + $0x2ea0] sm:$0xff]
        %v1865 = vld [vmem:[%s265 + $0x2ea8] sm:$0xff]
        %v1866 = vld [vmem:[%s265 + $0x2eb0] sm:$0xff]
        %v1867 = vld [vmem:[%s265 + $0x2eb8] sm:$0xff]
        %v1868 = vld [vmem:[%s265 + $0x2ec0] sm:$0xff]
        %v1869 = vld [vmem:[%s265 + $0x2ec8] sm:$0xff]
        %v1870 = vld [vmem:[%s265 + $0x2ed0] sm:$0xff]
        %v1871 = vld [vmem:[%s265 + $0x2ed8] sm:$0xff]
        %v1872 = vld [vmem:[%s265 + $0x2ee0] sm:$0xff]
        %v1873 = vld [vmem:[%s265 + $0x2ee8] sm:$0xff]
        %v1874 = vld [vmem:[%s265 + $0x2ef0] sm:$0xff]
        %v1875 = vld [vmem:[%s265 + $0x2ef8] sm:$0xff]
        %v1876 = vld [vmem:[%s265 + $0x2f00] sm:$0xff]
        %v1877 = vld [vmem:[%s265 + $0x2f08] sm:$0xff]
        %v1878 = vld [vmem:[%s265 + $0x2f10] sm:$0xff]
        %v1879 = vld [vmem:[%s265 + $0x2f18] sm:$0xff]
        %v1880 = vld [vmem:[%s265 + $0x2f20] sm:$0xff]
        %v1881 = vld [vmem:[%s265 + $0x2f28] sm:$0xff]
        %v1882 = vld [vmem:[%s265 + $0x2f30] sm:$0xff]
        %v1883 = vld [vmem:[%s265 + $0x2f38] sm:$0xff]
        %v1884 = vld [vmem:[%s265 + $0x2f40] sm:$0xff]
        %v1885 = vld [vmem:[%s265 + $0x2f48] sm:$0xff]
        %v1886 = vld [vmem:[%s265 + $0x2f50] sm:$0xff]
        %v1887 = vld [vmem:[%s265 + $0x2f58] sm:$0xff]
        %v1888 = vld [vmem:[%s265 + $0x2f60] sm:$0xff]
        %v1889 = vld [vmem:[%s265 + $0x2f68] sm:$0xff]
        %v1890 = vld [vmem:[%s265 + $0x2f70] sm:$0xff]
        %v1891 = vld [vmem:[%s265 + $0x2f78] sm:$0xff]
        %v1892 = vld [vmem:[%s265 + $0x2f80] sm:$0xff]
        %v1893 = vld [vmem:[%s265 + $0x2f88] sm:$0xff]
        %v1894 = vld [vmem:[%s265 + $0x2f90] sm:$0xff]
        %v1895 = vld [vmem:[%s265 + $0x2f98] sm:$0xff]
        %v1896 = vld [vmem:[%s265 + $0x2fa0] sm:$0xff]
        %v1897 = vld [vmem:[%s265 + $0x2fa8] sm:$0xff]
        %v1898 = vld [vmem:[%s265 + $0x2fb0] sm:$0xff]
        %v1899 = vld [vmem:[%s265 + $0x2fb8] sm:$0xff]
        %v1900 = vld [vmem:[%s265 + $0x2fc0] sm:$0xff]
        %v1901 = vld [vmem:[%s265 + $0x2fc8] sm:$0xff]
        %v1902 = vld [vmem:[%s265 + $0x2fd0] sm:$0xff]
        %v1903 = vld [vmem:[%s265 + $0x2fd8] sm:$0xff]
        %v1904 = vld [vmem:[%s265 + $0x2fe0] sm:$0xff]
        %v1905 = vld [vmem:[%s265 + $0x2fe8] sm:$0xff]
        %v1906 = vld [vmem:[%s265 + $0x2ff0] sm:$0xff]
        %v1907 = vld [vmem:[%s265 + $0x2ff8] sm:$0xff]
        %v1908 = vld [vmem:[%s265 + $0x3000] sm:$0xff]
        %v1909 = vld [vmem:[%s265 + $0x3008] sm:$0xff]
        %v1910 = vld [vmem:[%s265 + $0x3010] sm:$0xff]
        %v1911 = vld [vmem:[%s265 + $0x3018] sm:$0xff]
        %v1912 = vld [vmem:[%s265 + $0x3020] sm:$0xff]
        %v1913 = vld [vmem:[%s265 + $0x3028] sm:$0xff]
        %v1914 = vld [vmem:[%s265 + $0x3030] sm:$0xff]
        %v1915 = vld [vmem:[%s265 + $0x3038] sm:$0xff]
        %v1916 = vld [vmem:[%s265 + $0x3040] sm:$0xff]
        %v1917 = vld [vmem:[%s265 + $0x3048] sm:$0xff]
        %v1918 = vld [vmem:[%s265 + $0x3050] sm:$0xff]
        %v1919 = vld [vmem:[%s265 + $0x3058] sm:$0xff]
        %v1920 = vld [vmem:[%s265 + $0x3060] sm:$0xff]
        %v1921 = vld [vmem:[%s265 + $0x3068] sm:$0xff]
        %v1922 = vld [vmem:[%s265 + $0x3070] sm:$0xff]
        %v1923 = vld [vmem:[%s265 + $0x3078] sm:$0xff]
        %v1924 = vld [vmem:[%s265 + $0x3080] sm:$0xff]
        %v1925 = vld [vmem:[%s265 + $0x3088] sm:$0xff]
        %v1926 = vld [vmem:[%s265 + $0x3090] sm:$0xff]
        %v1927 = vld [vmem:[%s265 + $0x3098] sm:$0xff]
        %v1928 = vld [vmem:[%s265 + $0x30a0] sm:$0xff]
        %v1929 = vld [vmem:[%s265 + $0x30a8] sm:$0xff]
        %v1930 = vld [vmem:[%s265 + $0x30b0] sm:$0xff]
        %v1931 = vld [vmem:[%s265 + $0x30b8] sm:$0xff]
        %v1932 = vld [vmem:[%s265 + $0x30c0] sm:$0xff]
        %v1933 = vld [vmem:[%s265 + $0x30c8] sm:$0xff]
        %v1934 = vld [vmem:[%s265 + $0x30d0] sm:$0xff]
        %v1935 = vld [vmem:[%s265 + $0x30d8] sm:$0xff]
        %v1936 = vld [vmem:[%s265 + $0x30e0] sm:$0xff]
        %v1937 = vld [vmem:[%s265 + $0x30e8] sm:$0xff]
        %v1938 = vld [vmem:[%s265 + $0x30f0] sm:$0xff]
        %v1939 = vld [vmem:[%s265 + $0x30f8] sm:$0xff]
        %v1940 = vld [vmem:[%s265 + $0x3100] sm:$0xff]
        %v1941 = vld [vmem:[%s265 + $0x3108] sm:$0xff]
        %v1942 = vld [vmem:[%s265 + $0x3110] sm:$0xff]
        %v1943 = vld [vmem:[%s265 + $0x3118] sm:$0xff]
        %v1944 = vld [vmem:[%s265 + $0x3120] sm:$0xff]
        %v1945 = vld [vmem:[%s265 + $0x3128] sm:$0xff]
        %v1946 = vld [vmem:[%s265 + $0x3130] sm:$0xff]
        %v1947 = vld [vmem:[%s265 + $0x3138] sm:$0xff]
        %v1948 = vld [vmem:[%s265 + $0x3140] sm:$0xff]
        %v1949 = vld [vmem:[%s265 + $0x3148] sm:$0xff]
        %v1950 = vld [vmem:[%s265 + $0x3150] sm:$0xff]
        %v1951 = vld [vmem:[%s265 + $0x3158] sm:$0xff]
        %v1952 = vld [vmem:[%s265 + $0x3160] sm:$0xff]
        %v1953 = vld [vmem:[%s265 + $0x3168] sm:$0xff]
        %v1954 = vld [vmem:[%s265 + $0x3170] sm:$0xff]
        %v1955 = vld [vmem:[%s265 + $0x3178] sm:$0xff]
        %v1956 = vld [vmem:[%s265 + $0x3180] sm:$0xff]
        %v1957 = vld [vmem:[%s265 + $0x3188] sm:$0xff]
        %v1958 = vld [vmem:[%s265 + $0x3190] sm:$0xff]
        %v1959 = vld [vmem:[%s265 + $0x3198] sm:$0xff]
        %v1960 = vld [vmem:[%s265 + $0x31a0] sm:$0xff]
        %v1961 = vld [vmem:[%s265 + $0x31a8] sm:$0xff]
        %v1962 = vld [vmem:[%s265 + $0x31b0] sm:$0xff]
        %v1963 = vld [vmem:[%s265 + $0x31b8] sm:$0xff]
        %v1964 = vld [vmem:[%s265 + $0x31c0] sm:$0xff]
        %v1965 = vld [vmem:[%s265 + $0x31c8] sm:$0xff]
        %v1966 = vld [vmem:[%s265 + $0x31d0] sm:$0xff]
        %v1967 = vld [vmem:[%s265 + $0x31d8] sm:$0xff]
        %v1968 = vld [vmem:[%s265 + $0x31e0] sm:$0xff]
        %v1969 = vld [vmem:[%s265 + $0x31e8] sm:$0xff]
        %v1970 = vld [vmem:[%s265 + $0x31f0] sm:$0xff]
        %v1971 = vld [vmem:[%s265 + $0x31f8] sm:$0xff]
        %v1972 = vld [vmem:[%s265 + $0x3200] sm:$0xff]
        %v1973 = vld [vmem:[%s265 + $0x3208] sm:$0xff]
        %v1974 = vld [vmem:[%s265 + $0x3210] sm:$0xff]
        %v1975 = vld [vmem:[%s265 + $0x3218] sm:$0xff]
        %v1976 = vld [vmem:[%s265 + $0x3220] sm:$0xff]
        %v1977 = vld [vmem:[%s265 + $0x3228] sm:$0xff]
        %v1978 = vld [vmem:[%s265 + $0x3230] sm:$0xff]
        %v1979 = vld [vmem:[%s265 + $0x3238] sm:$0xff]
        %v1980 = vld [vmem:[%s265 + $0x3240] sm:$0xff]
        %v1981 = vld [vmem:[%s265 + $0x3248] sm:$0xff]
        %v1982 = vld [vmem:[%s265 + $0x3250] sm:$0xff]
        %v1983 = vld [vmem:[%s265 + $0x3258] sm:$0xff]
        %v1984 = vld [vmem:[%s265 + $0x3260] sm:$0xff]
        %v1985 = vld [vmem:[%s265 + $0x3268] sm:$0xff]
        %v1986 = vld [vmem:[%s265 + $0x3270] sm:$0xff]
        %v1987 = vld [vmem:[%s265 + $0x3278] sm:$0xff]
        %v1988 = vld [vmem:[%s265 + $0x3280] sm:$0xff]
        %v1989 = vld [vmem:[%s265 + $0x3288] sm:$0xff]
        %v1990 = vld [vmem:[%s265 + $0x3290] sm:$0xff]
        %v1991 = vld [vmem:[%s265 + $0x3298] sm:$0xff]
        %v1992 = vld [vmem:[%s265 + $0x32a0] sm:$0xff]
        %v1993 = vld [vmem:[%s265 + $0x32a8] sm:$0xff]
        %v1994 = vld [vmem:[%s265 + $0x32b0] sm:$0xff]
        %v1995 = vld [vmem:[%s265 + $0x32b8] sm:$0xff]
        %v1996 = vld [vmem:[%s265 + $0x32c0] sm:$0xff]
        %v1997 = vld [vmem:[%s265 + $0x32c8] sm:$0xff]
        %v1998 = vld [vmem:[%s265 + $0x32d0] sm:$0xff]
        %v1999 = vld [vmem:[%s265 + $0x32d8] sm:$0xff]
        %v2000 = vld [vmem:[%s265 + $0x32e0] sm:$0xff]
        %v2001 = vld [vmem:[%s265 + $0x32e8] sm:$0xff]
        %v2002 = vld [vmem:[%s265 + $0x32f0] sm:$0xff]
        %v2003 = vld [vmem:[%s265 + $0x32f8] sm:$0xff]
        %v2004 = vld [vmem:[%s265 + $0x3300] sm:$0xff]
        %v2005 = vld [vmem:[%s265 + $0x3308] sm:$0xff]
        %v2006 = vld [vmem:[%s265 + $0x3310] sm:$0xff]
        %v2007 = vld [vmem:[%s265 + $0x3318] sm:$0xff]
        %v2008 = vld [vmem:[%s265 + $0x3320] sm:$0xff]
        %v2009 = vld [vmem:[%s265 + $0x3328] sm:$0xff]
        %v2010 = vld [vmem:[%s265 + $0x3330] sm:$0xff]
        %v2011 = vld [vmem:[%s265 + $0x3338] sm:$0xff]
        %v2012 = vld [vmem:[%s265 + $0x3340] sm:$0xff]
        %v2013 = vld [vmem:[%s265 + $0x3348] sm:$0xff]
        %v2014 = vld [vmem:[%s265 + $0x3350] sm:$0xff]
        %v2015 = vld [vmem:[%s265 + $0x3358] sm:$0xff]
        %v2016 = vld [vmem:[%s265 + $0x3360] sm:$0xff]
        %v2017 = vld [vmem:[%s265 + $0x3368] sm:$0xff]
        %v2018 = vld [vmem:[%s265 + $0x3370] sm:$0xff]
        %v2019 = vld [vmem:[%s265 + $0x3378] sm:$0xff]
        %v2020 = vld [vmem:[%s265 + $0x3380] sm:$0xff]
        %v2021 = vld [vmem:[%s265 + $0x3388] sm:$0xff]
        %v2022 = vld [vmem:[%s265 + $0x3390] sm:$0xff]
        %v2023 = vld [vmem:[%s265 + $0x3398] sm:$0xff]
        %v2024 = vld [vmem:[%s265 + $0x33a0] sm:$0xff]
        %v2025 = vld [vmem:[%s265 + $0x33a8] sm:$0xff]
        %v2026 = vld [vmem:[%s265 + $0x33b0] sm:$0xff]
        %v2027 = vld [vmem:[%s265 + $0x33b8] sm:$0xff]
        %v2028 = vld [vmem:[%s265 + $0x33c0] sm:$0xff]
        %v2029 = vld [vmem:[%s265 + $0x33c8] sm:$0xff]
        %v2030 = vld [vmem:[%s265 + $0x33d0] sm:$0xff]
        %v2031 = vld [vmem:[%s265 + $0x33d8] sm:$0xff]
        %v2032 = vld [vmem:[%s265 + $0x33e0] sm:$0xff]
        %v2033 = vld [vmem:[%s265 + $0x33e8] sm:$0xff]
        %v2034 = vld [vmem:[%s265 + $0x33f0] sm:$0xff]
        %v2035 = vld [vmem:[%s265 + $0x33f8] sm:$0xff]
        %v2036 = vld [vmem:[%s265 + $0x3400] sm:$0xff]
        %v2037 = vld [vmem:[%s265 + $0x3408] sm:$0xff]
        %v2038 = vld [vmem:[%s265 + $0x3410] sm:$0xff]
        %v2039 = vld [vmem:[%s265 + $0x3418] sm:$0xff]
        %v2040 = vld [vmem:[%s265 + $0x3420] sm:$0xff]
        %v2041 = vld [vmem:[%s265 + $0x3428] sm:$0xff]
        %v2042 = vld [vmem:[%s265 + $0x3430] sm:$0xff]
        %v2043 = vld [vmem:[%s265 + $0x3438] sm:$0xff]
        %v2044 = vld [vmem:[%s265 + $0x3440] sm:$0xff]
        %v2045 = vld [vmem:[%s265 + $0x3448] sm:$0xff]
        %v2046 = vld [vmem:[%s265 + $0x3450] sm:$0xff]
        %v2047 = vld [vmem:[%s265 + $0x3458] sm:$0xff]
        %v2048 = vld [vmem:[%s265 + $0x3460] sm:$0xff]
        %v2049 = vld [vmem:[%s265 + $0x3468] sm:$0xff]
        %v2050 = vld [vmem:[%s265 + $0x3470] sm:$0xff]
        %v2051 = vld [vmem:[%s265 + $0x3478] sm:$0xff]
        %v2052 = vld [vmem:[%s265 + $0x3480] sm:$0xff]
        %v2053 = vld [vmem:[%s265 + $0x3488] sm:$0xff]
        %v2054 = vld [vmem:[%s265 + $0x3490] sm:$0xff]
        %v2055 = vld [vmem:[%s265 + $0x3498] sm:$0xff]
        %v2056 = vld [vmem:[%s265 + $0x34a0] sm:$0xff]
        %v2057 = vld [vmem:[%s265 + $0x34a8] sm:$0xff]
        %v2058 = vld [vmem:[%s265 + $0x34b0] sm:$0xff]
        %v2059 = vld [vmem:[%s265 + $0x34b8] sm:$0xff]
        %v2060 = vld [vmem:[%s265 + $0x34c0] sm:$0xff]
        %v2061 = vld [vmem:[%s265 + $0x34c8] sm:$0xff]
        %v2062 = vld [vmem:[%s265 + $0x34d0] sm:$0xff]
        %v2063 = vld [vmem:[%s265 + $0x34d8] sm:$0xff]
        %v2064 = vld [vmem:[%s265 + $0x34e0] sm:$0xff]
        %v2065 = vld [vmem:[%s265 + $0x34e8] sm:$0xff]
        %v2066 = vld [vmem:[%s265 + $0x34f0] sm:$0xff]
        %v2067 = vld [vmem:[%s265 + $0x34f8] sm:$0xff]
        %v2068 = vld [vmem:[%s265 + $0x3500] sm:$0xff]
        %v2069 = vld [vmem:[%s265 + $0x3508] sm:$0xff]
        %v2070 = vld [vmem:[%s265 + $0x3510] sm:$0xff]
        %v2071 = vld [vmem:[%s265 + $0x3518] sm:$0xff]
        %v2072 = vld [vmem:[%s265 + $0x3520] sm:$0xff]
        %v2073 = vld [vmem:[%s265 + $0x3528] sm:$0xff]
        %v2074 = vld [vmem:[%s265 + $0x3530] sm:$0xff]
        %v2075 = vld [vmem:[%s265 + $0x3538] sm:$0xff]
        %v2076 = vld [vmem:[%s265 + $0x3540] sm:$0xff]
        %v2077 = vld [vmem:[%s265 + $0x3548] sm:$0xff]
        %v2078 = vld [vmem:[%s265 + $0x3550] sm:$0xff]
        %v2079 = vld [vmem:[%s265 + $0x3558] sm:$0xff]
        %v2080 = vld [vmem:[%s265 + $0x3560] sm:$0xff]
        %v2081 = vld [vmem:[%s265 + $0x3568] sm:$0xff]
        %v2082 = vld [vmem:[%s265 + $0x3570] sm:$0xff]
        %v2083 = vld [vmem:[%s265 + $0x3578] sm:$0xff]
        %v2084 = vld [vmem:[%s265 + $0x3580] sm:$0xff]
        %v2085 = vld [vmem:[%s265 + $0x3588] sm:$0xff]
        %v2086 = vld [vmem:[%s265 + $0x3590] sm:$0xff]
        %v2087 = vld [vmem:[%s265 + $0x3598] sm:$0xff]
        %v2088 = vld [vmem:[%s265 + $0x35a0] sm:$0xff]
        %v2089 = vld [vmem:[%s265 + $0x35a8] sm:$0xff]
        %v2090 = vld [vmem:[%s265 + $0x35b0] sm:$0xff]
        %v2091 = vld [vmem:[%s265 + $0x35b8] sm:$0xff]
        %v2092 = vld [vmem:[%s265 + $0x35c0] sm:$0xff]
        %v2093 = vld [vmem:[%s265 + $0x35c8] sm:$0xff]
        %v2094 = vld [vmem:[%s265 + $0x35d0] sm:$0xff]
        %v2095 = vld [vmem:[%s265 + $0x35d8] sm:$0xff]
        %v2096 = vld [vmem:[%s265 + $0x35e0] sm:$0xff]
        %v2097 = vld [vmem:[%s265 + $0x35e8] sm:$0xff]
        %v2098 = vld [vmem:[%s265 + $0x35f0] sm:$0xff]
        %v2099 = vld [vmem:[%s265 + $0x35f8] sm:$0xff]
        %v2100 = vld [vmem:[%s265 + $0x3600] sm:$0xff]
        %v2101 = vld [vmem:[%s265 + $0x3608] sm:$0xff]
        %v2102 = vld [vmem:[%s265 + $0x3610] sm:$0xff]
        %v2103 = vld [vmem:[%s265 + $0x3618] sm:$0xff]
        %v2104 = vld [vmem:[%s265 + $0x3620] sm:$0xff]
        %v2105 = vld [vmem:[%s265 + $0x3628] sm:$0xff]
        %v2106 = vld [vmem:[%s265 + $0x3630] sm:$0xff]
        %v2107 = vld [vmem:[%s265 + $0x3638] sm:$0xff]
        %v2108 = vld [vmem:[%s265 + $0x3640] sm:$0xff]
        %v2109 = vld [vmem:[%s265 + $0x3648] sm:$0xff]
        %v2110 = vld [vmem:[%s265 + $0x3650] sm:$0xff]
        %v2111 = vld [vmem:[%s265 + $0x3658] sm:$0xff]
        %v2112 = vld [vmem:[%s265 + $0x3660] sm:$0xff]
        %v2113 = vld [vmem:[%s265 + $0x3668] sm:$0xff]
        %v2114 = vld [vmem:[%s265 + $0x3670] sm:$0xff]
        %v2115 = vld [vmem:[%s265 + $0x3678] sm:$0xff]
        %v2116 = vld [vmem:[%s265 + $0x3680] sm:$0xff]
        %v2117 = vld [vmem:[%s265 + $0x3688] sm:$0xff]
        %v2118 = vld [vmem:[%s265 + $0x3690] sm:$0xff]
        %v2119 = vld [vmem:[%s265 + $0x3698] sm:$0xff]
        %v2120 = vld [vmem:[%s265 + $0x36a0] sm:$0xff]
        %v2121 = vld [vmem:[%s265 + $0x36a8] sm:$0xff]
        %v2122 = vld [vmem:[%s265 + $0x36b0] sm:$0xff]
        %v2123 = vld [vmem:[%s265 + $0x36b8] sm:$0xff]
        %v2124 = vld [vmem:[%s265 + $0x36c0] sm:$0xff]
        %v2125 = vld [vmem:[%s265 + $0x36c8] sm:$0xff]
        %v2126 = vld [vmem:[%s265 + $0x36d0] sm:$0xff]
        %v2127 = vld [vmem:[%s265 + $0x36d8] sm:$0xff]
        %v2128 = vld [vmem:[%s265 + $0x36e0] sm:$0xff]
        %v2129 = vld [vmem:[%s265 + $0x36e8] sm:$0xff]
        %v2130 = vld [vmem:[%s265 + $0x36f0] sm:$0xff]
        %v2131 = vld [vmem:[%s265 + $0x36f8] sm:$0xff]
        %v2132 = vld [vmem:[%s265 + $0x3700] sm:$0xff]
        %v2133 = vld [vmem:[%s265 + $0x3708] sm:$0xff]
        %v2134 = vld [vmem:[%s265 + $0x3710] sm:$0xff]
        %v2135 = vld [vmem:[%s265 + $0x3718] sm:$0xff]
        %v2136 = vld [vmem:[%s265 + $0x3720] sm:$0xff]
        %v2137 = vld [vmem:[%s265 + $0x3728] sm:$0xff]
        %v2138 = vld [vmem:[%s265 + $0x3730] sm:$0xff]
        %v2139 = vld [vmem:[%s265 + $0x3738] sm:$0xff]
        %v2140 = vld [vmem:[%s265 + $0x3740] sm:$0xff]
        %v2141 = vld [vmem:[%s265 + $0x3748] sm:$0xff]
        %v2142 = vld [vmem:[%s265 + $0x3750] sm:$0xff]
        %v2143 = vld [vmem:[%s265 + $0x3758] sm:$0xff]
        %v2144 = vld [vmem:[%s265 + $0x3760] sm:$0xff]
        %v2145 = vld [vmem:[%s265 + $0x3768] sm:$0xff]
        %v2146 = vld [vmem:[%s265 + $0x3770] sm:$0xff]
        %v2147 = vld [vmem:[%s265 + $0x3778] sm:$0xff]
        %v2148 = vld [vmem:[%s265 + $0x3780] sm:$0xff]
        %v2149 = vld [vmem:[%s265 + $0x3788] sm:$0xff]
        %v2150 = vld [vmem:[%s265 + $0x3790] sm:$0xff]
        %v2151 = vld [vmem:[%s265 + $0x3798] sm:$0xff]
        %v2152 = vld [vmem:[%s265 + $0x37a0] sm:$0xff]
        %v2153 = vld [vmem:[%s265 + $0x37a8] sm:$0xff]
        %v2154 = vld [vmem:[%s265 + $0x37b0] sm:$0xff]
        %v2155 = vld [vmem:[%s265 + $0x37b8] sm:$0xff]
        %v2156 = vld [vmem:[%s265 + $0x37c0] sm:$0xff]
        %v2157 = vld [vmem:[%s265 + $0x37c8] sm:$0xff]
        %v2158 = vld [vmem:[%s265 + $0x37d0] sm:$0xff]
        %v2159 = vld [vmem:[%s265 + $0x37d8] sm:$0xff]
        %v2160 = vld [vmem:[%s265 + $0x37e0] sm:$0xff]
        %v2161 = vld [vmem:[%s265 + $0x37e8] sm:$0xff]
        %v2162 = vld [vmem:[%s265 + $0x37f0] sm:$0xff]
        %v2163 = vld [vmem:[%s265 + $0x37f8] sm:$0xff]
        %v2164 = vld [vmem:[%s265 + $0x3800] sm:$0xff]
        %v2165 = vld [vmem:[%s265 + $0x3808] sm:$0xff]
        %v2166 = vld [vmem:[%s265 + $0x3810] sm:$0xff]
        %v2167 = vld [vmem:[%s265 + $0x3818] sm:$0xff]
        %v2168 = vld [vmem:[%s265 + $0x3820] sm:$0xff]
        %v2169 = vld [vmem:[%s265 + $0x3828] sm:$0xff]
        %v2170 = vld [vmem:[%s265 + $0x3830] sm:$0xff]
        %v2171 = vld [vmem:[%s265 + $0x3838] sm:$0xff]
        %v2172 = vld [vmem:[%s265 + $0x3840] sm:$0xff]
        %v2173 = vld [vmem:[%s265 + $0x3848] sm:$0xff]
        %v2174 = vld [vmem:[%s265 + $0x3850] sm:$0xff]
        %v2175 = vld [vmem:[%s265 + $0x3858] sm:$0xff]
        %v2176 = vld [vmem:[%s265 + $0x3860] sm:$0xff]
        %v2177 = vld [vmem:[%s265 + $0x3868] sm:$0xff]
        %v2178 = vld [vmem:[%s265 + $0x3870] sm:$0xff]
        %v2179 = vld [vmem:[%s265 + $0x3878] sm:$0xff]
        %v2180 = vld [vmem:[%s265 + $0x3880] sm:$0xff]
        %v2181 = vld [vmem:[%s265 + $0x3888] sm:$0xff]
        %v2182 = vld [vmem:[%s265 + $0x3890] sm:$0xff]
        %v2183 = vld [vmem:[%s265 + $0x3898] sm:$0xff]
        %v2184 = vld [vmem:[%s265 + $0x38a0] sm:$0xff]
        %v2185 = vld [vmem:[%s265 + $0x38a8] sm:$0xff]
        %v2186 = vld [vmem:[%s265 + $0x38b0] sm:$0xff]
        %v2187 = vld [vmem:[%s265 + $0x38b8] sm:$0xff]
        %v2188 = vld [vmem:[%s265 + $0x38c0] sm:$0xff]
        %v2189 = vld [vmem:[%s265 + $0x38c8] sm:$0xff]
        %v2190 = vld [vmem:[%s265 + $0x38d0] sm:$0xff]
        %v2191 = vld [vmem:[%s265 + $0x38d8] sm:$0xff]
        %v2192 = vld [vmem:[%s265 + $0x38e0] sm:$0xff]
        %v2193 = vld [vmem:[%s265 + $0x38e8] sm:$0xff]
        %v2194 = vld [vmem:[%s265 + $0x38f0] sm:$0xff]
        %v2195 = vld [vmem:[%s265 + $0x38f8] sm:$0xff]
        %v2196 = vld [vmem:[%s265 + $0x3900] sm:$0xff]
        %v2197 = vld [vmem:[%s265 + $0x3908] sm:$0xff]
        %v2198 = vld [vmem:[%s265 + $0x3910] sm:$0xff]
        %v2199 = vld [vmem:[%s265 + $0x3918] sm:$0xff]
        %v2200 = vld [vmem:[%s265 + $0x3920] sm:$0xff]
        %v2201 = vld [vmem:[%s265 + $0x3928] sm:$0xff]
        %v2202 = vld [vmem:[%s265 + $0x3930] sm:$0xff]
        %v2203 = vld [vmem:[%s265 + $0x3938] sm:$0xff]
        %v2204 = vld [vmem:[%s265 + $0x3940] sm:$0xff]
        %v2205 = vld [vmem:[%s265 + $0x3948] sm:$0xff]
        %v2206 = vld [vmem:[%s265 + $0x3950] sm:$0xff]
        %v2207 = vld [vmem:[%s265 + $0x3958] sm:$0xff]
        %v2208 = vld [vmem:[%s265 + $0x3960] sm:$0xff]
        %v2209 = vld [vmem:[%s265 + $0x3968] sm:$0xff]
        %v2210 = vld [vmem:[%s265 + $0x3970] sm:$0xff]
        %v2211 = vld [vmem:[%s265 + $0x3978] sm:$0xff]
        %v2212 = vld [vmem:[%s265 + $0x3980] sm:$0xff]
        %v2213 = vld [vmem:[%s265 + $0x3988] sm:$0xff]
        %v2214 = vld [vmem:[%s265 + $0x3990] sm:$0xff]
        %v2215 = vld [vmem:[%s265 + $0x3998] sm:$0xff]
        %v2216 = vld [vmem:[%s265 + $0x39a0] sm:$0xff]
        %v2217 = vld [vmem:[%s265 + $0x39a8] sm:$0xff]
        %v2218 = vld [vmem:[%s265 + $0x39b0] sm:$0xff]
        %v2219 = vld [vmem:[%s265 + $0x39b8] sm:$0xff]
        %v2220 = vld [vmem:[%s265 + $0x39c0] sm:$0xff]
        %v2221 = vld [vmem:[%s265 + $0x39c8] sm:$0xff]
        %v2222 = vld [vmem:[%s265 + $0x39d0] sm:$0xff]
        %v2223 = vld [vmem:[%s265 + $0x39d8] sm:$0xff]
        %v2224 = vld [vmem:[%s265 + $0x39e0] sm:$0xff]
        %v2225 = vld [vmem:[%s265 + $0x39e8] sm:$0xff]
        %v2226 = vld [vmem:[%s265 + $0x39f0] sm:$0xff]
        %v2227 = vld [vmem:[%s265 + $0x39f8] sm:$0xff]
        %v2228 = vld [vmem:[%s265 + $0x3a00] sm:$0xff]
        %v2229 = vld [vmem:[%s265 + $0x3a08] sm:$0xff]
        %v2230 = vld [vmem:[%s265 + $0x3a10] sm:$0xff]
        %v2231 = vld [vmem:[%s265 + $0x3a18] sm:$0xff]
        %v2232 = vld [vmem:[%s265 + $0x3a20] sm:$0xff]
        %v2233 = vld [vmem:[%s265 + $0x3a28] sm:$0xff]
        %v2234 = vld [vmem:[%s265 + $0x3a30] sm:$0xff]
        %v2235 = vld [vmem:[%s265 + $0x3a38] sm:$0xff]
        %v2236 = vld [vmem:[%s265 + $0x3a40] sm:$0xff]
        %v2237 = vld [vmem:[%s265 + $0x3a48] sm:$0xff]
        %v2238 = vld [vmem:[%s265 + $0x3a50] sm:$0xff]
        %v2239 = vld [vmem:[%s265 + $0x3a58] sm:$0xff]
        %v2240 = vld [vmem:[%s265 + $0x3a60] sm:$0xff]
        %v2241 = vld [vmem:[%s265 + $0x3a68] sm:$0xff]
        %v2242 = vld [vmem:[%s265 + $0x3a70] sm:$0xff]
        %v2243 = vld [vmem:[%s265 + $0x3a78] sm:$0xff]
        %v2244 = vld [vmem:[%s265 + $0x3a80] sm:$0xff]
        %v2245 = vld [vmem:[%s265 + $0x3a88] sm:$0xff]
        %v2246 = vld [vmem:[%s265 + $0x3a90] sm:$0xff]
        %v2247 = vld [vmem:[%s265 + $0x3a98] sm:$0xff]
        %v2248 = vld [vmem:[%s265 + $0x3aa0] sm:$0xff]
        %v2249 = vld [vmem:[%s265 + $0x3aa8] sm:$0xff]
        %v2250 = vld [vmem:[%s265 + $0x3ab0] sm:$0xff]
        %v2251 = vld [vmem:[%s265 + $0x3ab8] sm:$0xff]
        %v2252 = vld [vmem:[%s265 + $0x3ac0] sm:$0xff]
        %v2253 = vld [vmem:[%s265 + $0x3ac8] sm:$0xff]
        %v2254 = vld [vmem:[%s265 + $0x3ad0] sm:$0xff]
        %v2255 = vld [vmem:[%s265 + $0x3ad8] sm:$0xff]
        %v2256 = vld [vmem:[%s265 + $0x3ae0] sm:$0xff]
        %v2257 = vld [vmem:[%s265 + $0x3ae8] sm:$0xff]
        %v2258 = vld [vmem:[%s265 + $0x3af0] sm:$0xff]
        %v2259 = vld [vmem:[%s265 + $0x3af8] sm:$0xff]
        %v2260 = vld [vmem:[%s265 + $0x3b00] sm:$0xff]
        %v2261 = vld [vmem:[%s265 + $0x3b08] sm:$0xff]
        %v2262 = vld [vmem:[%s265 + $0x3b10] sm:$0xff]
        %v2263 = vld [vmem:[%s265 + $0x3b18] sm:$0xff]
        %v2264 = vld [vmem:[%s265 + $0x3b20] sm:$0xff]
        %v2265 = vld [vmem:[%s265 + $0x3b28] sm:$0xff]
        %v2266 = vld [vmem:[%s265 + $0x3b30] sm:$0xff]
        %v2267 = vld [vmem:[%s265 + $0x3b38] sm:$0xff]
        %v2268 = vld [vmem:[%s265 + $0x3b40] sm:$0xff]
        %v2269 = vld [vmem:[%s265 + $0x3b48] sm:$0xff]
        %v2270 = vld [vmem:[%s265 + $0x3b50] sm:$0xff]
        %v2271 = vld [vmem:[%s265 + $0x3b58] sm:$0xff]
        %v2272 = vld [vmem:[%s265 + $0x3b60] sm:$0xff]
        %v2273 = vld [vmem:[%s265 + $0x3b68] sm:$0xff]
        %v2274 = vld [vmem:[%s265 + $0x3b70] sm:$0xff]
        %v2275 = vld [vmem:[%s265 + $0x3b78] sm:$0xff]
        %v2276 = vld [vmem:[%s265 + $0x3b80] sm:$0xff]
        %v2277 = vld [vmem:[%s265 + $0x3b88] sm:$0xff]
        %v2278 = vld [vmem:[%s265 + $0x3b90] sm:$0xff]
        %v2279 = vld [vmem:[%s265 + $0x3b98] sm:$0xff]
        %v2280 = vld [vmem:[%s265 + $0x3ba0] sm:$0xff]
        %v2281 = vld [vmem:[%s265 + $0x3ba8] sm:$0xff]
        %v2282 = vld [vmem:[%s265 + $0x3bb0] sm:$0xff]
        %v2283 = vld [vmem:[%s265 + $0x3bb8] sm:$0xff]
        %v2284 = vld [vmem:[%s265 + $0x3bc0] sm:$0xff]
        %v2285 = vld [vmem:[%s265 + $0x3bc8] sm:$0xff]
        %v2286 = vld [vmem:[%s265 + $0x3bd0] sm:$0xff]
        %v2287 = vld [vmem:[%s265 + $0x3bd8] sm:$0xff]
        %v2288 = vld [vmem:[%s265 + $0x3be0] sm:$0xff]
        %v2289 = vld [vmem:[%s265 + $0x3be8] sm:$0xff]
        %v2290 = vld [vmem:[%s265 + $0x3bf0] sm:$0xff]
        %v2291 = vld [vmem:[%s265 + $0x3bf8] sm:$0xff]
        %v2292 = vld [vmem:[%s265 + $0x3c00] sm:$0xff]
        %v2293 = vld [vmem:[%s265 + $0x3c08] sm:$0xff]
        %v2294 = vld [vmem:[%s265 + $0x3c10] sm:$0xff]
        %v2295 = vld [vmem:[%s265 + $0x3c18] sm:$0xff]
        %v2296 = vld [vmem:[%s265 + $0x3c20] sm:$0xff]
        %v2297 = vld [vmem:[%s265 + $0x3c28] sm:$0xff]
        %v2298 = vld [vmem:[%s265 + $0x3c30] sm:$0xff]
        %v2299 = vld [vmem:[%s265 + $0x3c38] sm:$0xff]
        %v2300 = vld [vmem:[%s265 + $0x3c40] sm:$0xff]
        %v2301 = vld [vmem:[%s265 + $0x3c48] sm:$0xff]
        %v2302 = vld [vmem:[%s265 + $0x3c50] sm:$0xff]
        %v2303 = vld [vmem:[%s265 + $0x3c58] sm:$0xff]
        %v2304 = vld [vmem:[%s265 + $0x3c60] sm:$0xff]
        %v2305 = vld [vmem:[%s265 + $0x3c68] sm:$0xff]
        %v2306 = vld [vmem:[%s265 + $0x3c70] sm:$0xff]
        %v2307 = vld [vmem:[%s265 + $0x3c78] sm:$0xff]
        %v2308 = vld [vmem:[%s265 + $0x3c80] sm:$0xff]
        %v2309 = vld [vmem:[%s265 + $0x3c88] sm:$0xff]
        %v2310 = vld [vmem:[%s265 + $0x3c90] sm:$0xff]
        %v2311 = vld [vmem:[%s265 + $0x3c98] sm:$0xff]
        %v2312 = vld [vmem:[%s265 + $0x3ca0] sm:$0xff]
        %v2313 = vld [vmem:[%s265 + $0x3ca8] sm:$0xff]
        %v2314 = vld [vmem:[%s265 + $0x3cb0] sm:$0xff]
        %v2315 = vld [vmem:[%s265 + $0x3cb8] sm:$0xff]
        %v2316 = vld [vmem:[%s265 + $0x3cc0] sm:$0xff]
        %v2317 = vld [vmem:[%s265 + $0x3cc8] sm:$0xff]
        %v2318 = vld [vmem:[%s265 + $0x3cd0] sm:$0xff]
        %v2319 = vld [vmem:[%s265 + $0x3cd8] sm:$0xff]
        %v2320 = vld [vmem:[%s265 + $0x3ce0] sm:$0xff]
        %v2321 = vld [vmem:[%s265 + $0x3ce8] sm:$0xff]
        %v2322 = vld [vmem:[%s265 + $0x3cf0] sm:$0xff]
        %v2323 = vld [vmem:[%s265 + $0x3cf8] sm:$0xff]
        %v2324 = vld [vmem:[%s265 + $0x3d00] sm:$0xff]
        %v2325 = vld [vmem:[%s265 + $0x3d08] sm:$0xff]
        %v2326 = vld [vmem:[%s265 + $0x3d10] sm:$0xff]
        %v2327 = vld [vmem:[%s265 + $0x3d18] sm:$0xff]
        %v2328 = vld [vmem:[%s265 + $0x3d20] sm:$0xff]
        %v2329 = vld [vmem:[%s265 + $0x3d28] sm:$0xff]
        %v2330 = vld [vmem:[%s265 + $0x3d30] sm:$0xff]
        %v2331 = vld [vmem:[%s265 + $0x3d38] sm:$0xff]
        %v2332 = vld [vmem:[%s265 + $0x3d40] sm:$0xff]
        %v2333 = vld [vmem:[%s265 + $0x3d48] sm:$0xff]
        %v2334 = vld [vmem:[%s265 + $0x3d50] sm:$0xff]
        %v2335 = vld [vmem:[%s265 + $0x3d58] sm:$0xff]
        %v2336 = vld [vmem:[%s265 + $0x3d60] sm:$0xff]
        %v2337 = vld [vmem:[%s265 + $0x3d68] sm:$0xff]
        %v2338 = vld [vmem:[%s265 + $0x3d70] sm:$0xff]
        %v2339 = vld [vmem:[%s265 + $0x3d78] sm:$0xff]
        %v2340 = vld [vmem:[%s265 + $0x3d80] sm:$0xff]
        %v2341 = vld [vmem:[%s265 + $0x3d88] sm:$0xff]
        %v2342 = vld [vmem:[%s265 + $0x3d90] sm:$0xff]
        %v2343 = vld [vmem:[%s265 + $0x3d98] sm:$0xff]
        %v2344 = vld [vmem:[%s265 + $0x3da0] sm:$0xff]
        %v2345 = vld [vmem:[%s265 + $0x3da8] sm:$0xff]
        %v2346 = vld [vmem:[%s265 + $0x3db0] sm:$0xff]
        %v2347 = vld [vmem:[%s265 + $0x3db8] sm:$0xff]
        %v2348 = vld [vmem:[%s265 + $0x3dc0] sm:$0xff]
        %v2349 = vld [vmem:[%s265 + $0x3dc8] sm:$0xff]
        %v2350 = vld [vmem:[%s265 + $0x3dd0] sm:$0xff]
        %v2351 = vld [vmem:[%s265 + $0x3dd8] sm:$0xff]
        %v2352 = vld [vmem:[%s265 + $0x3de0] sm:$0xff]
        %v2353 = vld [vmem:[%s265 + $0x3de8] sm:$0xff]
        %v2354 = vld [vmem:[%s265 + $0x3df0] sm:$0xff]
        %v2355 = vld [vmem:[%s265 + $0x3df8] sm:$0xff]
        %v2356 = vld [vmem:[%s265 + $0x3e00] sm:$0xff]
        %v2357 = vld [vmem:[%s265 + $0x3e08] sm:$0xff]
        %v2358 = vld [vmem:[%s265 + $0x3e10] sm:$0xff]
        %v2359 = vld [vmem:[%s265 + $0x3e18] sm:$0xff]
        %v2360 = vld [vmem:[%s265 + $0x3e20] sm:$0xff]
        %v2361 = vld [vmem:[%s265 + $0x3e28] sm:$0xff]
        %v2362 = vld [vmem:[%s265 + $0x3e30] sm:$0xff]
        %v2363 = vld [vmem:[%s265 + $0x3e38] sm:$0xff]
        %v2364 = vld [vmem:[%s265 + $0x3e40] sm:$0xff]
        %v2365 = vld [vmem:[%s265 + $0x3e48] sm:$0xff]
        %v2366 = vld [vmem:[%s265 + $0x3e50] sm:$0xff]
        %v2367 = vld [vmem:[%s265 + $0x3e58] sm:$0xff]
        %v2368 = vld [vmem:[%s265 + $0x3e60] sm:$0xff]
        %v2369 = vld [vmem:[%s265 + $0x3e68] sm:$0xff]
        %v2370 = vld [vmem:[%s265 + $0x3e70] sm:$0xff]
        %v2371 = vld [vmem:[%s265 + $0x3e78] sm:$0xff]
        %v2372 = vld [vmem:[%s265 + $0x3e80] sm:$0xff]
        %v2373 = vld [vmem:[%s265 + $0x3e88] sm:$0xff]
        %v2374 = vld [vmem:[%s265 + $0x3e90] sm:$0xff]
        %v2375 = vld [vmem:[%s265 + $0x3e98] sm:$0xff]
        %v2376 = vld [vmem:[%s265 + $0x3ea0] sm:$0xff]
        %v2377 = vld [vmem:[%s265 + $0x3ea8] sm:$0xff]
        %v2378 = vld [vmem:[%s265 + $0x3eb0] sm:$0xff]
        %v2379 = vld [vmem:[%s265 + $0x3eb8] sm:$0xff]
        %v2380 = vld [vmem:[%s265 + $0x3ec0] sm:$0xff]
        %v2381 = vld [vmem:[%s265 + $0x3ec8] sm:$0xff]
        %v2382 = vld [vmem:[%s265 + $0x3ed0] sm:$0xff]
        %v2383 = vld [vmem:[%s265 + $0x3ed8] sm:$0xff]
        %v2384 = vld [vmem:[%s265 + $0x3ee0] sm:$0xff]
        %v2385 = vld [vmem:[%s265 + $0x3ee8] sm:$0xff]
        %v2386 = vld [vmem:[%s265 + $0x3ef0] sm:$0xff]
        %v2387 = vld [vmem:[%s265 + $0x3ef8] sm:$0xff]
        %v2388 = vld [vmem:[%s265 + $0x3f00] sm:$0xff]
        %v2389 = vld [vmem:[%s265 + $0x3f08] sm:$0xff]
        %v2390 = vld [vmem:[%s265 + $0x3f10] sm:$0xff]
        %v2391 = vld [vmem:[%s265 + $0x3f18] sm:$0xff]
        %v2392 = vld [vmem:[%s265 + $0x3f20] sm:$0xff]
        %v2393 = vld [vmem:[%s265 + $0x3f28] sm:$0xff]
        %v2394 = vld [vmem:[%s265 + $0x3f30] sm:$0xff]
        %v2395 = vld [vmem:[%s265 + $0x3f38] sm:$0xff]
        %v2396 = vld [vmem:[%s265 + $0x3f40] sm:$0xff]
        %v2397 = vld [vmem:[%s265 + $0x3f48] sm:$0xff]
        %v2398 = vld [vmem:[%s265 + $0x3f50] sm:$0xff]
        %v2399 = vld [vmem:[%s265 + $0x3f58] sm:$0xff]
        %v2400 = vld [vmem:[%s265 + $0x3f60] sm:$0xff]
        %v2401 = vld [vmem:[%s265 + $0x3f68] sm:$0xff]
        %v2402 = vld [vmem:[%s265 + $0x3f70] sm:$0xff]
        %v2403 = vld [vmem:[%s265 + $0x3f78] sm:$0xff]
        %v2404 = vld [vmem:[%s265 + $0x3f80] sm:$0xff]
        %v2405 = vld [vmem:[%s265 + $0x3f88] sm:$0xff]
        %v2406 = vld [vmem:[%s265 + $0x3f90] sm:$0xff]
        %v2407 = vld [vmem:[%s265 + $0x3f98] sm:$0xff]
        %v2408 = vld [vmem:[%s265 + $0x3fa0] sm:$0xff]
        %v2409 = vld [vmem:[%s265 + $0x3fa8] sm:$0xff]
        %v2410 = vld [vmem:[%s265 + $0x3fb0] sm:$0xff]
        %v2411 = vld [vmem:[%s265 + $0x3fb8] sm:$0xff]
        %v2412 = vld [vmem:[%s265 + $0x3fc0] sm:$0xff]
        %v2413 = vld [vmem:[%s265 + $0x3fc8] sm:$0xff]
        %v2414 = vld [vmem:[%s265 + $0x3fd0] sm:$0xff]
        %v2415 = vld [vmem:[%s265 + $0x3fd8] sm:$0xff]
        %v2416 = vld [vmem:[%s265 + $0x3fe0] sm:$0xff]
        %v2417 = vld [vmem:[%s265 + $0x3fe8] sm:$0xff]
        %v2418 = vld [vmem:[%s265 + $0x3ff0] sm:$0xff]
        %v2419 = vld [vmem:[%s265 + $0x3ff8] sm:$0xff]
        %2420 = vmatprep.subr.mxu0 %v373
        %2421 = vmatpush1.msra.mxu0 %v372
        %2422 = vmatprep.subr.mxu0 %v389
        %2423 = vmatpush1.msra.mxu0 %v388
        %2424 = vmatprep.subr.mxu0 %v405
        %2425 = vmatpush1.msra.mxu0 %v404
        %2426 = vmatprep.subr.mxu0 %v421
        %2427 = vmatpush1.msra.mxu0 %v420
        %2428 = vmatprep.subr.mxu0 %v437
        %2429 = vmatpush1.msra.mxu0 %v436
        %2430 = vmatprep.subr.mxu0 %v453
        %2431 = vmatpush1.msra.mxu0 %v452
        %2432 = vmatprep.subr.mxu0 %v469
        %2433 = vmatpush1.msra.mxu0 %v468
        %2434 = vmatprep.subr.mxu0 %v485
        %2435 = vmatpush1.msra.mxu0 %v484
        %2436 = vmatprep.subr.mxu0 %v501
        %2437 = vmatpush1.msra.mxu0 %v500
        %2438 = vmatprep.subr.mxu0 %v517
        %2439 = vmatpush1.msra.mxu0 %v516
        %2440 = vmatprep.subr.mxu0 %v533
        %2441 = vmatpush1.msra.mxu0 %v532
        %2442 = vmatprep.subr.mxu0 %v549
        %2443 = vmatpush1.msra.mxu0 %v548
        %2444 = vmatprep.subr.mxu0 %v565
        %2445 = vmatpush1.msra.mxu0 %v564
        %2446 = vmatprep.subr.mxu0 %v581
        %2447 = vmatpush1.msra.mxu0 %v580
        %2448 = vmatprep.subr.mxu0 %v597
        %2449 = vmatpush1.msra.mxu0 %v596
        %2450 = vmatprep.subr.mxu0 %v613
        %2451 = vmatpush1.msra.mxu0 %v612
        %2452 = vmatprep.subr.mxu0 %v629
        %2453 = vmatpush1.msra.mxu0 %v628
        %2454 = vmatprep.subr.mxu0 %v645
        %2455 = vmatpush1.msra.mxu0 %v644
        %2456 = vmatprep.subr.mxu0 %v661
        %2457 = vmatpush1.msra.mxu0 %v660
        %2458 = vmatprep.subr.mxu0 %v677
        %2459 = vmatpush1.msra.mxu0 %v676
        %2460 = vmatprep.subr.mxu0 %v693
        %2461 = vmatpush1.msra.mxu0 %v692
        %2462 = vmatprep.subr.mxu0 %v709
        %2463 = vmatpush1.msra.mxu0 %v708
        %2464 = vmatprep.subr.mxu0 %v725
        %2465 = vmatpush1.msra.mxu0 %v724
        %2466 = vmatprep.subr.mxu0 %v741
        %2467 = vmatpush1.msra.mxu0 %v740
        %2468 = vmatprep.subr.mxu0 %v757
        %2469 = vmatpush1.msra.mxu0 %v756
        %2470 = vmatprep.subr.mxu0 %v773
        %2471 = vmatpush1.msra.mxu0 %v772
        %2472 = vmatprep.subr.mxu0 %v789
        %2473 = vmatpush1.msra.mxu0 %v788
        %2474 = vmatprep.subr.mxu0 %v805
        %2475 = vmatpush1.msra.mxu0 %v804
        %2476 = vmatprep.subr.mxu0 %v821
        %2477 = vmatpush1.msra.mxu0 %v820
        %2478 = vmatprep.subr.mxu0 %v837
        %2479 = vmatpush1.msra.mxu0 %v836
        %2480 = vmatprep.subr.mxu0 %v853
        %2481 = vmatpush1.msra.mxu0 %v852
        %2482 = vmatprep.subr.mxu0 %v869
        %2483 = vmatpush1.msra.mxu0 %v868
        %2484 = vmatprep.mubr.f32.mxu0 %v349
        %2485 = vmatmul.mubr.f32.gmra.mrb[0].mxu0 %v348
        %v2486 = vpop.f32.mrb[0].mxu0
        %v2487 = vadd.f32 0.0, %v2486
        %v2488 = vpop.f32.mrb[0].mxu0
        %v2489 = vadd.f32 0.0, %v2488
        %2490 = vdwg.mxu0
        %2491 = vmatprep.subr.mxu0 %v885
        %2492 = vmatpush1.msra.mxu0 %v884
        %2493 = vmatprep.subr.mxu0 %v901
        %2494 = vmatpush1.msra.mxu0 %v900
        %2495 = vmatprep.subr.mxu0 %v917
        %2496 = vmatpush1.msra.mxu0 %v916
        %2497 = vmatprep.subr.mxu0 %v933
        %2498 = vmatpush1.msra.mxu0 %v932
        %2499 = vmatprep.subr.mxu0 %v949
        %2500 = vmatpush1.msra.mxu0 %v948
        %2501 = vmatprep.subr.mxu0 %v965
        %2502 = vmatpush1.msra.mxu0 %v964
        %2503 = vmatprep.subr.mxu0 %v981
        %2504 = vmatpush1.msra.mxu0 %v980
        %2505 = vmatprep.subr.mxu0 %v997
        %2506 = vmatpush1.msra.mxu0 %v996
        %2507 = vmatprep.subr.mxu0 %v1013
        %2508 = vmatpush1.msra.mxu0 %v1012
        %2509 = vmatprep.subr.mxu0 %v1029
        %2510 = vmatpush1.msra.mxu0 %v1028
        %2511 = vmatprep.subr.mxu0 %v1045
        %2512 = vmatpush1.msra.mxu0 %v1044
        %2513 = vmatprep.subr.mxu0 %v1061
        %2514 = vmatpush1.msra.mxu0 %v1060
        %2515 = vmatprep.subr.mxu0 %v1077
        %2516 = vmatpush1.msra.mxu0 %v1076
        %2517 = vmatprep.subr.mxu0 %v1093
        %2518 = vmatpush1.msra.mxu0 %v1092
        %2519 = vmatprep.subr.mxu0 %v1109
        %2520 = vmatpush1.msra.mxu0 %v1108
        %2521 = vmatprep.subr.mxu0 %v1125
        %2522 = vmatpush1.msra.mxu0 %v1124
        %2523 = vmatprep.subr.mxu0 %v1141
        %2524 = vmatpush1.msra.mxu0 %v1140
        %2525 = vmatprep.subr.mxu0 %v1157
        %2526 = vmatpush1.msra.mxu0 %v1156
        %2527 = vmatprep.subr.mxu0 %v1173
        %2528 = vmatpush1.msra.mxu0 %v1172
        %2529 = vmatprep.subr.mxu0 %v1189
        %2530 = vmatpush1.msra.mxu0 %v1188
        %2531 = vmatprep.subr.mxu0 %v1205
        %2532 = vmatpush1.msra.mxu0 %v1204
        %2533 = vmatprep.subr.mxu0 %v1221
        %2534 = vmatpush1.msra.mxu0 %v1220
        %2535 = vmatprep.subr.mxu0 %v1237
        %2536 = vmatpush1.msra.mxu0 %v1236
        %2537 = vmatprep.subr.mxu0 %v1253
        %2538 = vmatpush1.msra.mxu0 %v1252
        %2539 = vmatprep.subr.mxu0 %v1269
        %2540 = vmatpush1.msra.mxu0 %v1268
        %2541 = vmatprep.subr.mxu0 %v1285
        %2542 = vmatpush1.msra.mxu0 %v1284
        %2543 = vmatprep.subr.mxu0 %v1301
        %2544 = vmatpush1.msra.mxu0 %v1300
        %2545 = vmatprep.subr.mxu0 %v1317
        %2546 = vmatpush1.msra.mxu0 %v1316
        %2547 = vmatprep.subr.mxu0 %v1333
        %2548 = vmatpush1.msra.mxu0 %v1332
        %2549 = vmatprep.subr.mxu0 %v1349
        %2550 = vmatpush1.msra.mxu0 %v1348
        %2551 = vmatprep.subr.mxu0 %v1365
        %2552 = vmatpush1.msra.mxu0 %v1364
        %2553 = vmatprep.subr.mxu0 %v1381
        %2554 = vmatpush1.msra.mxu0 %v1380
        %2555 = vmatprep.mubr.f32.mxu0 %v351
        %2556 = vmatmul.mubr.f32.gmra.mrb[0].mxu0 %v350
        %v2557 = vpop.f32.mrb[0].mxu0
        %v2558 = vadd.f32 %v2487, %v2557
        %v2559 = vpop.f32.mrb[0].mxu0
        %v2560 = vadd.f32 %v2489, %v2559
        %2561 = vdwg.mxu0
        %2562 = vmatprep.subr.mxu0 %v1397
        %2563 = vmatpush1.msra.mxu0 %v1396
        %2564 = vmatprep.subr.mxu0 %v1413
        %2565 = vmatpush1.msra.mxu0 %v1412
        %2566 = vmatprep.subr.mxu0 %v1429
        %2567 = vmatpush1.msra.mxu0 %v1428
        %2568 = vmatprep.subr.mxu0 %v1445
        %2569 = vmatpush1.msra.mxu0 %v1444
        %2570 = vmatprep.subr.mxu0 %v1461
        %2571 = vmatpush1.msra.mxu0 %v1460
        %2572 = vmatprep.subr.mxu0 %v1477
        %2573 = vmatpush1.msra.mxu0 %v1476
        %2574 = vmatprep.subr.mxu0 %v1493
        %2575 = vmatpush1.msra.mxu0 %v1492
        %2576 = vmatprep.subr.mxu0 %v1509
        %2577 = vmatpush1.msra.mxu0 %v1508
        %2578 = vmatprep.subr.mxu0 %v1525
        %2579 = vmatpush1.msra.mxu0 %v1524
        %2580 = vmatprep.subr.mxu0 %v1541
        %2581 = vmatpush1.msra.mxu0 %v1540
        %2582 = vmatprep.subr.mxu0 %v1557
        %2583 = vmatpush1.msra.mxu0 %v1556
        %2584 = vmatprep.subr.mxu0 %v1573
        %2585 = vmatpush1.msra.mxu0 %v1572
        %2586 = vmatprep.subr.mxu0 %v1589
        %2587 = vmatpush1.msra.mxu0 %v1588
        %2588 = vmatprep.subr.mxu0 %v1605
        %2589 = vmatpush1.msra.mxu0 %v1604
        %2590 = vmatprep.subr.mxu0 %v1621
        %2591 = vmatpush1.msra.mxu0 %v1620
        %2592 = vmatprep.subr.mxu0 %v1637
        %2593 = vmatpush1.msra.mxu0 %v1636
        %2594 = vmatprep.subr.mxu0 %v1653
        %2595 = vmatpush1.msra.mxu0 %v1652
        %2596 = vmatprep.subr.mxu0 %v1669
        %2597 = vmatpush1.msra.mxu0 %v1668
        %2598 = vmatprep.subr.mxu0 %v1685
        %2599 = vmatpush1.msra.mxu0 %v1684
        %2600 = vmatprep.subr.mxu0 %v1701
        %2601 = vmatpush1.msra.mxu0 %v1700
        %2602 = vmatprep.subr.mxu0 %v1717
        %2603 = vmatpush1.msra.mxu0 %v1716
        %2604 = vmatprep.subr.mxu0 %v1733
        %2605 = vmatpush1.msra.mxu0 %v1732
        %2606 = vmatprep.subr.mxu0 %v1749
        %2607 = vmatpush1.msra.mxu0 %v1748
        %2608 = vmatprep.subr.mxu0 %v1765
        %2609 = vmatpush1.msra.mxu0 %v1764
        %2610 = vmatprep.subr.mxu0 %v1781
        %2611 = vmatpush1.msra.mxu0 %v1780
        %2612 = vmatprep.subr.mxu0 %v1797
        %2613 = vmatpush1.msra.mxu0 %v1796
        %2614 = vmatprep.subr.mxu0 %v1813
        %2615 = vmatpush1.msra.mxu0 %v1812
        %2616 = vmatprep.subr.mxu0 %v1829
        %2617 = vmatpush1.msra.mxu0 %v1828
        %2618 = vmatprep.subr.mxu0 %v1845
        %2619 = vmatpush1.msra.mxu0 %v1844
        %2620 = vmatprep.subr.mxu0 %v1861
        %2621 = vmatpush1.msra.mxu0 %v1860
        %2622 = vmatprep.subr.mxu0 %v1877
        %2623 = vmatpush1.msra.mxu0 %v1876
        %2624 = vmatprep.subr.mxu0 %v1893
        %2625 = vmatpush1.msra.mxu0 %v1892
        %2626 = vmatprep.mubr.f32.mxu0 %v353
        %2627 = vmatmul.mubr.f32.gmra.mrb[0].mxu0 %v352
        %v2628 = vpop.f32.mrb[0].mxu0
        %v2629 = vadd.f32 %v2558, %v2628
        %v2630 = vpop.f32.mrb[0].mxu0
        %v2631 = vadd.f32 %v2560, %v2630
        %2632 = vdwg.mxu0
        %2633 = vmatprep.subr.mxu0 %v1909
        %2634 = vmatpush1.msra.mxu0 %v1908
        %2635 = vmatprep.subr.mxu0 %v1925
        %2636 = vmatpush1.msra.mxu0 %v1924
        %2637 = vmatprep.subr.mxu0 %v1941
        %2638 = vmatpush1.msra.mxu0 %v1940
        %2639 = vmatprep.subr.mxu0 %v1957
        %2640 = vmatpush1.msra.mxu0 %v1956
        %2641 = vmatprep.subr.mxu0 %v1973
        %2642 = vmatpush1.msra.mxu0 %v1972
        %2643 = vmatprep.subr.mxu0 %v1989
        %2644 = vmatpush1.msra.mxu0 %v1988
        %2645 = vmatprep.subr.mxu0 %v2005
        %2646 = vmatpush1.msra.mxu0 %v2004
        %2647 = vmatprep.subr.mxu0 %v2021
        %2648 = vmatpush1.msra.mxu0 %v2020
        %2649 = vmatprep.subr.mxu0 %v2037
        %2650 = vmatpush1.msra.mxu0 %v2036
        %2651 = vmatprep.subr.mxu0 %v2053
        %2652 = vmatpush1.msra.mxu0 %v2052
        %2653 = vmatprep.subr.mxu0 %v2069
        %2654 = vmatpush1.msra.mxu0 %v2068
        %2655 = vmatprep.subr.mxu0 %v2085
        %2656 = vmatpush1.msra.mxu0 %v2084
        %2657 = vmatprep.subr.mxu0 %v2101
        %2658 = vmatpush1.msra.mxu0 %v2100
        %2659 = vmatprep.subr.mxu0 %v2117
        %2660 = vmatpush1.msra.mxu0 %v2116
        %2661 = vmatprep.subr.mxu0 %v2133
        %2662 = vmatpush1.msra.mxu0 %v2132
        %2663 = vmatprep.subr.mxu0 %v2149
        %2664 = vmatpush1.msra.mxu0 %v2148
        %2665 = vmatprep.subr.mxu0 %v2165
        %2666 = vmatpush1.msra.mxu0 %v2164
        %2667 = vmatprep.subr.mxu0 %v2181
        %2668 = vmatpush1.msra.mxu0 %v2180
        %2669 = vmatprep.subr.mxu0 %v2197
        %2670 = vmatpush1.msra.mxu0 %v2196
        %2671 = vmatprep.subr.mxu0 %v2213
        %2672 = vmatpush1.msra.mxu0 %v2212
        %2673 = vmatprep.subr.mxu0 %v2229
        %2674 = vmatpush1.msra.mxu0 %v2228
        %2675 = vmatprep.subr.mxu0 %v2245
        %2676 = vmatpush1.msra.mxu0 %v2244
        %2677 = vmatprep.subr.mxu0 %v2261
        %2678 = vmatpush1.msra.mxu0 %v2260
        %2679 = vmatprep.subr.mxu0 %v2277
        %2680 = vmatpush1.msra.mxu0 %v2276
        %2681 = vmatprep.subr.mxu0 %v2293
        %2682 = vmatpush1.msra.mxu0 %v2292
        %2683 = vmatprep.subr.mxu0 %v2309
        %2684 = vmatpush1.msra.mxu0 %v2308
        %2685 = vmatprep.subr.mxu0 %v2325
        %2686 = vmatpush1.msra.mxu0 %v2324
        %2687 = vmatprep.subr.mxu0 %v2341
        %2688 = vmatpush1.msra.mxu0 %v2340
        %2689 = vmatprep.subr.mxu0 %v2357
        %2690 = vmatpush1.msra.mxu0 %v2356
        %2691 = vmatprep.subr.mxu0 %v2373
        %2692 = vmatpush1.msra.mxu0 %v2372
        %2693 = vmatprep.subr.mxu0 %v2389
        %2694 = vmatpush1.msra.mxu0 %v2388
        %2695 = vmatprep.subr.mxu0 %v2405
        %2696 = vmatpush1.msra.mxu0 %v2404
        %2697 = vmatprep.mubr.f32.mxu0 %v355
        %2698 = vmatmul.mubr.f32.gmra.mrb[0].mxu0 %v354
        %v2699 = vpop.f32.mrb[0].mxu0
        %v2700 = vadd.f32 %v2629, %v2699
        %v2701 = vpop.f32.mrb[0].mxu0
        %v2702 = vadd.f32 %v2631, %v2701
        %2703 = vdwg.mxu0
        %2704 = vmatprep.subr.mxu0 %v375
        %2705 = vmatpush1.msra.mxu0 %v374
        %2706 = vmatprep.subr.mxu0 %v391
        %2707 = vmatpush1.msra.mxu0 %v390
        %2708 = vmatprep.subr.mxu0 %v407
        %2709 = vmatpush1.msra.mxu0 %v406
        %2710 = vmatprep.subr.mxu0 %v423
        %2711 = vmatpush1.msra.mxu0 %v422
        %2712 = vmatprep.subr.mxu0 %v439
        %2713 = vmatpush1.msra.mxu0 %v438
        %2714 = vmatprep.subr.mxu0 %v455
        %2715 = vmatpush1.msra.mxu0 %v454
        %2716 = vmatprep.subr.mxu0 %v471
        %2717 = vmatpush1.msra.mxu0 %v470
        %2718 = vmatprep.subr.mxu0 %v487
        %2719 = vmatpush1.msra.mxu0 %v486
        %2720 = vmatprep.subr.mxu0 %v503
        %2721 = vmatpush1.msra.mxu0 %v502
        %2722 = vmatprep.subr.mxu0 %v519
        %2723 = vmatpush1.msra.mxu0 %v518
        %2724 = vmatprep.subr.mxu0 %v535
        %2725 = vmatpush1.msra.mxu0 %v534
        %2726 = vmatprep.subr.mxu0 %v551
        %2727 = vmatpush1.msra.mxu0 %v550
        %2728 = vmatprep.subr.mxu0 %v567
        %2729 = vmatpush1.msra.mxu0 %v566
        %2730 = vmatprep.subr.mxu0 %v583
        %2731 = vmatpush1.msra.mxu0 %v582
        %2732 = vmatprep.subr.mxu0 %v599
        %2733 = vmatpush1.msra.mxu0 %v598
        %2734 = vmatprep.subr.mxu0 %v615
        %2735 = vmatpush1.msra.mxu0 %v614
        %2736 = vmatprep.subr.mxu0 %v631
        %2737 = vmatpush1.msra.mxu0 %v630
        %2738 = vmatprep.subr.mxu0 %v647
        %2739 = vmatpush1.msra.mxu0 %v646
        %2740 = vmatprep.subr.mxu0 %v663
        %2741 = vmatpush1.msra.mxu0 %v662
        %2742 = vmatprep.subr.mxu0 %v679
        %2743 = vmatpush1.msra.mxu0 %v678
        %2744 = vmatprep.subr.mxu0 %v695
        %2745 = vmatpush1.msra.mxu0 %v694
        %2746 = vmatprep.subr.mxu0 %v711
        %2747 = vmatpush1.msra.mxu0 %v710
        %2748 = vmatprep.subr.mxu0 %v727
        %2749 = vmatpush1.msra.mxu0 %v726
        %2750 = vmatprep.subr.mxu0 %v743
        %2751 = vmatpush1.msra.mxu0 %v742
        %2752 = vmatprep.subr.mxu0 %v759
        %2753 = vmatpush1.msra.mxu0 %v758
        %2754 = vmatprep.subr.mxu0 %v775
        %2755 = vmatpush1.msra.mxu0 %v774
        %2756 = vmatprep.subr.mxu0 %v791
        %2757 = vmatpush1.msra.mxu0 %v790
        %2758 = vmatprep.subr.mxu0 %v807
        %2759 = vmatpush1.msra.mxu0 %v806
        %2760 = vmatprep.subr.mxu0 %v823
        %2761 = vmatpush1.msra.mxu0 %v822
        %2762 = vmatprep.subr.mxu0 %v839
        %2763 = vmatpush1.msra.mxu0 %v838
        %2764 = vmatprep.subr.mxu0 %v855
        %2765 = vmatpush1.msra.mxu0 %v854
        %2766 = vmatprep.subr.mxu0 %v871
        %2767 = vmatpush1.msra.mxu0 %v870
        %2768 = vmatprep.mubr.f32.mxu0 %v349
        %2769 = vmatmul.mubr.f32.gmra.mrb[0].mxu0 %v348
        %v2770 = vpop.f32.mrb[0].mxu0
        %v2771 = vadd.f32 0.0, %v2770
        %v2772 = vpop.f32.mrb[0].mxu0
        %v2773 = vadd.f32 0.0, %v2772
        %2774 = vdwg.mxu0
        %2775 = vmatprep.subr.mxu0 %v887
        %2776 = vmatpush1.msra.mxu0 %v886
        %2777 = vmatprep.subr.mxu0 %v903
        %2778 = vmatpush1.msra.mxu0 %v902
        %2779 = vmatprep.subr.mxu0 %v919
        %2780 = vmatpush1.msra.mxu0 %v918
        %2781 = vmatprep.subr.mxu0 %v935
        %2782 = vmatpush1.msra.mxu0 %v934
        %2783 = vmatprep.subr.mxu0 %v951
        %2784 = vmatpush1.msra.mxu0 %v950
        %2785 = vmatprep.subr.mxu0 %v967
        %2786 = vmatpush1.msra.mxu0 %v966
        %2787 = vmatprep.subr.mxu0 %v983
        %2788 = vmatpush1.msra.mxu0 %v982
        %2789 = vmatprep.subr.mxu0 %v999
        %2790 = vmatpush1.msra.mxu0 %v998
        %2791 = vmatprep.subr.mxu0 %v1015
        %2792 = vmatpush1.msra.mxu0 %v1014
        %2793 = vmatprep.subr.mxu0 %v1031
        %2794 = vmatpush1.msra.mxu0 %v1030
        %2795 = vmatprep.subr.mxu0 %v1047
        %2796 = vmatpush1.msra.mxu0 %v1046
        %2797 = vmatprep.subr.mxu0 %v1063
        %2798 = vmatpush1.msra.mxu0 %v1062
        %2799 = vmatprep.subr.mxu0 %v1079
        %2800 = vmatpush1.msra.mxu0 %v1078
        %2801 = vmatprep.subr.mxu0 %v1095
        %2802 = vmatpush1.msra.mxu0 %v1094
        %2803 = vmatprep.subr.mxu0 %v1111
        %2804 = vmatpush1.msra.mxu0 %v1110
        %2805 = vmatprep.subr.mxu0 %v1127
        %2806 = vmatpush1.msra.mxu0 %v1126
        %2807 = vmatprep.subr.mxu0 %v1143
        %2808 = vmatpush1.msra.mxu0 %v1142
        %2809 = vmatprep.subr.mxu0 %v1159
        %2810 = vmatpush1.msra.mxu0 %v1158
        %2811 = vmatprep.subr.mxu0 %v1175
        %2812 = vmatpush1.msra.mxu0 %v1174
        %2813 = vmatprep.subr.mxu0 %v1191
        %2814 = vmatpush1.msra.mxu0 %v1190
        %2815 = vmatprep.subr.mxu0 %v1207
        %2816 = vmatpush1.msra.mxu0 %v1206
        %2817 = vmatprep.subr.mxu0 %v1223
        %2818 = vmatpush1.msra.mxu0 %v1222
        %2819 = vmatprep.subr.mxu0 %v1239
        %2820 = vmatpush1.msra.mxu0 %v1238
        %2821 = vmatprep.subr.mxu0 %v1255
        %2822 = vmatpush1.msra.mxu0 %v1254
        %2823 = vmatprep.subr.mxu0 %v1271
        %2824 = vmatpush1.msra.mxu0 %v1270
        %2825 = vmatprep.subr.mxu0 %v1287
        %2826 = vmatpush1.msra.mxu0 %v1286
        %2827 = vmatprep.subr.mxu0 %v1303
        %2828 = vmatpush1.msra.mxu0 %v1302
        %2829 = vmatprep.subr.mxu0 %v1319
        %2830 = vmatpush1.msra.mxu0 %v1318
        %2831 = vmatprep.subr.mxu0 %v1335
        %2832 = vmatpush1.msra.mxu0 %v1334
        %2833 = vmatprep.subr.mxu0 %v1351
        %2834 = vmatpush1.msra.mxu0 %v1350
        %2835 = vmatprep.subr.mxu0 %v1367
        %2836 = vmatpush1.msra.mxu0 %v1366
        %2837 = vmatprep.subr.mxu0 %v1383
        %2838 = vmatpush1.msra.mxu0 %v1382
        %2839 = vmatprep.mubr.f32.mxu0 %v351
        %2840 = vmatmul.mubr.f32.gmra.mrb[0].mxu0 %v350
        %v2841 = vpop.f32.mrb[0].mxu0
        %v2842 = vadd.f32 %v2771, %v2841
        %v2843 = vpop.f32.mrb[0].mxu0
        %v2844 = vadd.f32 %v2773, %v2843
        %2845 = vdwg.mxu0
        %2846 = vmatprep.subr.mxu0 %v1399
        %2847 = vmatpush1.msra.mxu0 %v1398
        %2848 = vmatprep.subr.mxu0 %v1415
        %2849 = vmatpush1.msra.mxu0 %v1414
        %2850 = vmatprep.subr.mxu0 %v1431
        %2851 = vmatpush1.msra.mxu0 %v1430
        %2852 = vmatprep.subr.mxu0 %v1447
        %2853 = vmatpush1.msra.mxu0 %v1446
        %2854 = vmatprep.subr.mxu0 %v1463
        %2855 = vmatpush1.msra.mxu0 %v1462
        %2856 = vmatprep.subr.mxu0 %v1479
        %2857 = vmatpush1.msra.mxu0 %v1478
        %2858 = vmatprep.subr.mxu0 %v1495
        %2859 = vmatpush1.msra.mxu0 %v1494
        %2860 = vmatprep.subr.mxu0 %v1511
        %2861 = vmatpush1.msra.mxu0 %v1510
        %2862 = vmatprep.subr.mxu0 %v1527
        %2863 = vmatpush1.msra.mxu0 %v1526
        %2864 = vmatprep.subr.mxu0 %v1543
        %2865 = vmatpush1.msra.mxu0 %v1542
        %2866 = vmatprep.subr.mxu0 %v1559
        %2867 = vmatpush1.msra.mxu0 %v1558
        %2868 = vmatprep.subr.mxu0 %v1575
        %2869 = vmatpush1.msra.mxu0 %v1574
        %2870 = vmatprep.subr.mxu0 %v1591
        %2871 = vmatpush1.msra.mxu0 %v1590
        %2872 = vmatprep.subr.mxu0 %v1607
        %2873 = vmatpush1.msra.mxu0 %v1606
        %2874 = vmatprep.subr.mxu0 %v1623
        %2875 = vmatpush1.msra.mxu0 %v1622
        %2876 = vmatprep.subr.mxu0 %v1639
        %2877 = vmatpush1.msra.mxu0 %v1638
        %2878 = vmatprep.subr.mxu0 %v1655
        %2879 = vmatpush1.msra.mxu0 %v1654
        %2880 = vmatprep.subr.mxu0 %v1671
        %2881 = vmatpush1.msra.mxu0 %v1670
        %2882 = vmatprep.subr.mxu0 %v1687
        %2883 = vmatpush1.msra.mxu0 %v1686
        %2884 = vmatprep.subr.mxu0 %v1703
        %2885 = vmatpush1.msra.mxu0 %v1702
        %2886 = vmatprep.subr.mxu0 %v1719
        %2887 = vmatpush1.msra.mxu0 %v1718
        %2888 = vmatprep.subr.mxu0 %v1735
        %2889 = vmatpush1.msra.mxu0 %v1734
        %2890 = vmatprep.subr.mxu0 %v1751
        %2891 = vmatpush1.msra.mxu0 %v1750
        %2892 = vmatprep.subr.mxu0 %v1767
        %2893 = vmatpush1.msra.mxu0 %v1766
        %2894 = vmatprep.subr.mxu0 %v1783
        %2895 = vmatpush1.msra.mxu0 %v1782
        %2896 = vmatprep.subr.mxu0 %v1799
        %2897 = vmatpush1.msra.mxu0 %v1798
        %2898 = vmatprep.subr.mxu0 %v1815
        %2899 = vmatpush1.msra.mxu0 %v1814
        %2900 = vmatprep.subr.mxu0 %v1831
        %2901 = vmatpush1.msra.mxu0 %v1830
        %2902 = vmatprep.subr.mxu0 %v1847
        %2903 = vmatpush1.msra.mxu0 %v1846
        %2904 = vmatprep.subr.mxu0 %v1863
        %2905 = vmatpush1.msra.mxu0 %v1862
        %2906 = vmatprep.subr.mxu0 %v1879
        %2907 = vmatpush1.msra.mxu0 %v1878
        %2908 = vmatprep.subr.mxu0 %v1895
        %2909 = vmatpush1.msra.mxu0 %v1894
        %2910 = vmatprep.mubr.f32.mxu0 %v353
        %2911 = vmatmul.mubr.f32.gmra.mrb[0].mxu0 %v352
        %v2912 = vpop.f32.mrb[0].mxu0
        %v2913 = vadd.f32 %v2842, %v2912
        %v2914 = vpop.f32.mrb[0].mxu0
        %v2915 = vadd.f32 %v2844, %v2914
        %2916 = vdwg.mxu0
        %2917 = vmatprep.subr.mxu0 %v1911
        %2918 = vmatpush1.msra.mxu0 %v1910
        %2919 = vmatprep.subr.mxu0 %v1927
        %2920 = vmatpush1.msra.mxu0 %v1926
        %2921 = vmatprep.subr.mxu0 %v1943
        %2922 = vmatpush1.msra.mxu0 %v1942
        %2923 = vmatprep.subr.mxu0 %v1959
        %2924 = vmatpush1.msra.mxu0 %v1958
        %2925 = vmatprep.subr.mxu0 %v1975
        %2926 = vmatpush1.msra.mxu0 %v1974
        %2927 = vmatprep.subr.mxu0 %v1991
        %2928 = vmatpush1.msra.mxu0 %v1990
        %2929 = vmatprep.subr.mxu0 %v2007
        %2930 = vmatpush1.msra.mxu0 %v2006
        %2931 = vmatprep.subr.mxu0 %v2023
        %2932 = vmatpush1.msra.mxu0 %v2022
        %2933 = vmatprep.subr.mxu0 %v2039
        %2934 = vmatpush1.msra.mxu0 %v2038
        %2935 = vmatprep.subr.mxu0 %v2055
        %2936 = vmatpush1.msra.mxu0 %v2054
        %2937 = vmatprep.subr.mxu0 %v2071
        %2938 = vmatpush1.msra.mxu0 %v2070
        %2939 = vmatprep.subr.mxu0 %v2087
        %2940 = vmatpush1.msra.mxu0 %v2086
        %2941 = vmatprep.subr.mxu0 %v2103
        %2942 = vmatpush1.msra.mxu0 %v2102
        %2943 = vmatprep.subr.mxu0 %v2119
        %2944 = vmatpush1.msra.mxu0 %v2118
        %2945 = vmatprep.subr.mxu0 %v2135
        %2946 = vmatpush1.msra.mxu0 %v2134
        %2947 = vmatprep.subr.mxu0 %v2151
        %2948 = vmatpush1.msra.mxu0 %v2150
        %2949 = vmatprep.subr.mxu0 %v2167
        %2950 = vmatpush1.msra.mxu0 %v2166
        %2951 = vmatprep.subr.mxu0 %v2183
        %2952 = vmatpush1.msra.mxu0 %v2182
        %2953 = vmatprep.subr.mxu0 %v2199
        %2954 = vmatpush1.msra.mxu0 %v2198
        %2955 = vmatprep.subr.mxu0 %v2215
        %2956 = vmatpush1.msra.mxu0 %v2214
        %2957 = vmatprep.subr.mxu0 %v2231
        %2958 = vmatpush1.msra.mxu0 %v2230
        %2959 = vmatprep.subr.mxu0 %v2247
        %2960 = vmatpush1.msra.mxu0 %v2246
        %2961 = vmatprep.subr.mxu0 %v2263
        %2962 = vmatpush1.msra.mxu0 %v2262
        %2963 = vmatprep.subr.mxu0 %v2279
        %2964 = vmatpush1.msra.mxu0 %v2278
        %2965 = vmatprep.subr.mxu0 %v2295
        %2966 = vmatpush1.msra.mxu0 %v2294
        %2967 = vmatprep.subr.mxu0 %v2311
        %2968 = vmatpush1.msra.mxu0 %v2310
        %2969 = vmatprep.subr.mxu0 %v2327
        %2970 = vmatpush1.msra.mxu0 %v2326
        %2971 = vmatprep.subr.mxu0 %v2343
        %2972 = vmatpush1.msra.mxu0 %v2342
        %2973 = vmatprep.subr.mxu0 %v2359
        %2974 = vmatpush1.msra.mxu0 %v2358
        %2975 = vmatprep.subr.mxu0 %v2375
        %2976 = vmatpush1.msra.mxu0 %v2374
        %2977 = vmatprep.subr.mxu0 %v2391
        %2978 = vmatpush1.msra.mxu0 %v2390
        %2979 = vmatprep.subr.mxu0 %v2407
        %2980 = vmatpush1.msra.mxu0 %v2406
        %2981 = vmatprep.mubr.f32.mxu0 %v355
        %2982 = vmatmul.mubr.f32.gmra.mrb[0].mxu0 %v354
        %v2983 = vpop.f32.mrb[0].mxu0
        %v2984 = vadd.f32 %v2913, %v2983
        %v2985 = vpop.f32.mrb[0].mxu0
        %v2986 = vadd.f32 %v2915, %v2985
        %2987 = vdwg.mxu0
        %2988 = vmatprep.subr.mxu0 %v377
        %2989 = vmatpush1.msra.mxu0 %v376
        %2990 = vmatprep.subr.mxu0 %v393
        %2991 = vmatpush1.msra.mxu0 %v392
        %2992 = vmatprep.subr.mxu0 %v409
        %2993 = vmatpush1.msra.mxu0 %v408
        %2994 = vmatprep.subr.mxu0 %v425
        %2995 = vmatpush1.msra.mxu0 %v424
        %2996 = vmatprep.subr.mxu0 %v441
        %2997 = vmatpush1.msra.mxu0 %v440
        %2998 = vmatprep.subr.mxu0 %v457
        %2999 = vmatpush1.msra.mxu0 %v456
        %3000 = vmatprep.subr.mxu0 %v473
        %3001 = vmatpush1.msra.mxu0 %v472
        %3002 = vmatprep.subr.mxu0 %v489
        %3003 = vmatpush1.msra.mxu0 %v488
        %3004 = vmatprep.subr.mxu0 %v505
        %3005 = vmatpush1.msra.mxu0 %v504
        %3006 = vmatprep.subr.mxu0 %v521
        %3007 = vmatpush1.msra.mxu0 %v520
        %3008 = vmatprep.subr.mxu0 %v537
        %3009 = vmatpush1.msra.mxu0 %v536
        %3010 = vmatprep.subr.mxu0 %v553
        %3011 = vmatpush1.msra.mxu0 %v552
        %3012 = vmatprep.subr.mxu0 %v569
        %3013 = vmatpush1.msra.mxu0 %v568
        %3014 = vmatprep.subr.mxu0 %v585
        %3015 = vmatpush1.msra.mxu0 %v584
        %3016 = vmatprep.subr.mxu0 %v601
        %3017 = vmatpush1.msra.mxu0 %v600
        %3018 = vmatprep.subr.mxu0 %v617
        %3019 = vmatpush1.msra.mxu0 %v616
        %3020 = vmatprep.subr.mxu0 %v633
        %3021 = vmatpush1.msra.mxu0 %v632
        %3022 = vmatprep.subr.mxu0 %v649
        %3023 = vmatpush1.msra.mxu0 %v648
        %3024 = vmatprep.subr.mxu0 %v665
        %3025 = vmatpush1.msra.mxu0 %v664
        %3026 = vmatprep.subr.mxu0 %v681
        %3027 = vmatpush1.msra.mxu0 %v680
        %3028 = vmatprep.subr.mxu0 %v697
        %3029 = vmatpush1.msra.mxu0 %v696
        %3030 = vmatprep.subr.mxu0 %v713
        %3031 = vmatpush1.msra.mxu0 %v712
        %3032 = vmatprep.subr.mxu0 %v729
        %3033 = vmatpush1.msra.mxu0 %v728
        %3034 = vmatprep.subr.mxu0 %v745
        %3035 = vmatpush1.msra.mxu0 %v744
        %3036 = vmatprep.subr.mxu0 %v761
        %3037 = vmatpush1.msra.mxu0 %v760
        %3038 = vmatprep.subr.mxu0 %v777
        %3039 = vmatpush1.msra.mxu0 %v776
        %3040 = vmatprep.subr.mxu0 %v793
        %3041 = vmatpush1.msra.mxu0 %v792
        %3042 = vmatprep.subr.mxu0 %v809
        %3043 = vmatpush1.msra.mxu0 %v808
        %3044 = vmatprep.subr.mxu0 %v825
        %3045 = vmatpush1.msra.mxu0 %v824
        %3046 = vmatprep.subr.mxu0 %v841
        %3047 = vmatpush1.msra.mxu0 %v840
        %3048 = vmatprep.subr.mxu0 %v857
        %3049 = vmatpush1.msra.mxu0 %v856
        %3050 = vmatprep.subr.mxu0 %v873
        %3051 = vmatpush1.msra.mxu0 %v872
        %3052 = vmatprep.mubr.f32.mxu0 %v349
        %3053 = vmatmul.mubr.f32.gmra.mrb[0].mxu0 %v348
        %v3054 = vpop.f32.mrb[0].mxu0
        %v3055 = vadd.f32 0.0, %v3054
        %v3056 = vpop.f32.mrb[0].mxu0
        %v3057 = vadd.f32 0.0, %v3056
        %3058 = vdwg.mxu0
        %3059 = vmatprep.subr.mxu0 %v889
        %3060 = vmatpush1.msra.mxu0 %v888
        %3061 = vmatprep.subr.mxu0 %v905
        %3062 = vmatpush1.msra.mxu0 %v904
        %3063 = vmatprep.subr.mxu0 %v921
        %3064 = vmatpush1.msra.mxu0 %v920
        %3065 = vmatprep.subr.mxu0 %v937
        %3066 = vmatpush1.msra.mxu0 %v936
        %3067 = vmatprep.subr.mxu0 %v953
        %3068 = vmatpush1.msra.mxu0 %v952
        %3069 = vmatprep.subr.mxu0 %v969
        %3070 = vmatpush1.msra.mxu0 %v968
        %3071 = vmatprep.subr.mxu0 %v985
        %3072 = vmatpush1.msra.mxu0 %v984
        %3073 = vmatprep.subr.mxu0 %v1001
        %3074 = vmatpush1.msra.mxu0 %v1000
        %3075 = vmatprep.subr.mxu0 %v1017
        %3076 = vmatpush1.msra.mxu0 %v1016
        %3077 = vmatprep.subr.mxu0 %v1033
        %3078 = vmatpush1.msra.mxu0 %v1032
        %3079 = vmatprep.subr.mxu0 %v1049
        %3080 = vmatpush1.msra.mxu0 %v1048
        %3081 = vmatprep.subr.mxu0 %v1065
        %3082 = vmatpush1.msra.mxu0 %v1064
        %3083 = vmatprep.subr.mxu0 %v1081
        %3084 = vmatpush1.msra.mxu0 %v1080
        %3085 = vmatprep.subr.mxu0 %v1097
        %3086 = vmatpush1.msra.mxu0 %v1096
        %3087 = vmatprep.subr.mxu0 %v1113
        %3088 = vmatpush1.msra.mxu0 %v1112
        %3089 = vmatprep.subr.mxu0 %v1129
        %3090 = vmatpush1.msra.mxu0 %v1128
        %3091 = vmatprep.subr.mxu0 %v1145
        %3092 = vmatpush1.msra.mxu0 %v1144
        %3093 = vmatprep.subr.mxu0 %v1161
        %3094 = vmatpush1.msra.mxu0 %v1160
        %3095 = vmatprep.subr.mxu0 %v1177
        %3096 = vmatpush1.msra.mxu0 %v1176
        %3097 = vmatprep.subr.mxu0 %v1193
        %3098 = vmatpush1.msra.mxu0 %v1192
        %3099 = vmatprep.subr.mxu0 %v1209
        %3100 = vmatpush1.msra.mxu0 %v1208
        %3101 = vmatprep.subr.mxu0 %v1225
        %3102 = vmatpush1.msra.mxu0 %v1224
        %3103 = vmatprep.subr.mxu0 %v1241
        %3104 = vmatpush1.msra.mxu0 %v1240
        %3105 = vmatprep.subr.mxu0 %v1257
        %3106 = vmatpush1.msra.mxu0 %v1256
        %3107 = vmatprep.subr.mxu0 %v1273
        %3108 = vmatpush1.msra.mxu0 %v1272
        %3109 = vmatprep.subr.mxu0 %v1289
        %3110 = vmatpush1.msra.mxu0 %v1288
        %3111 = vmatprep.subr.mxu0 %v1305
        %3112 = vmatpush1.msra.mxu0 %v1304
        %3113 = vmatprep.subr.mxu0 %v1321
        %3114 = vmatpush1.msra.mxu0 %v1320
        %3115 = vmatprep.subr.mxu0 %v1337
        %3116 = vmatpush1.msra.mxu0 %v1336
        %3117 = vmatprep.subr.mxu0 %v1353
        %3118 = vmatpush1.msra.mxu0 %v1352
        %3119 = vmatprep.subr.mxu0 %v1369
        %3120 = vmatpush1.msra.mxu0 %v1368
        %3121 = vmatprep.subr.mxu0 %v1385
        %3122 = vmatpush1.msra.mxu0 %v1384
        %3123 = vmatprep.mubr.f32.mxu0 %v351
        %3124 = vmatmul.mubr.f32.gmra.mrb[0].mxu0 %v350
        %v3125 = vpop.f32.mrb[0].mxu0
        %v3126 = vadd.f32 %v3055, %v3125
        %v3127 = vpop.f32.mrb[0].mxu0
        %v3128 = vadd.f32 %v3057, %v3127
        %3129 = vdwg.mxu0
        %3130 = vmatprep.subr.mxu0 %v1401
        %3131 = vmatpush1.msra.mxu0 %v1400
        %3132 = vmatprep.subr.mxu0 %v1417
        %3133 = vmatpush1.msra.mxu0 %v1416
        %3134 = vmatprep.subr.mxu0 %v1433
        %3135 = vmatpush1.msra.mxu0 %v1432
        %3136 = vmatprep.subr.mxu0 %v1449
        %3137 = vmatpush1.msra.mxu0 %v1448
        %3138 = vmatprep.subr.mxu0 %v1465
        %3139 = vmatpush1.msra.mxu0 %v1464
        %3140 = vmatprep.subr.mxu0 %v1481
        %3141 = vmatpush1.msra.mxu0 %v1480
        %3142 = vmatprep.subr.mxu0 %v1497
        %3143 = vmatpush1.msra.mxu0 %v1496
        %3144 = vmatprep.subr.mxu0 %v1513
        %3145 = vmatpush1.msra.mxu0 %v1512
        %3146 = vmatprep.subr.mxu0 %v1529
        %3147 = vmatpush1.msra.mxu0 %v1528
        %3148 = vmatprep.subr.mxu0 %v1545
        %3149 = vmatpush1.msra.mxu0 %v1544
        %3150 = vmatprep.subr.mxu0 %v1561
        %3151 = vmatpush1.msra.mxu0 %v1560
        %3152 = vmatprep.subr.mxu0 %v1577
        %3153 = vmatpush1.msra.mxu0 %v1576
        %3154 = vmatprep.subr.mxu0 %v1593
        %3155 = vmatpush1.msra.mxu0 %v1592
        %3156 = vmatprep.subr.mxu0 %v1609
        %3157 = vmatpush1.msra.mxu0 %v1608
        %3158 = vmatprep.subr.mxu0 %v1625
        %3159 = vmatpush1.msra.mxu0 %v1624
        %3160 = vmatprep.subr.mxu0 %v1641
        %3161 = vmatpush1.msra.mxu0 %v1640
        %3162 = vmatprep.subr.mxu0 %v1657
        %3163 = vmatpush1.msra.mxu0 %v1656
        %3164 = vmatprep.subr.mxu0 %v1673
        %3165 = vmatpush1.msra.mxu0 %v1672
        %3166 = vmatprep.subr.mxu0 %v1689
        %3167 = vmatpush1.msra.mxu0 %v1688
        %3168 = vmatprep.subr.mxu0 %v1705
        %3169 = vmatpush1.msra.mxu0 %v1704
        %3170 = vmatprep.subr.mxu0 %v1721
        %3171 = vmatpush1.msra.mxu0 %v1720
        %3172 = vmatprep.subr.mxu0 %v1737
        %3173 = vmatpush1.msra.mxu0 %v1736
        %3174 = vmatprep.subr.mxu0 %v1753
        %3175 = vmatpush1.msra.mxu0 %v1752
        %3176 = vmatprep.subr.mxu0 %v1769
        %3177 = vmatpush1.msra.mxu0 %v1768
        %3178 = vmatprep.subr.mxu0 %v1785
        %3179 = vmatpush1.msra.mxu0 %v1784
        %3180 = vmatprep.subr.mxu0 %v1801
        %3181 = vmatpush1.msra.mxu0 %v1800
        %3182 = vmatprep.subr.mxu0 %v1817
        %3183 = vmatpush1.msra.mxu0 %v1816
        %3184 = vmatprep.subr.mxu0 %v1833
        %3185 = vmatpush1.msra.mxu0 %v1832
        %3186 = vmatprep.subr.mxu0 %v1849
        %3187 = vmatpush1.msra.mxu0 %v1848
        %3188 = vmatprep.subr.mxu0 %v1865
        %3189 = vmatpush1.msra.mxu0 %v1864
        %3190 = vmatprep.subr.mxu0 %v1881
        %3191 = vmatpush1.msra.mxu0 %v1880
        %3192 = vmatprep.subr.mxu0 %v1897
        %3193 = vmatpush1.msra.mxu0 %v1896
        %3194 = vmatprep.mubr.f32.mxu0 %v353
        %3195 = vmatmul.mubr.f32.gmra.mrb[0].mxu0 %v352
        %v3196 = vpop.f32.mrb[0].mxu0
        %v3197 = vadd.f32 %v3126, %v3196
        %v3198 = vpop.f32.mrb[0].mxu0
        %v3199 = vadd.f32 %v3128, %v3198
        %3200 = vdwg.mxu0
        %3201 = vmatprep.subr.mxu0 %v1913
        %3202 = vmatpush1.msra.mxu0 %v1912
        %3203 = vmatprep.subr.mxu0 %v1929
        %3204 = vmatpush1.msra.mxu0 %v1928
        %3205 = vmatprep.subr.mxu0 %v1945
        %3206 = vmatpush1.msra.mxu0 %v1944
        %3207 = vmatprep.subr.mxu0 %v1961
        %3208 = vmatpush1.msra.mxu0 %v1960
        %3209 = vmatprep.subr.mxu0 %v1977
        %3210 = vmatpush1.msra.mxu0 %v1976
        %3211 = vmatprep.subr.mxu0 %v1993
        %3212 = vmatpush1.msra.mxu0 %v1992
        %3213 = vmatprep.subr.mxu0 %v2009
        %3214 = vmatpush1.msra.mxu0 %v2008
        %3215 = vmatprep.subr.mxu0 %v2025
        %3216 = vmatpush1.msra.mxu0 %v2024
        %3217 = vmatprep.subr.mxu0 %v2041
        %3218 = vmatpush1.msra.mxu0 %v2040
        %3219 = vmatprep.subr.mxu0 %v2057
        %3220 = vmatpush1.msra.mxu0 %v2056
        %3221 = vmatprep.subr.mxu0 %v2073
        %3222 = vmatpush1.msra.mxu0 %v2072
        %3223 = vmatprep.subr.mxu0 %v2089
        %3224 = vmatpush1.msra.mxu0 %v2088
        %3225 = vmatprep.subr.mxu0 %v2105
        %3226 = vmatpush1.msra.mxu0 %v2104
        %3227 = vmatprep.subr.mxu0 %v2121
        %3228 = vmatpush1.msra.mxu0 %v2120
        %3229 = vmatprep.subr.mxu0 %v2137
        %3230 = vmatpush1.msra.mxu0 %v2136
        %3231 = vmatprep.subr.mxu0 %v2153
        %3232 = vmatpush1.msra.mxu0 %v2152
        %3233 = vmatprep.subr.mxu0 %v2169
        %3234 = vmatpush1.msra.mxu0 %v2168
        %3235 = vmatprep.subr.mxu0 %v2185
        %3236 = vmatpush1.msra.mxu0 %v2184
        %3237 = vmatprep.subr.mxu0 %v2201
        %3238 = vmatpush1.msra.mxu0 %v2200
        %3239 = vmatprep.subr.mxu0 %v2217
        %3240 = vmatpush1.msra.mxu0 %v2216
        %3241 = vmatprep.subr.mxu0 %v2233
        %3242 = vmatpush1.msra.mxu0 %v2232
        %3243 = vmatprep.subr.mxu0 %v2249
        %3244 = vmatpush1.msra.mxu0 %v2248
        %3245 = vmatprep.subr.mxu0 %v2265
        %3246 = vmatpush1.msra.mxu0 %v2264
        %3247 = vmatprep.subr.mxu0 %v2281
        %3248 = vmatpush1.msra.mxu0 %v2280
        %3249 = vmatprep.subr.mxu0 %v2297
        %3250 = vmatpush1.msra.mxu0 %v2296
        %3251 = vmatprep.subr.mxu0 %v2313
        %3252 = vmatpush1.msra.mxu0 %v2312
        %3253 = vmatprep.subr.mxu0 %v2329
        %3254 = vmatpush1.msra.mxu0 %v2328
        %3255 = vmatprep.subr.mxu0 %v2345
        %3256 = vmatpush1.msra.mxu0 %v2344
        %3257 = vmatprep.subr.mxu0 %v2361
        %3258 = vmatpush1.msra.mxu0 %v2360
        %3259 = vmatprep.subr.mxu0 %v2377
        %3260 = vmatpush1.msra.mxu0 %v2376
        %3261 = vmatprep.subr.mxu0 %v2393
        %3262 = vmatpush1.msra.mxu0 %v2392
        %3263 = vmatprep.subr.mxu0 %v2409
        %3264 = vmatpush1.msra.mxu0 %v2408
        %3265 = vmatprep.mubr.f32.mxu0 %v355
        %3266 = vmatmul.mubr.f32.gmra.mrb[0].mxu0 %v354
        %v3267 = vpop.f32.mrb[0].mxu0
        %v3268 = vadd.f32 %v3197, %v3267
        %v3269 = vpop.f32.mrb[0].mxu0
        %v3270 = vadd.f32 %v3199, %v3269
        %3271 = vdwg.mxu0
        %3272 = vmatprep.subr.mxu0 %v379
        %3273 = vmatpush1.msra.mxu0 %v378
        %3274 = vmatprep.subr.mxu0 %v395
        %3275 = vmatpush1.msra.mxu0 %v394
        %3276 = vmatprep.subr.mxu0 %v411
        %3277 = vmatpush1.msra.mxu0 %v410
        %3278 = vmatprep.subr.mxu0 %v427
        %3279 = vmatpush1.msra.mxu0 %v426
        %3280 = vmatprep.subr.mxu0 %v443
        %3281 = vmatpush1.msra.mxu0 %v442
        %3282 = vmatprep.subr.mxu0 %v459
        %3283 = vmatpush1.msra.mxu0 %v458
        %3284 = vmatprep.subr.mxu0 %v475
        %3285 = vmatpush1.msra.mxu0 %v474
        %3286 = vmatprep.subr.mxu0 %v491
        %3287 = vmatpush1.msra.mxu0 %v490
        %3288 = vmatprep.subr.mxu0 %v507
        %3289 = vmatpush1.msra.mxu0 %v506
        %3290 = vmatprep.subr.mxu0 %v523
        %3291 = vmatpush1.msra.mxu0 %v522
        %3292 = vmatprep.subr.mxu0 %v539
        %3293 = vmatpush1.msra.mxu0 %v538
        %3294 = vmatprep.subr.mxu0 %v555
        %3295 = vmatpush1.msra.mxu0 %v554
        %3296 = vmatprep.subr.mxu0 %v571
        %3297 = vmatpush1.msra.mxu0 %v570
        %3298 = vmatprep.subr.mxu0 %v587
        %3299 = vmatpush1.msra.mxu0 %v586
        %3300 = vmatprep.subr.mxu0 %v603
        %3301 = vmatpush1.msra.mxu0 %v602
        %3302 = vmatprep.subr.mxu0 %v619
        %3303 = vmatpush1.msra.mxu0 %v618
        %3304 = vmatprep.subr.mxu0 %v635
        %3305 = vmatpush1.msra.mxu0 %v634
        %3306 = vmatprep.subr.mxu0 %v651
        %3307 = vmatpush1.msra.mxu0 %v650
        %3308 = vmatprep.subr.mxu0 %v667
        %3309 = vmatpush1.msra.mxu0 %v666
        %3310 = vmatprep.subr.mxu0 %v683
        %3311 = vmatpush1.msra.mxu0 %v682
        %3312 = vmatprep.subr.mxu0 %v699
        %3313 = vmatpush1.msra.mxu0 %v698
        %3314 = vmatprep.subr.mxu0 %v715
        %3315 = vmatpush1.msra.mxu0 %v714
        %3316 = vmatprep.subr.mxu0 %v731
        %3317 = vmatpush1.msra.mxu0 %v730
        %3318 = vmatprep.subr.mxu0 %v747
        %3319 = vmatpush1.msra.mxu0 %v746
        %3320 = vmatprep.subr.mxu0 %v763
        %3321 = vmatpush1.msra.mxu0 %v762
        %3322 = vmatprep.subr.mxu0 %v779
        %3323 = vmatpush1.msra.mxu0 %v778
        %3324 = vmatprep.subr.mxu0 %v795
        %3325 = vmatpush1.msra.mxu0 %v794
        %3326 = vmatprep.subr.mxu0 %v811
        %3327 = vmatpush1.msra.mxu0 %v810
        %3328 = vmatprep.subr.mxu0 %v827
        %3329 = vmatpush1.msra.mxu0 %v826
        %3330 = vmatprep.subr.mxu0 %v843
        %3331 = vmatpush1.msra.mxu0 %v842
        %3332 = vmatprep.subr.mxu0 %v859
        %3333 = vmatpush1.msra.mxu0 %v858
        %3334 = vmatprep.subr.mxu0 %v875
        %3335 = vmatpush1.msra.mxu0 %v874
        %3336 = vmatprep.mubr.f32.mxu0 %v349
        %3337 = vmatmul.mubr.f32.gmra.mrb[0].mxu0 %v348
        %v3338 = vpop.f32.mrb[0].mxu0
        %v3339 = vadd.f32 0.0, %v3338
        %v3340 = vpop.f32.mrb[0].mxu0
        %v3341 = vadd.f32 0.0, %v3340
        %3342 = vdwg.mxu0
        %3343 = vmatprep.subr.mxu0 %v891
        %3344 = vmatpush1.msra.mxu0 %v890
        %3345 = vmatprep.subr.mxu0 %v907
        %3346 = vmatpush1.msra.mxu0 %v906
        %3347 = vmatprep.subr.mxu0 %v923
        %3348 = vmatpush1.msra.mxu0 %v922
        %3349 = vmatprep.subr.mxu0 %v939
        %3350 = vmatpush1.msra.mxu0 %v938
        %3351 = vmatprep.subr.mxu0 %v955
        %3352 = vmatpush1.msra.mxu0 %v954
        %3353 = vmatprep.subr.mxu0 %v971
        %3354 = vmatpush1.msra.mxu0 %v970
        %3355 = vmatprep.subr.mxu0 %v987
        %3356 = vmatpush1.msra.mxu0 %v986
        %3357 = vmatprep.subr.mxu0 %v1003
        %3358 = vmatpush1.msra.mxu0 %v1002
        %3359 = vmatprep.subr.mxu0 %v1019
        %3360 = vmatpush1.msra.mxu0 %v1018
        %3361 = vmatprep.subr.mxu0 %v1035
        %3362 = vmatpush1.msra.mxu0 %v1034
        %3363 = vmatprep.subr.mxu0 %v1051
        %3364 = vmatpush1.msra.mxu0 %v1050
        %3365 = vmatprep.subr.mxu0 %v1067
        %3366 = vmatpush1.msra.mxu0 %v1066
        %3367 = vmatprep.subr.mxu0 %v1083
        %3368 = vmatpush1.msra.mxu0 %v1082
        %3369 = vmatprep.subr.mxu0 %v1099
        %3370 = vmatpush1.msra.mxu0 %v1098
        %3371 = vmatprep.subr.mxu0 %v1115
        %3372 = vmatpush1.msra.mxu0 %v1114
        %3373 = vmatprep.subr.mxu0 %v1131
        %3374 = vmatpush1.msra.mxu0 %v1130
        %3375 = vmatprep.subr.mxu0 %v1147
        %3376 = vmatpush1.msra.mxu0 %v1146
        %3377 = vmatprep.subr.mxu0 %v1163
        %3378 = vmatpush1.msra.mxu0 %v1162
        %3379 = vmatprep.subr.mxu0 %v1179
        %3380 = vmatpush1.msra.mxu0 %v1178
        %3381 = vmatprep.subr.mxu0 %v1195
        %3382 = vmatpush1.msra.mxu0 %v1194
        %3383 = vmatprep.subr.mxu0 %v1211
        %3384 = vmatpush1.msra.mxu0 %v1210
        %3385 = vmatprep.subr.mxu0 %v1227
        %3386 = vmatpush1.msra.mxu0 %v1226
        %3387 = vmatprep.subr.mxu0 %v1243
        %3388 = vmatpush1.msra.mxu0 %v1242
        %3389 = vmatprep.subr.mxu0 %v1259
        %3390 = vmatpush1.msra.mxu0 %v1258
        %3391 = vmatprep.subr.mxu0 %v1275
        %3392 = vmatpush1.msra.mxu0 %v1274
        %3393 = vmatprep.subr.mxu0 %v1291
        %3394 = vmatpush1.msra.mxu0 %v1290
        %3395 = vmatprep.subr.mxu0 %v1307
        %3396 = vmatpush1.msra.mxu0 %v1306
        %3397 = vmatprep.subr.mxu0 %v1323
        %3398 = vmatpush1.msra.mxu0 %v1322
        %3399 = vmatprep.subr.mxu0 %v1339
        %3400 = vmatpush1.msra.mxu0 %v1338
        %3401 = vmatprep.subr.mxu0 %v1355
        %3402 = vmatpush1.msra.mxu0 %v1354
        %3403 = vmatprep.subr.mxu0 %v1371
        %3404 = vmatpush1.msra.mxu0 %v1370
        %3405 = vmatprep.subr.mxu0 %v1387
        %3406 = vmatpush1.msra.mxu0 %v1386
        %3407 = vmatprep.mubr.f32.mxu0 %v351
        %3408 = vmatmul.mubr.f32.gmra.mrb[0].mxu0 %v350
        %v3409 = vpop.f32.mrb[0].mxu0
        %v3410 = vadd.f32 %v3339, %v3409
        %v3411 = vpop.f32.mrb[0].mxu0
        %v3412 = vadd.f32 %v3341, %v3411
        %3413 = vdwg.mxu0
        %3414 = vmatprep.subr.mxu0 %v1403
        %3415 = vmatpush1.msra.mxu0 %v1402
        %3416 = vmatprep.subr.mxu0 %v1419
        %3417 = vmatpush1.msra.mxu0 %v1418
        %3418 = vmatprep.subr.mxu0 %v1435
        %3419 = vmatpush1.msra.mxu0 %v1434
        %3420 = vmatprep.subr.mxu0 %v1451
        %3421 = vmatpush1.msra.mxu0 %v1450
        %3422 = vmatprep.subr.mxu0 %v1467
        %3423 = vmatpush1.msra.mxu0 %v1466
        %3424 = vmatprep.subr.mxu0 %v1483
        %3425 = vmatpush1.msra.mxu0 %v1482
        %3426 = vmatprep.subr.mxu0 %v1499
        %3427 = vmatpush1.msra.mxu0 %v1498
        %3428 = vmatprep.subr.mxu0 %v1515
        %3429 = vmatpush1.msra.mxu0 %v1514
        %3430 = vmatprep.subr.mxu0 %v1531
        %3431 = vmatpush1.msra.mxu0 %v1530
        %3432 = vmatprep.subr.mxu0 %v1547
        %3433 = vmatpush1.msra.mxu0 %v1546
        %3434 = vmatprep.subr.mxu0 %v1563
        %3435 = vmatpush1.msra.mxu0 %v1562
        %3436 = vmatprep.subr.mxu0 %v1579
        %3437 = vmatpush1.msra.mxu0 %v1578
        %3438 = vmatprep.subr.mxu0 %v1595
        %3439 = vmatpush1.msra.mxu0 %v1594
        %3440 = vmatprep.subr.mxu0 %v1611
        %3441 = vmatpush1.msra.mxu0 %v1610
        %3442 = vmatprep.subr.mxu0 %v1627
        %3443 = vmatpush1.msra.mxu0 %v1626
        %3444 = vmatprep.subr.mxu0 %v1643
        %3445 = vmatpush1.msra.mxu0 %v1642
        %3446 = vmatprep.subr.mxu0 %v1659
        %3447 = vmatpush1.msra.mxu0 %v1658
        %3448 = vmatprep.subr.mxu0 %v1675
        %3449 = vmatpush1.msra.mxu0 %v1674
        %3450 = vmatprep.subr.mxu0 %v1691
        %3451 = vmatpush1.msra.mxu0 %v1690
        %3452 = vmatprep.subr.mxu0 %v1707
        %3453 = vmatpush1.msra.mxu0 %v1706
        %3454 = vmatprep.subr.mxu0 %v1723
        %3455 = vmatpush1.msra.mxu0 %v1722
        %3456 = vmatprep.subr.mxu0 %v1739
        %3457 = vmatpush1.msra.mxu0 %v1738
        %3458 = vmatprep.subr.mxu0 %v1755
        %3459 = vmatpush1.msra.mxu0 %v1754
        %3460 = vmatprep.subr.mxu0 %v1771
        %3461 = vmatpush1.msra.mxu0 %v1770
        %3462 = vmatprep.subr.mxu0 %v1787
        %3463 = vmatpush1.msra.mxu0 %v1786
        %3464 = vmatprep.subr.mxu0 %v1803
        %3465 = vmatpush1.msra.mxu0 %v1802
        %3466 = vmatprep.subr.mxu0 %v1819
        %3467 = vmatpush1.msra.mxu0 %v1818
        %3468 = vmatprep.subr.mxu0 %v1835
        %3469 = vmatpush1.msra.mxu0 %v1834
        %3470 = vmatprep.subr.mxu0 %v1851
        %3471 = vmatpush1.msra.mxu0 %v1850
        %3472 = vmatprep.subr.mxu0 %v1867
        %3473 = vmatpush1.msra.mxu0 %v1866
        %3474 = vmatprep.subr.mxu0 %v1883
        %3475 = vmatpush1.msra.mxu0 %v1882
        %3476 = vmatprep.subr.mxu0 %v1899
        %3477 = vmatpush1.msra.mxu0 %v1898
        %3478 = vmatprep.mubr.f32.mxu0 %v353
        %3479 = vmatmul.mubr.f32.gmra.mrb[0].mxu0 %v352
        %v3480 = vpop.f32.mrb[0].mxu0
        %v3481 = vadd.f32 %v3410, %v3480
        %v3482 = vpop.f32.mrb[0].mxu0
        %v3483 = vadd.f32 %v3412, %v3482
        %3484 = vdwg.mxu0
        %3485 = vmatprep.subr.mxu0 %v1915
        %3486 = vmatpush1.msra.mxu0 %v1914
        %3487 = vmatprep.subr.mxu0 %v1931
        %3488 = vmatpush1.msra.mxu0 %v1930
        %3489 = vmatprep.subr.mxu0 %v1947
        %3490 = vmatpush1.msra.mxu0 %v1946
        %3491 = vmatprep.subr.mxu0 %v1963
        %3492 = vmatpush1.msra.mxu0 %v1962
        %3493 = vmatprep.subr.mxu0 %v1979
        %3494 = vmatpush1.msra.mxu0 %v1978
        %3495 = vmatprep.subr.mxu0 %v1995
        %3496 = vmatpush1.msra.mxu0 %v1994
        %3497 = vmatprep.subr.mxu0 %v2011
        %3498 = vmatpush1.msra.mxu0 %v2010
        %3499 = vmatprep.subr.mxu0 %v2027
        %3500 = vmatpush1.msra.mxu0 %v2026
        %3501 = vmatprep.subr.mxu0 %v2043
        %3502 = vmatpush1.msra.mxu0 %v2042
        %3503 = vmatprep.subr.mxu0 %v2059
        %3504 = vmatpush1.msra.mxu0 %v2058
        %3505 = vmatprep.subr.mxu0 %v2075
        %3506 = vmatpush1.msra.mxu0 %v2074
        %3507 = vmatprep.subr.mxu0 %v2091
        %3508 = vmatpush1.msra.mxu0 %v2090
        %3509 = vmatprep.subr.mxu0 %v2107
        %3510 = vmatpush1.msra.mxu0 %v2106
        %3511 = vmatprep.subr.mxu0 %v2123
        %3512 = vmatpush1.msra.mxu0 %v2122
        %3513 = vmatprep.subr.mxu0 %v2139
        %3514 = vmatpush1.msra.mxu0 %v2138
        %3515 = vmatprep.subr.mxu0 %v2155
        %3516 = vmatpush1.msra.mxu0 %v2154
        %3517 = vmatprep.subr.mxu0 %v2171
        %3518 = vmatpush1.msra.mxu0 %v2170
        %3519 = vmatprep.subr.mxu0 %v2187
        %3520 = vmatpush1.msra.mxu0 %v2186
        %3521 = vmatprep.subr.mxu0 %v2203
        %3522 = vmatpush1.msra.mxu0 %v2202
        %3523 = vmatprep.subr.mxu0 %v2219
        %3524 = vmatpush1.msra.mxu0 %v2218
        %3525 = vmatprep.subr.mxu0 %v2235
        %3526 = vmatpush1.msra.mxu0 %v2234
        %3527 = vmatprep.subr.mxu0 %v2251
        %3528 = vmatpush1.msra.mxu0 %v2250
        %3529 = vmatprep.subr.mxu0 %v2267
        %3530 = vmatpush1.msra.mxu0 %v2266
        %3531 = vmatprep.subr.mxu0 %v2283
        %3532 = vmatpush1.msra.mxu0 %v2282
        %3533 = vmatprep.subr.mxu0 %v2299
        %3534 = vmatpush1.msra.mxu0 %v2298
        %3535 = vmatprep.subr.mxu0 %v2315
        %3536 = vmatpush1.msra.mxu0 %v2314
        %3537 = vmatprep.subr.mxu0 %v2331
        %3538 = vmatpush1.msra.mxu0 %v2330
        %3539 = vmatprep.subr.mxu0 %v2347
        %3540 = vmatpush1.msra.mxu0 %v2346
        %3541 = vmatprep.subr.mxu0 %v2363
        %3542 = vmatpush1.msra.mxu0 %v2362
        %3543 = vmatprep.subr.mxu0 %v2379
        %3544 = vmatpush1.msra.mxu0 %v2378
        %3545 = vmatprep.subr.mxu0 %v2395
        %3546 = vmatpush1.msra.mxu0 %v2394
        %3547 = vmatprep.subr.mxu0 %v2411
        %3548 = vmatpush1.msra.mxu0 %v2410
        %3549 = vmatprep.mubr.f32.mxu0 %v355
        %3550 = vmatmul.mubr.f32.gmra.mrb[0].mxu0 %v354
        %v3551 = vpop.f32.mrb[0].mxu0
        %v3552 = vadd.f32 %v3481, %v3551
        %v3553 = vpop.f32.mrb[0].mxu0
        %v3554 = vadd.f32 %v3483, %v3553
        %3555 = vdwg.mxu0
        %3556 = vmatprep.subr.mxu0 %v381
        %3557 = vmatpush1.msra.mxu0 %v380
        %3558 = vmatprep.subr.mxu0 %v397
        %3559 = vmatpush1.msra.mxu0 %v396
        %3560 = vmatprep.subr.mxu0 %v413
        %3561 = vmatpush1.msra.mxu0 %v412
        %3562 = vmatprep.subr.mxu0 %v429
        %3563 = vmatpush1.msra.mxu0 %v428
        %3564 = vmatprep.subr.mxu0 %v445
        %3565 = vmatpush1.msra.mxu0 %v444
        %3566 = vmatprep.subr.mxu0 %v461
        %3567 = vmatpush1.msra.mxu0 %v460
        %3568 = vmatprep.subr.mxu0 %v477
        %3569 = vmatpush1.msra.mxu0 %v476
        %3570 = vmatprep.subr.mxu0 %v493
        %3571 = vmatpush1.msra.mxu0 %v492
        %3572 = vmatprep.subr.mxu0 %v509
        %3573 = vmatpush1.msra.mxu0 %v508
        %3574 = vmatprep.subr.mxu0 %v525
        %3575 = vmatpush1.msra.mxu0 %v524
        %3576 = vmatprep.subr.mxu0 %v541
        %3577 = vmatpush1.msra.mxu0 %v540
        %3578 = vmatprep.subr.mxu0 %v557
        %3579 = vmatpush1.msra.mxu0 %v556
        %3580 = vmatprep.subr.mxu0 %v573
        %3581 = vmatpush1.msra.mxu0 %v572
        %3582 = vmatprep.subr.mxu0 %v589
        %3583 = vmatpush1.msra.mxu0 %v588
        %3584 = vmatprep.subr.mxu0 %v605
        %3585 = vmatpush1.msra.mxu0 %v604
        %3586 = vmatprep.subr.mxu0 %v621
        %3587 = vmatpush1.msra.mxu0 %v620
        %3588 = vmatprep.subr.mxu0 %v637
        %3589 = vmatpush1.msra.mxu0 %v636
        %3590 = vmatprep.subr.mxu0 %v653
        %3591 = vmatpush1.msra.mxu0 %v652
        %3592 = vmatprep.subr.mxu0 %v669
        %3593 = vmatpush1.msra.mxu0 %v668
        %3594 = vmatprep.subr.mxu0 %v685
        %3595 = vmatpush1.msra.mxu0 %v684
        %3596 = vmatprep.subr.mxu0 %v701
        %3597 = vmatpush1.msra.mxu0 %v700
        %3598 = vmatprep.subr.mxu0 %v717
        %3599 = vmatpush1.msra.mxu0 %v716
        %3600 = vmatprep.subr.mxu0 %v733
        %3601 = vmatpush1.msra.mxu0 %v732
        %3602 = vmatprep.subr.mxu0 %v749
        %3603 = vmatpush1.msra.mxu0 %v748
        %3604 = vmatprep.subr.mxu0 %v765
        %3605 = vmatpush1.msra.mxu0 %v764
        %3606 = vmatprep.subr.mxu0 %v781
        %3607 = vmatpush1.msra.mxu0 %v780
        %3608 = vmatprep.subr.mxu0 %v797
        %3609 = vmatpush1.msra.mxu0 %v796
        %3610 = vmatprep.subr.mxu0 %v813
        %3611 = vmatpush1.msra.mxu0 %v812
        %3612 = vmatprep.subr.mxu0 %v829
        %3613 = vmatpush1.msra.mxu0 %v828
        %3614 = vmatprep.subr.mxu0 %v845
        %3615 = vmatpush1.msra.mxu0 %v844
        %3616 = vmatprep.subr.mxu0 %v861
        %3617 = vmatpush1.msra.mxu0 %v860
        %3618 = vmatprep.subr.mxu0 %v877
        %3619 = vmatpush1.msra.mxu0 %v876
        %3620 = vmatprep.mubr.f32.mxu0 %v349
        %3621 = vmatmul.mubr.f32.gmra.mrb[0].mxu0 %v348
        %v3622 = vpop.f32.mrb[0].mxu0
        %v3623 = vadd.f32 0.0, %v3622
        %v3624 = vpop.f32.mrb[0].mxu0
        %v3625 = vadd.f32 0.0, %v3624
        %3626 = vdwg.mxu0
        %3627 = vmatprep.subr.mxu0 %v893
        %3628 = vmatpush1.msra.mxu0 %v892
        %3629 = vmatprep.subr.mxu0 %v909
        %3630 = vmatpush1.msra.mxu0 %v908
        %3631 = vmatprep.subr.mxu0 %v925
        %3632 = vmatpush1.msra.mxu0 %v924
        %3633 = vmatprep.subr.mxu0 %v941
        %3634 = vmatpush1.msra.mxu0 %v940
        %3635 = vmatprep.subr.mxu0 %v957
        %3636 = vmatpush1.msra.mxu0 %v956
        %3637 = vmatprep.subr.mxu0 %v973
        %3638 = vmatpush1.msra.mxu0 %v972
        %3639 = vmatprep.subr.mxu0 %v989
        %3640 = vmatpush1.msra.mxu0 %v988
        %3641 = vmatprep.subr.mxu0 %v1005
        %3642 = vmatpush1.msra.mxu0 %v1004
        %3643 = vmatprep.subr.mxu0 %v1021
        %3644 = vmatpush1.msra.mxu0 %v1020
        %3645 = vmatprep.subr.mxu0 %v1037
        %3646 = vmatpush1.msra.mxu0 %v1036
        %3647 = vmatprep.subr.mxu0 %v1053
        %3648 = vmatpush1.msra.mxu0 %v1052
        %3649 = vmatprep.subr.mxu0 %v1069
        %3650 = vmatpush1.msra.mxu0 %v1068
        %3651 = vmatprep.subr.mxu0 %v1085
        %3652 = vmatpush1.msra.mxu0 %v1084
        %3653 = vmatprep.subr.mxu0 %v1101
        %3654 = vmatpush1.msra.mxu0 %v1100
        %3655 = vmatprep.subr.mxu0 %v1117
        %3656 = vmatpush1.msra.mxu0 %v1116
        %3657 = vmatprep.subr.mxu0 %v1133
        %3658 = vmatpush1.msra.mxu0 %v1132
        %3659 = vmatprep.subr.mxu0 %v1149
        %3660 = vmatpush1.msra.mxu0 %v1148
        %3661 = vmatprep.subr.mxu0 %v1165
        %3662 = vmatpush1.msra.mxu0 %v1164
        %3663 = vmatprep.subr.mxu0 %v1181
        %3664 = vmatpush1.msra.mxu0 %v1180
        %3665 = vmatprep.subr.mxu0 %v1197
        %3666 = vmatpush1.msra.mxu0 %v1196
        %3667 = vmatprep.subr.mxu0 %v1213
        %3668 = vmatpush1.msra.mxu0 %v1212
        %3669 = vmatprep.subr.mxu0 %v1229
        %3670 = vmatpush1.msra.mxu0 %v1228
        %3671 = vmatprep.subr.mxu0 %v1245
        %3672 = vmatpush1.msra.mxu0 %v1244
        %3673 = vmatprep.subr.mxu0 %v1261
        %3674 = vmatpush1.msra.mxu0 %v1260
        %3675 = vmatprep.subr.mxu0 %v1277
        %3676 = vmatpush1.msra.mxu0 %v1276
        %3677 = vmatprep.subr.mxu0 %v1293
        %3678 = vmatpush1.msra.mxu0 %v1292
        %3679 = vmatprep.subr.mxu0 %v1309
        %3680 = vmatpush1.msra.mxu0 %v1308
        %3681 = vmatprep.subr.mxu0 %v1325
        %3682 = vmatpush1.msra.mxu0 %v1324
        %3683 = vmatprep.subr.mxu0 %v1341
        %3684 = vmatpush1.msra.mxu0 %v1340
        %3685 = vmatprep.subr.mxu0 %v1357
        %3686 = vmatpush1.msra.mxu0 %v1356
        %3687 = vmatprep.subr.mxu0 %v1373
        %3688 = vmatpush1.msra.mxu0 %v1372
        %3689 = vmatprep.subr.mxu0 %v1389
        %3690 = vmatpush1.msra.mxu0 %v1388
        %3691 = vmatprep.mubr.f32.mxu0 %v351
        %3692 = vmatmul.mubr.f32.gmra.mrb[0].mxu0 %v350
        %v3693 = vpop.f32.mrb[0].mxu0
        %v3694 = vadd.f32 %v3623, %v3693
        %v3695 = vpop.f32.mrb[0].mxu0
        %v3696 = vadd.f32 %v3625, %v3695
        %3697 = vdwg.mxu0
        %3698 = vmatprep.subr.mxu0 %v1405
        %3699 = vmatpush1.msra.mxu0 %v1404
        %3700 = vmatprep.subr.mxu0 %v1421
        %3701 = vmatpush1.msra.mxu0 %v1420
        %3702 = vmatprep.subr.mxu0 %v1437
        %3703 = vmatpush1.msra.mxu0 %v1436
        %3704 = vmatprep.subr.mxu0 %v1453
        %3705 = vmatpush1.msra.mxu0 %v1452
        %3706 = vmatprep.subr.mxu0 %v1469
        %3707 = vmatpush1.msra.mxu0 %v1468
        %3708 = vmatprep.subr.mxu0 %v1485
        %3709 = vmatpush1.msra.mxu0 %v1484
        %3710 = vmatprep.subr.mxu0 %v1501
        %3711 = vmatpush1.msra.mxu0 %v1500
        %3712 = vmatprep.subr.mxu0 %v1517
        %3713 = vmatpush1.msra.mxu0 %v1516
        %3714 = vmatprep.subr.mxu0 %v1533
        %3715 = vmatpush1.msra.mxu0 %v1532
        %3716 = vmatprep.subr.mxu0 %v1549
        %3717 = vmatpush1.msra.mxu0 %v1548
        %3718 = vmatprep.subr.mxu0 %v1565
        %3719 = vmatpush1.msra.mxu0 %v1564
        %3720 = vmatprep.subr.mxu0 %v1581
        %3721 = vmatpush1.msra.mxu0 %v1580
        %3722 = vmatprep.subr.mxu0 %v1597
        %3723 = vmatpush1.msra.mxu0 %v1596
        %3724 = vmatprep.subr.mxu0 %v1613
        %3725 = vmatpush1.msra.mxu0 %v1612
        %3726 = vmatprep.subr.mxu0 %v1629
        %3727 = vmatpush1.msra.mxu0 %v1628
        %3728 = vmatprep.subr.mxu0 %v1645
        %3729 = vmatpush1.msra.mxu0 %v1644
        %3730 = vmatprep.subr.mxu0 %v1661
        %3731 = vmatpush1.msra.mxu0 %v1660
        %3732 = vmatprep.subr.mxu0 %v1677
        %3733 = vmatpush1.msra.mxu0 %v1676
        %3734 = vmatprep.subr.mxu0 %v1693
        %3735 = vmatpush1.msra.mxu0 %v1692
        %3736 = vmatprep.subr.mxu0 %v1709
        %3737 = vmatpush1.msra.mxu0 %v1708
        %3738 = vmatprep.subr.mxu0 %v1725
        %3739 = vmatpush1.msra.mxu0 %v1724
        %3740 = vmatprep.subr.mxu0 %v1741
        %3741 = vmatpush1.msra.mxu0 %v1740
        %3742 = vmatprep.subr.mxu0 %v1757
        %3743 = vmatpush1.msra.mxu0 %v1756
        %3744 = vmatprep.subr.mxu0 %v1773
        %3745 = vmatpush1.msra.mxu0 %v1772
        %3746 = vmatprep.subr.mxu0 %v1789
        %3747 = vmatpush1.msra.mxu0 %v1788
        %3748 = vmatprep.subr.mxu0 %v1805
        %3749 = vmatpush1.msra.mxu0 %v1804
        %3750 = vmatprep.subr.mxu0 %v1821
        %3751 = vmatpush1.msra.mxu0 %v1820
        %3752 = vmatprep.subr.mxu0 %v1837
        %3753 = vmatpush1.msra.mxu0 %v1836
        %3754 = vmatprep.subr.mxu0 %v1853
        %3755 = vmatpush1.msra.mxu0 %v1852
        %3756 = vmatprep.subr.mxu0 %v1869
        %3757 = vmatpush1.msra.mxu0 %v1868
        %3758 = vmatprep.subr.mxu0 %v1885
        %3759 = vmatpush1.msra.mxu0 %v1884
        %3760 = vmatprep.subr.mxu0 %v1901
        %3761 = vmatpush1.msra.mxu0 %v1900
        %3762 = vmatprep.mubr.f32.mxu0 %v353
        %3763 = vmatmul.mubr.f32.gmra.mrb[0].mxu0 %v352
        %v3764 = vpop.f32.mrb[0].mxu0
        %v3765 = vadd.f32 %v3694, %v3764
        %v3766 = vpop.f32.mrb[0].mxu0
        %v3767 = vadd.f32 %v3696, %v3766
        %3768 = vdwg.mxu0
        %3769 = vmatprep.subr.mxu0 %v1917
        %3770 = vmatpush1.msra.mxu0 %v1916
        %3771 = vmatprep.subr.mxu0 %v1933
        %3772 = vmatpush1.msra.mxu0 %v1932
        %3773 = vmatprep.subr.mxu0 %v1949
        %3774 = vmatpush1.msra.mxu0 %v1948
        %3775 = vmatprep.subr.mxu0 %v1965
        %3776 = vmatpush1.msra.mxu0 %v1964
        %3777 = vmatprep.subr.mxu0 %v1981
        %3778 = vmatpush1.msra.mxu0 %v1980
        %3779 = vmatprep.subr.mxu0 %v1997
        %3780 = vmatpush1.msra.mxu0 %v1996
        %3781 = vmatprep.subr.mxu0 %v2013
        %3782 = vmatpush1.msra.mxu0 %v2012
        %3783 = vmatprep.subr.mxu0 %v2029
        %3784 = vmatpush1.msra.mxu0 %v2028
        %3785 = vmatprep.subr.mxu0 %v2045
        %3786 = vmatpush1.msra.mxu0 %v2044
        %3787 = vmatprep.subr.mxu0 %v2061
        %3788 = vmatpush1.msra.mxu0 %v2060
        %3789 = vmatprep.subr.mxu0 %v2077
        %3790 = vmatpush1.msra.mxu0 %v2076
        %3791 = vmatprep.subr.mxu0 %v2093
        %3792 = vmatpush1.msra.mxu0 %v2092
        %3793 = vmatprep.subr.mxu0 %v2109
        %3794 = vmatpush1.msra.mxu0 %v2108
        %3795 = vmatprep.subr.mxu0 %v2125
        %3796 = vmatpush1.msra.mxu0 %v2124
        %3797 = vmatprep.subr.mxu0 %v2141
        %3798 = vmatpush1.msra.mxu0 %v2140
        %3799 = vmatprep.subr.mxu0 %v2157
        %3800 = vmatpush1.msra.mxu0 %v2156
        %3801 = vmatprep.subr.mxu0 %v2173
        %3802 = vmatpush1.msra.mxu0 %v2172
        %3803 = vmatprep.subr.mxu0 %v2189
        %3804 = vmatpush1.msra.mxu0 %v2188
        %3805 = vmatprep.subr.mxu0 %v2205
        %3806 = vmatpush1.msra.mxu0 %v2204
        %3807 = vmatprep.subr.mxu0 %v2221
        %3808 = vmatpush1.msra.mxu0 %v2220
        %3809 = vmatprep.subr.mxu0 %v2237
        %3810 = vmatpush1.msra.mxu0 %v2236
        %3811 = vmatprep.subr.mxu0 %v2253
        %3812 = vmatpush1.msra.mxu0 %v2252
        %3813 = vmatprep.subr.mxu0 %v2269
        %3814 = vmatpush1.msra.mxu0 %v2268
        %3815 = vmatprep.subr.mxu0 %v2285
        %3816 = vmatpush1.msra.mxu0 %v2284
        %3817 = vmatprep.subr.mxu0 %v2301
        %3818 = vmatpush1.msra.mxu0 %v2300
        %3819 = vmatprep.subr.mxu0 %v2317
        %3820 = vmatpush1.msra.mxu0 %v2316
        %3821 = vmatprep.subr.mxu0 %v2333
        %3822 = vmatpush1.msra.mxu0 %v2332
        %3823 = vmatprep.subr.mxu0 %v2349
        %3824 = vmatpush1.msra.mxu0 %v2348
        %3825 = vmatprep.subr.mxu0 %v2365
        %3826 = vmatpush1.msra.mxu0 %v2364
        %3827 = vmatprep.subr.mxu0 %v2381
        %3828 = vmatpush1.msra.mxu0 %v2380
        %3829 = vmatprep.subr.mxu0 %v2397
        %3830 = vmatpush1.msra.mxu0 %v2396
        %3831 = vmatprep.subr.mxu0 %v2413
        %3832 = vmatpush1.msra.mxu0 %v2412
        %3833 = vmatprep.mubr.f32.mxu0 %v355
        %3834 = vmatmul.mubr.f32.gmra.mrb[0].mxu0 %v354
        %v3835 = vpop.f32.mrb[0].mxu0
        %v3836 = vadd.f32 %v3765, %v3835
        %v3837 = vpop.f32.mrb[0].mxu0
        %v3838 = vadd.f32 %v3767, %v3837
        %3839 = vdwg.mxu0
        %3840 = vmatprep.subr.mxu0 %v383
        %3841 = vmatpush1.msra.mxu0 %v382
        %3842 = vmatprep.subr.mxu0 %v399
        %3843 = vmatpush1.msra.mxu0 %v398
        %3844 = vmatprep.subr.mxu0 %v415
        %3845 = vmatpush1.msra.mxu0 %v414
        %3846 = vmatprep.subr.mxu0 %v431
        %3847 = vmatpush1.msra.mxu0 %v430
        %3848 = vmatprep.subr.mxu0 %v447
        %3849 = vmatpush1.msra.mxu0 %v446
        %3850 = vmatprep.subr.mxu0 %v463
        %3851 = vmatpush1.msra.mxu0 %v462
        %3852 = vmatprep.subr.mxu0 %v479
        %3853 = vmatpush1.msra.mxu0 %v478
        %3854 = vmatprep.subr.mxu0 %v495
        %3855 = vmatpush1.msra.mxu0 %v494
        %3856 = vmatprep.subr.mxu0 %v511
        %3857 = vmatpush1.msra.mxu0 %v510
        %3858 = vmatprep.subr.mxu0 %v527
        %3859 = vmatpush1.msra.mxu0 %v526
        %3860 = vmatprep.subr.mxu0 %v543
        %3861 = vmatpush1.msra.mxu0 %v542
        %3862 = vmatprep.subr.mxu0 %v559
        %3863 = vmatpush1.msra.mxu0 %v558
        %3864 = vmatprep.subr.mxu0 %v575
        %3865 = vmatpush1.msra.mxu0 %v574
        %3866 = vmatprep.subr.mxu0 %v591
        %3867 = vmatpush1.msra.mxu0 %v590
        %3868 = vmatprep.subr.mxu0 %v607
        %3869 = vmatpush1.msra.mxu0 %v606
        %3870 = vmatprep.subr.mxu0 %v623
        %3871 = vmatpush1.msra.mxu0 %v622
        %3872 = vmatprep.subr.mxu0 %v639
        %3873 = vmatpush1.msra.mxu0 %v638
        %3874 = vmatprep.subr.mxu0 %v655
        %3875 = vmatpush1.msra.mxu0 %v654
        %3876 = vmatprep.subr.mxu0 %v671
        %3877 = vmatpush1.msra.mxu0 %v670
        %3878 = vmatprep.subr.mxu0 %v687
        %3879 = vmatpush1.msra.mxu0 %v686
        %3880 = vmatprep.subr.mxu0 %v703
        %3881 = vmatpush1.msra.mxu0 %v702
        %3882 = vmatprep.subr.mxu0 %v719
        %3883 = vmatpush1.msra.mxu0 %v718
        %3884 = vmatprep.subr.mxu0 %v735
        %3885 = vmatpush1.msra.mxu0 %v734
        %3886 = vmatprep.subr.mxu0 %v751
        %3887 = vmatpush1.msra.mxu0 %v750
        %3888 = vmatprep.subr.mxu0 %v767
        %3889 = vmatpush1.msra.mxu0 %v766
        %3890 = vmatprep.subr.mxu0 %v783
        %3891 = vmatpush1.msra.mxu0 %v782
        %3892 = vmatprep.subr.mxu0 %v799
        %3893 = vmatpush1.msra.mxu0 %v798
        %3894 = vmatprep.subr.mxu0 %v815
        %3895 = vmatpush1.msra.mxu0 %v814
        %3896 = vmatprep.subr.mxu0 %v831
        %3897 = vmatpush1.msra.mxu0 %v830
        %3898 = vmatprep.subr.mxu0 %v847
        %3899 = vmatpush1.msra.mxu0 %v846
        %3900 = vmatprep.subr.mxu0 %v863
        %3901 = vmatpush1.msra.mxu0 %v862
        %3902 = vmatprep.subr.mxu0 %v879
        %3903 = vmatpush1.msra.mxu0 %v878
        %3904 = vmatprep.mubr.f32.mxu0 %v349
        %3905 = vmatmul.mubr.f32.gmra.mrb[0].mxu0 %v348
        %v3906 = vpop.f32.mrb[0].mxu0
        %v3907 = vadd.f32 0.0, %v3906
        %v3908 = vpop.f32.mrb[0].mxu0
        %v3909 = vadd.f32 0.0, %v3908
        %3910 = vdwg.mxu0
        %3911 = vmatprep.subr.mxu0 %v895
        %3912 = vmatpush1.msra.mxu0 %v894
        %3913 = vmatprep.subr.mxu0 %v911
        %3914 = vmatpush1.msra.mxu0 %v910
        %3915 = vmatprep.subr.mxu0 %v927
        %3916 = vmatpush1.msra.mxu0 %v926
        %3917 = vmatprep.subr.mxu0 %v943
        %3918 = vmatpush1.msra.mxu0 %v942
        %3919 = vmatprep.subr.mxu0 %v959
        %3920 = vmatpush1.msra.mxu0 %v958
        %3921 = vmatprep.subr.mxu0 %v975
        %3922 = vmatpush1.msra.mxu0 %v974
        %3923 = vmatprep.subr.mxu0 %v991
        %3924 = vmatpush1.msra.mxu0 %v990
        %3925 = vmatprep.subr.mxu0 %v1007
        %3926 = vmatpush1.msra.mxu0 %v1006
        %3927 = vmatprep.subr.mxu0 %v1023
        %3928 = vmatpush1.msra.mxu0 %v1022
        %3929 = vmatprep.subr.mxu0 %v1039
        %3930 = vmatpush1.msra.mxu0 %v1038
        %3931 = vmatprep.subr.mxu0 %v1055
        %3932 = vmatpush1.msra.mxu0 %v1054
        %3933 = vmatprep.subr.mxu0 %v1071
        %3934 = vmatpush1.msra.mxu0 %v1070
        %3935 = vmatprep.subr.mxu0 %v1087
        %3936 = vmatpush1.msra.mxu0 %v1086
        %3937 = vmatprep.subr.mxu0 %v1103
        %3938 = vmatpush1.msra.mxu0 %v1102
        %3939 = vmatprep.subr.mxu0 %v1119
        %3940 = vmatpush1.msra.mxu0 %v1118
        %3941 = vmatprep.subr.mxu0 %v1135
        %3942 = vmatpush1.msra.mxu0 %v1134
        %3943 = vmatprep.subr.mxu0 %v1151
        %3944 = vmatpush1.msra.mxu0 %v1150
        %3945 = vmatprep.subr.mxu0 %v1167
        %3946 = vmatpush1.msra.mxu0 %v1166
        %3947 = vmatprep.subr.mxu0 %v1183
        %3948 = vmatpush1.msra.mxu0 %v1182
        %3949 = vmatprep.subr.mxu0 %v1199
        %3950 = vmatpush1.msra.mxu0 %v1198
        %3951 = vmatprep.subr.mxu0 %v1215
        %3952 = vmatpush1.msra.mxu0 %v1214
        %3953 = vmatprep.subr.mxu0 %v1231
        %3954 = vmatpush1.msra.mxu0 %v1230
        %3955 = vmatprep.subr.mxu0 %v1247
        %3956 = vmatpush1.msra.mxu0 %v1246
        %3957 = vmatprep.subr.mxu0 %v1263
        %3958 = vmatpush1.msra.mxu0 %v1262
        %3959 = vmatprep.subr.mxu0 %v1279
        %3960 = vmatpush1.msra.mxu0 %v1278
        %3961 = vmatprep.subr.mxu0 %v1295
        %3962 = vmatpush1.msra.mxu0 %v1294
        %3963 = vmatprep.subr.mxu0 %v1311
        %3964 = vmatpush1.msra.mxu0 %v1310
        %3965 = vmatprep.subr.mxu0 %v1327
        %3966 = vmatpush1.msra.mxu0 %v1326
        %3967 = vmatprep.subr.mxu0 %v1343
        %3968 = vmatpush1.msra.mxu0 %v1342
        %3969 = vmatprep.subr.mxu0 %v1359
        %3970 = vmatpush1.msra.mxu0 %v1358
        %3971 = vmatprep.subr.mxu0 %v1375
        %3972 = vmatpush1.msra.mxu0 %v1374
        %3973 = vmatprep.subr.mxu0 %v1391
        %3974 = vmatpush1.msra.mxu0 %v1390
        %3975 = vmatprep.mubr.f32.mxu0 %v351
        %3976 = vmatmul.mubr.f32.gmra.mrb[0].mxu0 %v350
        %v3977 = vpop.f32.mrb[0].mxu0
        %v3978 = vadd.f32 %v3907, %v3977
        %v3979 = vpop.f32.mrb[0].mxu0
        %v3980 = vadd.f32 %v3909, %v3979
        %3981 = vdwg.mxu0
        %3982 = vmatprep.subr.mxu0 %v1407
        %3983 = vmatpush1.msra.mxu0 %v1406
        %3984 = vmatprep.subr.mxu0 %v1423
        %3985 = vmatpush1.msra.mxu0 %v1422
        %3986 = vmatprep.subr.mxu0 %v1439
        %3987 = vmatpush1.msra.mxu0 %v1438
        %3988 = vmatprep.subr.mxu0 %v1455
        %3989 = vmatpush1.msra.mxu0 %v1454
        %3990 = vmatprep.subr.mxu0 %v1471
        %3991 = vmatpush1.msra.mxu0 %v1470
        %3992 = vmatprep.subr.mxu0 %v1487
        %3993 = vmatpush1.msra.mxu0 %v1486
        %3994 = vmatprep.subr.mxu0 %v1503
        %3995 = vmatpush1.msra.mxu0 %v1502
        %3996 = vmatprep.subr.mxu0 %v1519
        %3997 = vmatpush1.msra.mxu0 %v1518
        %3998 = vmatprep.subr.mxu0 %v1535
        %3999 = vmatpush1.msra.mxu0 %v1534
        %4000 = vmatprep.subr.mxu0 %v1551
        %4001 = vmatpush1.msra.mxu0 %v1550
        %4002 = vmatprep.subr.mxu0 %v1567
        %4003 = vmatpush1.msra.mxu0 %v1566
        %4004 = vmatprep.subr.mxu0 %v1583
        %4005 = vmatpush1.msra.mxu0 %v1582
        %4006 = vmatprep.subr.mxu0 %v1599
        %4007 = vmatpush1.msra.mxu0 %v1598
        %4008 = vmatprep.subr.mxu0 %v1615
        %4009 = vmatpush1.msra.mxu0 %v1614
        %4010 = vmatprep.subr.mxu0 %v1631
        %4011 = vmatpush1.msra.mxu0 %v1630
        %4012 = vmatprep.subr.mxu0 %v1647
        %4013 = vmatpush1.msra.mxu0 %v1646
        %4014 = vmatprep.subr.mxu0 %v1663
        %4015 = vmatpush1.msra.mxu0 %v1662
        %4016 = vmatprep.subr.mxu0 %v1679
        %4017 = vmatpush1.msra.mxu0 %v1678
        %4018 = vmatprep.subr.mxu0 %v1695
        %4019 = vmatpush1.msra.mxu0 %v1694
        %4020 = vmatprep.subr.mxu0 %v1711
        %4021 = vmatpush1.msra.mxu0 %v1710
        %4022 = vmatprep.subr.mxu0 %v1727
        %4023 = vmatpush1.msra.mxu0 %v1726
        %4024 = vmatprep.subr.mxu0 %v1743
        %4025 = vmatpush1.msra.mxu0 %v1742
        %4026 = vmatprep.subr.mxu0 %v1759
        %4027 = vmatpush1.msra.mxu0 %v1758
        %4028 = vmatprep.subr.mxu0 %v1775
        %4029 = vmatpush1.msra.mxu0 %v1774
        %4030 = vmatprep.subr.mxu0 %v1791
        %4031 = vmatpush1.msra.mxu0 %v1790
        %4032 = vmatprep.subr.mxu0 %v1807
        %4033 = vmatpush1.msra.mxu0 %v1806
        %4034 = vmatprep.subr.mxu0 %v1823
        %4035 = vmatpush1.msra.mxu0 %v1822
        %4036 = vmatprep.subr.mxu0 %v1839
        %4037 = vmatpush1.msra.mxu0 %v1838
        %4038 = vmatprep.subr.mxu0 %v1855
        %4039 = vmatpush1.msra.mxu0 %v1854
        %4040 = vmatprep.subr.mxu0 %v1871
        %4041 = vmatpush1.msra.mxu0 %v1870
        %4042 = vmatprep.subr.mxu0 %v1887
        %4043 = vmatpush1.msra.mxu0 %v1886
        %4044 = vmatprep.subr.mxu0 %v1903
        %4045 = vmatpush1.msra.mxu0 %v1902
        %4046 = vmatprep.mubr.f32.mxu0 %v353
        %4047 = vmatmul.mubr.f32.gmra.mrb[0].mxu0 %v352
        %v4048 = vpop.f32.mrb[0].mxu0
        %v4049 = vadd.f32 %v3978, %v4048
        %v4050 = vpop.f32.mrb[0].mxu0
        %v4051 = vadd.f32 %v3980, %v4050
        %4052 = vdwg.mxu0
        %4053 = vmatprep.subr.mxu0 %v1919
        %4054 = vmatpush1.msra.mxu0 %v1918
        %4055 = vmatprep.subr.mxu0 %v1935
        %4056 = vmatpush1.msra.mxu0 %v1934
        %4057 = vmatprep.subr.mxu0 %v1951
        %4058 = vmatpush1.msra.mxu0 %v1950
        %4059 = vmatprep.subr.mxu0 %v1967
        %4060 = vmatpush1.msra.mxu0 %v1966
        %4061 = vmatprep.subr.mxu0 %v1983
        %4062 = vmatpush1.msra.mxu0 %v1982
        %4063 = vmatprep.subr.mxu0 %v1999
        %4064 = vmatpush1.msra.mxu0 %v1998
        %4065 = vmatprep.subr.mxu0 %v2015
        %4066 = vmatpush1.msra.mxu0 %v2014
        %4067 = vmatprep.subr.mxu0 %v2031
        %4068 = vmatpush1.msra.mxu0 %v2030
        %4069 = vmatprep.subr.mxu0 %v2047
        %4070 = vmatpush1.msra.mxu0 %v2046
        %4071 = vmatprep.subr.mxu0 %v2063
        %4072 = vmatpush1.msra.mxu0 %v2062
        %4073 = vmatprep.subr.mxu0 %v2079
        %4074 = vmatpush1.msra.mxu0 %v2078
        %4075 = vmatprep.subr.mxu0 %v2095
        %4076 = vmatpush1.msra.mxu0 %v2094
        %4077 = vmatprep.subr.mxu0 %v2111
        %4078 = vmatpush1.msra.mxu0 %v2110
        %4079 = vmatprep.subr.mxu0 %v2127
        %4080 = vmatpush1.msra.mxu0 %v2126
        %4081 = vmatprep.subr.mxu0 %v2143
        %4082 = vmatpush1.msra.mxu0 %v2142
        %4083 = vmatprep.subr.mxu0 %v2159
        %4084 = vmatpush1.msra.mxu0 %v2158
        %4085 = vmatprep.subr.mxu0 %v2175
        %4086 = vmatpush1.msra.mxu0 %v2174
        %4087 = vmatprep.subr.mxu0 %v2191
        %4088 = vmatpush1.msra.mxu0 %v2190
        %4089 = vmatprep.subr.mxu0 %v2207
        %4090 = vmatpush1.msra.mxu0 %v2206
        %4091 = vmatprep.subr.mxu0 %v2223
        %4092 = vmatpush1.msra.mxu0 %v2222
        %4093 = vmatprep.subr.mxu0 %v2239
        %4094 = vmatpush1.msra.mxu0 %v2238
        %4095 = vmatprep.subr.mxu0 %v2255
        %4096 = vmatpush1.msra.mxu0 %v2254
        %4097 = vmatprep.subr.mxu0 %v2271
        %4098 = vmatpush1.msra.mxu0 %v2270
        %4099 = vmatprep.subr.mxu0 %v2287
        %4100 = vmatpush1.msra.mxu0 %v2286
        %4101 = vmatprep.subr.mxu0 %v2303
        %4102 = vmatpush1.msra.mxu0 %v2302
        %4103 = vmatprep.subr.mxu0 %v2319
        %4104 = vmatpush1.msra.mxu0 %v2318
        %4105 = vmatprep.subr.mxu0 %v2335
        %4106 = vmatpush1.msra.mxu0 %v2334
        %4107 = vmatprep.subr.mxu0 %v2351
        %4108 = vmatpush1.msra.mxu0 %v2350
        %4109 = vmatprep.subr.mxu0 %v2367
        %4110 = vmatpush1.msra.mxu0 %v2366
        %4111 = vmatprep.subr.mxu0 %v2383
        %4112 = vmatpush1.msra.mxu0 %v2382
        %4113 = vmatprep.subr.mxu0 %v2399
        %4114 = vmatpush1.msra.mxu0 %v2398
        %4115 = vmatprep.subr.mxu0 %v2415
        %4116 = vmatpush1.msra.mxu0 %v2414
        %4117 = vmatprep.mubr.f32.mxu0 %v355
        %4118 = vmatmul.mubr.f32.gmra.mrb[0].mxu0 %v354
        %v4119 = vpop.f32.mrb[0].mxu0
        %v4120 = vadd.f32 %v4049, %v4119
        %v4121 = vpop.f32.mrb[0].mxu0
        %v4122 = vadd.f32 %v4051, %v4121
        %4123 = vdwg.mxu0
        %4124 = vmatprep.subr.mxu0 %v385
        %4125 = vmatpush1.msra.mxu0 %v384
        %4126 = vmatprep.subr.mxu0 %v401
        %4127 = vmatpush1.msra.mxu0 %v400
        %4128 = vmatprep.subr.mxu0 %v417
        %4129 = vmatpush1.msra.mxu0 %v416
        %4130 = vmatprep.subr.mxu0 %v433
        %4131 = vmatpush1.msra.mxu0 %v432
        %4132 = vmatprep.subr.mxu0 %v449
        %4133 = vmatpush1.msra.mxu0 %v448
        %4134 = vmatprep.subr.mxu0 %v465
        %4135 = vmatpush1.msra.mxu0 %v464
        %4136 = vmatprep.subr.mxu0 %v481
        %4137 = vmatpush1.msra.mxu0 %v480
        %4138 = vmatprep.subr.mxu0 %v497
        %4139 = vmatpush1.msra.mxu0 %v496
        %4140 = vmatprep.subr.mxu0 %v513
        %4141 = vmatpush1.msra.mxu0 %v512
        %4142 = vmatprep.subr.mxu0 %v529
        %4143 = vmatpush1.msra.mxu0 %v528
        %4144 = vmatprep.subr.mxu0 %v545
        %4145 = vmatpush1.msra.mxu0 %v544
        %4146 = vmatprep.subr.mxu0 %v561
        %4147 = vmatpush1.msra.mxu0 %v560
        %4148 = vmatprep.subr.mxu0 %v577
        %4149 = vmatpush1.msra.mxu0 %v576
        %4150 = vmatprep.subr.mxu0 %v593
        %4151 = vmatpush1.msra.mxu0 %v592
        %4152 = vmatprep.subr.mxu0 %v609
        %4153 = vmatpush1.msra.mxu0 %v608
        %4154 = vmatprep.subr.mxu0 %v625
        %4155 = vmatpush1.msra.mxu0 %v624
        %4156 = vmatprep.subr.mxu0 %v641
        %4157 = vmatpush1.msra.mxu0 %v640
        %4158 = vmatprep.subr.mxu0 %v657
        %4159 = vmatpush1.msra.mxu0 %v656
        %4160 = vmatprep.subr.mxu0 %v673
        %4161 = vmatpush1.msra.mxu0 %v672
        %4162 = vmatprep.subr.mxu0 %v689
        %4163 = vmatpush1.msra.mxu0 %v688
        %4164 = vmatprep.subr.mxu0 %v705
        %4165 = vmatpush1.msra.mxu0 %v704
        %4166 = vmatprep.subr.mxu0 %v721
        %4167 = vmatpush1.msra.mxu0 %v720
        %4168 = vmatprep.subr.mxu0 %v737
        %4169 = vmatpush1.msra.mxu0 %v736
        %4170 = vmatprep.subr.mxu0 %v753
        %4171 = vmatpush1.msra.mxu0 %v752
        %4172 = vmatprep.subr.mxu0 %v769
        %4173 = vmatpush1.msra.mxu0 %v768
        %4174 = vmatprep.subr.mxu0 %v785
        %4175 = vmatpush1.msra.mxu0 %v784
        %4176 = vmatprep.subr.mxu0 %v801
        %4177 = vmatpush1.msra.mxu0 %v800
        %4178 = vmatprep.subr.mxu0 %v817
        %4179 = vmatpush1.msra.mxu0 %v816
        %4180 = vmatprep.subr.mxu0 %v833
        %4181 = vmatpush1.msra.mxu0 %v832
        %4182 = vmatprep.subr.mxu0 %v849
        %4183 = vmatpush1.msra.mxu0 %v848
        %4184 = vmatprep.subr.mxu0 %v865
        %4185 = vmatpush1.msra.mxu0 %v864
        %4186 = vmatprep.subr.mxu0 %v881
        %4187 = vmatpush1.msra.mxu0 %v880
        %4188 = vmatprep.mubr.f32.mxu0 %v349
        %4189 = vmatmul.mubr.f32.gmra.mrb[0].mxu0 %v348
        %v4190 = vpop.f32.mrb[0].mxu0
        %v4191 = vadd.f32 0.0, %v4190
        %v4192 = vpop.f32.mrb[0].mxu0
        %v4193 = vadd.f32 0.0, %v4192
        %4194 = vdwg.mxu0
        %4195 = vmatprep.subr.mxu0 %v897
        %4196 = vmatpush1.msra.mxu0 %v896
        %4197 = vmatprep.subr.mxu0 %v913
        %4198 = vmatpush1.msra.mxu0 %v912
        %4199 = vmatprep.subr.mxu0 %v929
        %4200 = vmatpush1.msra.mxu0 %v928
        %4201 = vmatprep.subr.mxu0 %v945
        %4202 = vmatpush1.msra.mxu0 %v944
        %4203 = vmatprep.subr.mxu0 %v961
        %4204 = vmatpush1.msra.mxu0 %v960
        %4205 = vmatprep.subr.mxu0 %v977
        %4206 = vmatpush1.msra.mxu0 %v976
        %4207 = vmatprep.subr.mxu0 %v993
        %4208 = vmatpush1.msra.mxu0 %v992
        %4209 = vmatprep.subr.mxu0 %v1009
        %4210 = vmatpush1.msra.mxu0 %v1008
        %4211 = vmatprep.subr.mxu0 %v1025
        %4212 = vmatpush1.msra.mxu0 %v1024
        %4213 = vmatprep.subr.mxu0 %v1041
        %4214 = vmatpush1.msra.mxu0 %v1040
        %4215 = vmatprep.subr.mxu0 %v1057
        %4216 = vmatpush1.msra.mxu0 %v1056
        %4217 = vmatprep.subr.mxu0 %v1073
        %4218 = vmatpush1.msra.mxu0 %v1072
        %4219 = vmatprep.subr.mxu0 %v1089
        %4220 = vmatpush1.msra.mxu0 %v1088
        %4221 = vmatprep.subr.mxu0 %v1105
        %4222 = vmatpush1.msra.mxu0 %v1104
        %4223 = vmatprep.subr.mxu0 %v1121
        %4224 = vmatpush1.msra.mxu0 %v1120
        %4225 = vmatprep.subr.mxu0 %v1137
        %4226 = vmatpush1.msra.mxu0 %v1136
        %4227 = vmatprep.subr.mxu0 %v1153
        %4228 = vmatpush1.msra.mxu0 %v1152
        %4229 = vmatprep.subr.mxu0 %v1169
        %4230 = vmatpush1.msra.mxu0 %v1168
        %4231 = vmatprep.subr.mxu0 %v1185
        %4232 = vmatpush1.msra.mxu0 %v1184
        %4233 = vmatprep.subr.mxu0 %v1201
        %4234 = vmatpush1.msra.mxu0 %v1200
        %4235 = vmatprep.subr.mxu0 %v1217
        %4236 = vmatpush1.msra.mxu0 %v1216
        %4237 = vmatprep.subr.mxu0 %v1233
        %4238 = vmatpush1.msra.mxu0 %v1232
        %4239 = vmatprep.subr.mxu0 %v1249
        %4240 = vmatpush1.msra.mxu0 %v1248
        %4241 = vmatprep.subr.mxu0 %v1265
        %4242 = vmatpush1.msra.mxu0 %v1264
        %4243 = vmatprep.subr.mxu0 %v1281
        %4244 = vmatpush1.msra.mxu0 %v1280
        %4245 = vmatprep.subr.mxu0 %v1297
        %4246 = vmatpush1.msra.mxu0 %v1296
        %4247 = vmatprep.subr.mxu0 %v1313
        %4248 = vmatpush1.msra.mxu0 %v1312
        %4249 = vmatprep.subr.mxu0 %v1329
        %4250 = vmatpush1.msra.mxu0 %v1328
        %4251 = vmatprep.subr.mxu0 %v1345
        %4252 = vmatpush1.msra.mxu0 %v1344
        %4253 = vmatprep.subr.mxu0 %v1361
        %4254 = vmatpush1.msra.mxu0 %v1360
        %4255 = vmatprep.subr.mxu0 %v1377
        %4256 = vmatpush1.msra.mxu0 %v1376
        %4257 = vmatprep.subr.mxu0 %v1393
        %4258 = vmatpush1.msra.mxu0 %v1392
        %4259 = vmatprep.mubr.f32.mxu0 %v351
        %4260 = vmatmul.mubr.f32.gmra.mrb[0].mxu0 %v350
        %v4261 = vpop.f32.mrb[0].mxu0
        %v4262 = vadd.f32 %v4191, %v4261
        %v4263 = vpop.f32.mrb[0].mxu0
        %v4264 = vadd.f32 %v4193, %v4263
        %4265 = vdwg.mxu0
        %4266 = vmatprep.subr.mxu0 %v1409
        %4267 = vmatpush1.msra.mxu0 %v1408
        %4268 = vmatprep.subr.mxu0 %v1425
        %4269 = vmatpush1.msra.mxu0 %v1424
        %4270 = vmatprep.subr.mxu0 %v1441
        %4271 = vmatpush1.msra.mxu0 %v1440
        %4272 = vmatprep.subr.mxu0 %v1457
        %4273 = vmatpush1.msra.mxu0 %v1456
        %4274 = vmatprep.subr.mxu0 %v1473
        %4275 = vmatpush1.msra.mxu0 %v1472
        %4276 = vmatprep.subr.mxu0 %v1489
        %4277 = vmatpush1.msra.mxu0 %v1488
        %4278 = vmatprep.subr.mxu0 %v1505
        %4279 = vmatpush1.msra.mxu0 %v1504
        %4280 = vmatprep.subr.mxu0 %v1521
        %4281 = vmatpush1.msra.mxu0 %v1520
        %4282 = vmatprep.subr.mxu0 %v1537
        %4283 = vmatpush1.msra.mxu0 %v1536
        %4284 = vmatprep.subr.mxu0 %v1553
        %4285 = vmatpush1.msra.mxu0 %v1552
        %4286 = vmatprep.subr.mxu0 %v1569
        %4287 = vmatpush1.msra.mxu0 %v1568
        %4288 = vmatprep.subr.mxu0 %v1585
        %4289 = vmatpush1.msra.mxu0 %v1584
        %4290 = vmatprep.subr.mxu0 %v1601
        %4291 = vmatpush1.msra.mxu0 %v1600
        %4292 = vmatprep.subr.mxu0 %v1617
        %4293 = vmatpush1.msra.mxu0 %v1616
        %4294 = vmatprep.subr.mxu0 %v1633
        %4295 = vmatpush1.msra.mxu0 %v1632
        %4296 = vmatprep.subr.mxu0 %v1649
        %4297 = vmatpush1.msra.mxu0 %v1648
        %4298 = vmatprep.subr.mxu0 %v1665
        %4299 = vmatpush1.msra.mxu0 %v1664
        %4300 = vmatprep.subr.mxu0 %v1681
        %4301 = vmatpush1.msra.mxu0 %v1680
        %4302 = vmatprep.subr.mxu0 %v1697
        %4303 = vmatpush1.msra.mxu0 %v1696
        %4304 = vmatprep.subr.mxu0 %v1713
        %4305 = vmatpush1.msra.mxu0 %v1712
        %4306 = vmatprep.subr.mxu0 %v1729
        %4307 = vmatpush1.msra.mxu0 %v1728
        %4308 = vmatprep.subr.mxu0 %v1745
        %4309 = vmatpush1.msra.mxu0 %v1744
        %4310 = vmatprep.subr.mxu0 %v1761
        %4311 = vmatpush1.msra.mxu0 %v1760
        %4312 = vmatprep.subr.mxu0 %v1777
        %4313 = vmatpush1.msra.mxu0 %v1776
        %4314 = vmatprep.subr.mxu0 %v1793
        %4315 = vmatpush1.msra.mxu0 %v1792
        %4316 = vmatprep.subr.mxu0 %v1809
        %4317 = vmatpush1.msra.mxu0 %v1808
        %4318 = vmatprep.subr.mxu0 %v1825
        %4319 = vmatpush1.msra.mxu0 %v1824
        %4320 = vmatprep.subr.mxu0 %v1841
        %4321 = vmatpush1.msra.mxu0 %v1840
        %4322 = vmatprep.subr.mxu0 %v1857
        %4323 = vmatpush1.msra.mxu0 %v1856
        %4324 = vmatprep.subr.mxu0 %v1873
        %4325 = vmatpush1.msra.mxu0 %v1872
        %4326 = vmatprep.subr.mxu0 %v1889
        %4327 = vmatpush1.msra.mxu0 %v1888
        %4328 = vmatprep.subr.mxu0 %v1905
        %4329 = vmatpush1.msra.mxu0 %v1904
        %4330 = vmatprep.mubr.f32.mxu0 %v353
        %4331 = vmatmul.mubr.f32.gmra.mrb[0].mxu0 %v352
        %v4332 = vpop.f32.mrb[0].mxu0
        %v4333 = vadd.f32 %v4262, %v4332
        %v4334 = vpop.f32.mrb[0].mxu0
        %v4335 = vadd.f32 %v4264, %v4334
        %4336 = vdwg.mxu0
        %4337 = vmatprep.subr.mxu0 %v1921
        %4338 = vmatpush1.msra.mxu0 %v1920
        %4339 = vmatprep.subr.mxu0 %v1937
        %4340 = vmatpush1.msra.mxu0 %v1936
        %4341 = vmatprep.subr.mxu0 %v1953
        %4342 = vmatpush1.msra.mxu0 %v1952
        %4343 = vmatprep.subr.mxu0 %v1969
        %4344 = vmatpush1.msra.mxu0 %v1968
        %4345 = vmatprep.subr.mxu0 %v1985
        %4346 = vmatpush1.msra.mxu0 %v1984
        %4347 = vmatprep.subr.mxu0 %v2001
        %4348 = vmatpush1.msra.mxu0 %v2000
        %4349 = vmatprep.subr.mxu0 %v2017
        %4350 = vmatpush1.msra.mxu0 %v2016
        %4351 = vmatprep.subr.mxu0 %v2033
        %4352 = vmatpush1.msra.mxu0 %v2032
        %4353 = vmatprep.subr.mxu0 %v2049
        %4354 = vmatpush1.msra.mxu0 %v2048
        %4355 = vmatprep.subr.mxu0 %v2065
        %4356 = vmatpush1.msra.mxu0 %v2064
        %4357 = vmatprep.subr.mxu0 %v2081
        %4358 = vmatpush1.msra.mxu0 %v2080
        %4359 = vmatprep.subr.mxu0 %v2097
        %4360 = vmatpush1.msra.mxu0 %v2096
        %4361 = vmatprep.subr.mxu0 %v2113
        %4362 = vmatpush1.msra.mxu0 %v2112
        %4363 = vmatprep.subr.mxu0 %v2129
        %4364 = vmatpush1.msra.mxu0 %v2128
        %4365 = vmatprep.subr.mxu0 %v2145
        %4366 = vmatpush1.msra.mxu0 %v2144
        %4367 = vmatprep.subr.mxu0 %v2161
        %4368 = vmatpush1.msra.mxu0 %v2160
        %4369 = vmatprep.subr.mxu0 %v2177
        %4370 = vmatpush1.msra.mxu0 %v2176
        %4371 = vmatprep.subr.mxu0 %v2193
        %4372 = vmatpush1.msra.mxu0 %v2192
        %4373 = vmatprep.subr.mxu0 %v2209
        %4374 = vmatpush1.msra.mxu0 %v2208
        %4375 = vmatprep.subr.mxu0 %v2225
        %4376 = vmatpush1.msra.mxu0 %v2224
        %4377 = vmatprep.subr.mxu0 %v2241
        %4378 = vmatpush1.msra.mxu0 %v2240
        %4379 = vmatprep.subr.mxu0 %v2257
        %4380 = vmatpush1.msra.mxu0 %v2256
        %4381 = vmatprep.subr.mxu0 %v2273
        %4382 = vmatpush1.msra.mxu0 %v2272
        %4383 = vmatprep.subr.mxu0 %v2289
        %4384 = vmatpush1.msra.mxu0 %v2288
        %4385 = vmatprep.subr.mxu0 %v2305
        %4386 = vmatpush1.msra.mxu0 %v2304
        %4387 = vmatprep.subr.mxu0 %v2321
        %4388 = vmatpush1.msra.mxu0 %v2320
        %4389 = vmatprep.subr.mxu0 %v2337
        %4390 = vmatpush1.msra.mxu0 %v2336
        %4391 = vmatprep.subr.mxu0 %v2353
        %4392 = vmatpush1.msra.mxu0 %v2352
        %4393 = vmatprep.subr.mxu0 %v2369
        %4394 = vmatpush1.msra.mxu0 %v2368
        %4395 = vmatprep.subr.mxu0 %v2385
        %4396 = vmatpush1.msra.mxu0 %v2384
        %4397 = vmatprep.subr.mxu0 %v2401
        %4398 = vmatpush1.msra.mxu0 %v2400
        %4399 = vmatprep.subr.mxu0 %v2417
        %4400 = vmatpush1.msra.mxu0 %v2416
        %4401 = vmatprep.mubr.f32.mxu0 %v355
        %4402 = vmatmul.mubr.f32.gmra.mrb[0].mxu0 %v354
        %v4403 = vpop.f32.mrb[0].mxu0
        %v4404 = vadd.f32 %v4333, %v4403
        %v4405 = vpop.f32.mrb[0].mxu0
        %v4406 = vadd.f32 %v4335, %v4405
        %4407 = vdwg.mxu0
        %4408 = vmatprep.subr.mxu0 %v387
        %4409 = vmatpush1.msra.mxu0 %v386
        %4410 = vmatprep.subr.mxu0 %v403
        %4411 = vmatpush1.msra.mxu0 %v402
        %4412 = vmatprep.subr.mxu0 %v419
        %4413 = vmatpush1.msra.mxu0 %v418
        %4414 = vmatprep.subr.mxu0 %v435
        %4415 = vmatpush1.msra.mxu0 %v434
        %4416 = vmatprep.subr.mxu0 %v451
        %4417 = vmatpush1.msra.mxu0 %v450
        %4418 = vmatprep.subr.mxu0 %v467
        %4419 = vmatpush1.msra.mxu0 %v466
        %4420 = vmatprep.subr.mxu0 %v483
        %4421 = vmatpush1.msra.mxu0 %v482
        %4422 = vmatprep.subr.mxu0 %v499
        %4423 = vmatpush1.msra.mxu0 %v498
        %4424 = vmatprep.subr.mxu0 %v515
        %4425 = vmatpush1.msra.mxu0 %v514
        %4426 = vmatprep.subr.mxu0 %v531
        %4427 = vmatpush1.msra.mxu0 %v530
        %4428 = vmatprep.subr.mxu0 %v547
        %4429 = vmatpush1.msra.mxu0 %v546
        %4430 = vmatprep.subr.mxu0 %v563
        %4431 = vmatpush1.msra.mxu0 %v562
        %4432 = vmatprep.subr.mxu0 %v579
        %4433 = vmatpush1.msra.mxu0 %v578
        %4434 = vmatprep.subr.mxu0 %v595
        %4435 = vmatpush1.msra.mxu0 %v594
        %4436 = vmatprep.subr.mxu0 %v611
        %4437 = vmatpush1.msra.mxu0 %v610
        %4438 = vmatprep.subr.mxu0 %v627
        %4439 = vmatpush1.msra.mxu0 %v626
        %4440 = vmatprep.subr.mxu0 %v643
        %4441 = vmatpush1.msra.mxu0 %v642
        %4442 = vmatprep.subr.mxu0 %v659
        %4443 = vmatpush1.msra.mxu0 %v658
        %4444 = vmatprep.subr.mxu0 %v675
        %4445 = vmatpush1.msra.mxu0 %v674
        %4446 = vmatprep.subr.mxu0 %v691
        %4447 = vmatpush1.msra.mxu0 %v690
        %4448 = vmatprep.subr.mxu0 %v707
        %4449 = vmatpush1.msra.mxu0 %v706
        %4450 = vmatprep.subr.mxu0 %v723
        %4451 = vmatpush1.msra.mxu0 %v722
        %4452 = vmatprep.subr.mxu0 %v739
        %4453 = vmatpush1.msra.mxu0 %v738
        %4454 = vmatprep.subr.mxu0 %v755
        %4455 = vmatpush1.msra.mxu0 %v754
        %4456 = vmatprep.subr.mxu0 %v771
        %4457 = vmatpush1.msra.mxu0 %v770
        %4458 = vmatprep.subr.mxu0 %v787
        %4459 = vmatpush1.msra.mxu0 %v786
        %4460 = vmatprep.subr.mxu0 %v803
        %4461 = vmatpush1.msra.mxu0 %v802
        %4462 = vmatprep.subr.mxu0 %v819
        %4463 = vmatpush1.msra.mxu0 %v818
        %4464 = vmatprep.subr.mxu0 %v835
        %4465 = vmatpush1.msra.mxu0 %v834
        %4466 = vmatprep.subr.mxu0 %v851
        %4467 = vmatpush1.msra.mxu0 %v850
        %4468 = vmatprep.subr.mxu0 %v867
        %4469 = vmatpush1.msra.mxu0 %v866
        %4470 = vmatprep.subr.mxu0 %v883
        %4471 = vmatpush1.msra.mxu0 %v882
        %4472 = vmatprep.mubr.f32.mxu0 %v349
        %4473 = vmatmul.mubr.f32.gmra.mrb[0].mxu0 %v348
        %v4474 = vpop.f32.mrb[0].mxu0
        %v4475 = vadd.f32 0.0, %v4474
        %v4476 = vpop.f32.mrb[0].mxu0
        %v4477 = vadd.f32 0.0, %v4476
        %4478 = vdwg.mxu0
        %4479 = vmatprep.subr.mxu0 %v899
        %4480 = vmatpush1.msra.mxu0 %v898
        %4481 = vmatprep.subr.mxu0 %v915
        %4482 = vmatpush1.msra.mxu0 %v914
        %4483 = vmatprep.subr.mxu0 %v931
        %4484 = vmatpush1.msra.mxu0 %v930
        %4485 = vmatprep.subr.mxu0 %v947
        %4486 = vmatpush1.msra.mxu0 %v946
        %4487 = vmatprep.subr.mxu0 %v963
        %4488 = vmatpush1.msra.mxu0 %v962
        %4489 = vmatprep.subr.mxu0 %v979
        %4490 = vmatpush1.msra.mxu0 %v978
        %4491 = vmatprep.subr.mxu0 %v995
        %4492 = vmatpush1.msra.mxu0 %v994
        %4493 = vmatprep.subr.mxu0 %v1011
        %4494 = vmatpush1.msra.mxu0 %v1010
        %4495 = vmatprep.subr.mxu0 %v1027
        %4496 = vmatpush1.msra.mxu0 %v1026
        %4497 = vmatprep.subr.mxu0 %v1043
        %4498 = vmatpush1.msra.mxu0 %v1042
        %4499 = vmatprep.subr.mxu0 %v1059
        %4500 = vmatpush1.msra.mxu0 %v1058
        %4501 = vmatprep.subr.mxu0 %v1075
        %4502 = vmatpush1.msra.mxu0 %v1074
        %4503 = vmatprep.subr.mxu0 %v1091
        %4504 = vmatpush1.msra.mxu0 %v1090
        %4505 = vmatprep.subr.mxu0 %v1107
        %4506 = vmatpush1.msra.mxu0 %v1106
        %4507 = vmatprep.subr.mxu0 %v1123
        %4508 = vmatpush1.msra.mxu0 %v1122
        %4509 = vmatprep.subr.mxu0 %v1139
        %4510 = vmatpush1.msra.mxu0 %v1138
        %4511 = vmatprep.subr.mxu0 %v1155
        %4512 = vmatpush1.msra.mxu0 %v1154
        %4513 = vmatprep.subr.mxu0 %v1171
        %4514 = vmatpush1.msra.mxu0 %v1170
        %4515 = vmatprep.subr.mxu0 %v1187
        %4516 = vmatpush1.msra.mxu0 %v1186
        %4517 = vmatprep.subr.mxu0 %v1203
        %4518 = vmatpush1.msra.mxu0 %v1202
        %4519 = vmatprep.subr.mxu0 %v1219
        %4520 = vmatpush1.msra.mxu0 %v1218
        %4521 = vmatprep.subr.mxu0 %v1235
        %4522 = vmatpush1.msra.mxu0 %v1234
        %4523 = vmatprep.subr.mxu0 %v1251
        %4524 = vmatpush1.msra.mxu0 %v1250
        %4525 = vmatprep.subr.mxu0 %v1267
        %4526 = vmatpush1.msra.mxu0 %v1266
        %4527 = vmatprep.subr.mxu0 %v1283
        %4528 = vmatpush1.msra.mxu0 %v1282
        %4529 = vmatprep.subr.mxu0 %v1299
        %4530 = vmatpush1.msra.mxu0 %v1298
        %4531 = vmatprep.subr.mxu0 %v1315
        %4532 = vmatpush1.msra.mxu0 %v1314
        %4533 = vmatprep.subr.mxu0 %v1331
        %4534 = vmatpush1.msra.mxu0 %v1330
        %4535 = vmatprep.subr.mxu0 %v1347
        %4536 = vmatpush1.msra.mxu0 %v1346
        %4537 = vmatprep.subr.mxu0 %v1363
        %4538 = vmatpush1.msra.mxu0 %v1362
        %4539 = vmatprep.subr.mxu0 %v1379
        %4540 = vmatpush1.msra.mxu0 %v1378
        %4541 = vmatprep.subr.mxu0 %v1395
        %4542 = vmatpush1.msra.mxu0 %v1394
        %4543 = vmatprep.mubr.f32.mxu0 %v351
        %4544 = vmatmul.mubr.f32.gmra.mrb[0].mxu0 %v350
        %v4545 = vpop.f32.mrb[0].mxu0
        %v4546 = vadd.f32 %v4475, %v4545
        %v4547 = vpop.f32.mrb[0].mxu0
        %v4548 = vadd.f32 %v4477, %v4547
        %4549 = vdwg.mxu0
        %4550 = vmatprep.subr.mxu0 %v1411
        %4551 = vmatpush1.msra.mxu0 %v1410
        %4552 = vmatprep.subr.mxu0 %v1427
        %4553 = vmatpush1.msra.mxu0 %v1426
        %4554 = vmatprep.subr.mxu0 %v1443
        %4555 = vmatpush1.msra.mxu0 %v1442
        %4556 = vmatprep.subr.mxu0 %v1459
        %4557 = vmatpush1.msra.mxu0 %v1458
        %4558 = vmatprep.subr.mxu0 %v1475
        %4559 = vmatpush1.msra.mxu0 %v1474
        %4560 = vmatprep.subr.mxu0 %v1491
        %4561 = vmatpush1.msra.mxu0 %v1490
        %4562 = vmatprep.subr.mxu0 %v1507
        %4563 = vmatpush1.msra.mxu0 %v1506
        %4564 = vmatprep.subr.mxu0 %v1523
        %4565 = vmatpush1.msra.mxu0 %v1522
        %4566 = vmatprep.subr.mxu0 %v1539
        %4567 = vmatpush1.msra.mxu0 %v1538
        %4568 = vmatprep.subr.mxu0 %v1555
        %4569 = vmatpush1.msra.mxu0 %v1554
        %4570 = vmatprep.subr.mxu0 %v1571
        %4571 = vmatpush1.msra.mxu0 %v1570
        %4572 = vmatprep.subr.mxu0 %v1587
        %4573 = vmatpush1.msra.mxu0 %v1586
        %4574 = vmatprep.subr.mxu0 %v1603
        %4575 = vmatpush1.msra.mxu0 %v1602
        %4576 = vmatprep.subr.mxu0 %v1619
        %4577 = vmatpush1.msra.mxu0 %v1618
        %4578 = vmatprep.subr.mxu0 %v1635
        %4579 = vmatpush1.msra.mxu0 %v1634
        %4580 = vmatprep.subr.mxu0 %v1651
        %4581 = vmatpush1.msra.mxu0 %v1650
        %4582 = vmatprep.subr.mxu0 %v1667
        %4583 = vmatpush1.msra.mxu0 %v1666
        %4584 = vmatprep.subr.mxu0 %v1683
        %4585 = vmatpush1.msra.mxu0 %v1682
        %4586 = vmatprep.subr.mxu0 %v1699
        %4587 = vmatpush1.msra.mxu0 %v1698
        %4588 = vmatprep.subr.mxu0 %v1715
        %4589 = vmatpush1.msra.mxu0 %v1714
        %4590 = vmatprep.subr.mxu0 %v1731
        %4591 = vmatpush1.msra.mxu0 %v1730
        %4592 = vmatprep.subr.mxu0 %v1747
        %4593 = vmatpush1.msra.mxu0 %v1746
        %4594 = vmatprep.subr.mxu0 %v1763
        %4595 = vmatpush1.msra.mxu0 %v1762
        %4596 = vmatprep.subr.mxu0 %v1779
        %4597 = vmatpush1.msra.mxu0 %v1778
        %4598 = vmatprep.subr.mxu0 %v1795
        %4599 = vmatpush1.msra.mxu0 %v1794
        %4600 = vmatprep.subr.mxu0 %v1811
        %4601 = vmatpush1.msra.mxu0 %v1810
        %4602 = vmatprep.subr.mxu0 %v1827
        %4603 = vmatpush1.msra.mxu0 %v1826
        %4604 = vmatprep.subr.mxu0 %v1843
        %4605 = vmatpush1.msra.mxu0 %v1842
        %4606 = vmatprep.subr.mxu0 %v1859
        %4607 = vmatpush1.msra.mxu0 %v1858
        %4608 = vmatprep.subr.mxu0 %v1875
        %4609 = vmatpush1.msra.mxu0 %v1874
        %4610 = vmatprep.subr.mxu0 %v1891
        %4611 = vmatpush1.msra.mxu0 %v1890
        %4612 = vmatprep.subr.mxu0 %v1907
        %4613 = vmatpush1.msra.mxu0 %v1906
        %4614 = vmatprep.mubr.f32.mxu0 %v353
        %4615 = vmatmul.mubr.f32.gmra.mrb[0].mxu0 %v352
        %v4616 = vpop.f32.mrb[0].mxu0
        %v4617 = vadd.f32 %v4546, %v4616
        %v4618 = vpop.f32.mrb[0].mxu0
        %v4619 = vadd.f32 %v4548, %v4618
        %4620 = vdwg.mxu0
        %4621 = vmatprep.subr.mxu0 %v1923
        %4622 = vmatpush1.msra.mxu0 %v1922
        %4623 = vmatprep.subr.mxu0 %v1939
        %4624 = vmatpush1.msra.mxu0 %v1938
        %4625 = vmatprep.subr.mxu0 %v1955
        %4626 = vmatpush1.msra.mxu0 %v1954
        %4627 = vmatprep.subr.mxu0 %v1971
        %4628 = vmatpush1.msra.mxu0 %v1970
        %4629 = vmatprep.subr.mxu0 %v1987
        %4630 = vmatpush1.msra.mxu0 %v1986
        %4631 = vmatprep.subr.mxu0 %v2003
        %4632 = vmatpush1.msra.mxu0 %v2002
        %4633 = vmatprep.subr.mxu0 %v2019
        %4634 = vmatpush1.msra.mxu0 %v2018
        %4635 = vmatprep.subr.mxu0 %v2035
        %4636 = vmatpush1.msra.mxu0 %v2034
        %4637 = vmatprep.subr.mxu0 %v2051
        %4638 = vmatpush1.msra.mxu0 %v2050
        %4639 = vmatprep.subr.mxu0 %v2067
        %4640 = vmatpush1.msra.mxu0 %v2066
        %4641 = vmatprep.subr.mxu0 %v2083
        %4642 = vmatpush1.msra.mxu0 %v2082
        %4643 = vmatprep.subr.mxu0 %v2099
        %4644 = vmatpush1.msra.mxu0 %v2098
        %4645 = vmatprep.subr.mxu0 %v2115
        %4646 = vmatpush1.msra.mxu0 %v2114
        %4647 = vmatprep.subr.mxu0 %v2131
        %4648 = vmatpush1.msra.mxu0 %v2130
        %4649 = vmatprep.subr.mxu0 %v2147
        %4650 = vmatpush1.msra.mxu0 %v2146
        %4651 = vmatprep.subr.mxu0 %v2163
        %4652 = vmatpush1.msra.mxu0 %v2162
        %4653 = vmatprep.subr.mxu0 %v2179
        %4654 = vmatpush1.msra.mxu0 %v2178
        %4655 = vmatprep.subr.mxu0 %v2195
        %4656 = vmatpush1.msra.mxu0 %v2194
        %4657 = vmatprep.subr.mxu0 %v2211
        %4658 = vmatpush1.msra.mxu0 %v2210
        %4659 = vmatprep.subr.mxu0 %v2227
        %4660 = vmatpush1.msra.mxu0 %v2226
        %4661 = vmatprep.subr.mxu0 %v2243
        %4662 = vmatpush1.msra.mxu0 %v2242
        %4663 = vmatprep.subr.mxu0 %v2259
        %4664 = vmatpush1.msra.mxu0 %v2258
        %4665 = vmatprep.subr.mxu0 %v2275
        %4666 = vmatpush1.msra.mxu0 %v2274
        %4667 = vmatprep.subr.mxu0 %v2291
        %4668 = vmatpush1.msra.mxu0 %v2290
        %4669 = vmatprep.subr.mxu0 %v2307
        %4670 = vmatpush1.msra.mxu0 %v2306
        %4671 = vmatprep.subr.mxu0 %v2323
        %4672 = vmatpush1.msra.mxu0 %v2322
        %4673 = vmatprep.subr.mxu0 %v2339
        %4674 = vmatpush1.msra.mxu0 %v2338
        %4675 = vmatprep.subr.mxu0 %v2355
        %4676 = vmatpush1.msra.mxu0 %v2354
        %4677 = vmatprep.subr.mxu0 %v2371
        %4678 = vmatpush1.msra.mxu0 %v2370
        %4679 = vmatprep.subr.mxu0 %v2387
        %4680 = vmatpush1.msra.mxu0 %v2386
        %4681 = vmatprep.subr.mxu0 %v2403
        %4682 = vmatpush1.msra.mxu0 %v2402
        %4683 = vmatprep.subr.mxu0 %v2419
        %4684 = vmatpush1.msra.mxu0 %v2418
        %4685 = vmatprep.mubr.f32.mxu0 %v355
        %4686 = vmatmul.mubr.f32.gmra.mrb[0].mxu0 %v354
        %v4687 = vpop.f32.mrb[0].mxu0
        %v4688 = vadd.f32 %v4617, %v4687
        %v4689 = vpop.f32.mrb[0].mxu0
        %v4690 = vadd.f32 %v4619, %v4689
        %4691 = vdwg.mxu0
        %v4692 = vadd.f32 %v356, %v2700
        %v4693 = vadd.f32 %v357, %v2702
        %v4694 = vadd.f32 %v358, %v2984
        %v4695 = vadd.f32 %v359, %v2986
        %v4696 = vadd.f32 %v360, %v3268
        %v4697 = vadd.f32 %v361, %v3270
        %v4698 = vadd.f32 %v362, %v3552
        %v4699 = vadd.f32 %v363, %v3554
        %v4700 = vadd.f32 %v364, %v3836
        %v4701 = vadd.f32 %v365, %v3838
        %v4702 = vadd.f32 %v366, %v4120
        %v4703 = vadd.f32 %v367, %v4122
        %v4704 = vadd.f32 %v368, %v4404
        %v4705 = vadd.f32 %v369, %v4406
        %v4706 = vadd.f32 %v370, %v4688
        %v4707 = vadd.f32 %v371, %v4690
        %4708 = vst [vmem:[#allocation2] sm:$0xff] %v4692
        %4709 = vst [vmem:[#allocation2 + $0x8] sm:$0xff] %v4693
        %4710 = vst [vmem:[#allocation2 + $0x10] sm:$0xff] %v4694
        %4711 = vst [vmem:[#allocation2 + $0x18] sm:$0xff] %v4695
        %4712 = vst [vmem:[#allocation2 + $0x20] sm:$0xff] %v4696
        %4713 = vst [vmem:[#allocation2 + $0x28] sm:$0xff] %v4697
        %4714 = vst [vmem:[#allocation2 + $0x30] sm:$0xff] %v4698
        %4715 = vst [vmem:[#allocation2 + $0x38] sm:$0xff] %v4699
        %4716 = vst [vmem:[#allocation2 + $0x40] sm:$0xff] %v4700
        %4717 = vst [vmem:[#allocation2 + $0x48] sm:$0xff] %v4701
        %4718 = vst [vmem:[#allocation2 + $0x50] sm:$0xff] %v4702
        %4719 = vst [vmem:[#allocation2 + $0x58] sm:$0xff] %v4703
        %4720 = vst [vmem:[#allocation2 + $0x60] sm:$0xff] %v4704
        %4721 = vst [vmem:[#allocation2 + $0x68] sm:$0xff] %v4705
        %4722 = vst [vmem:[#allocation2 + $0x70] sm:$0xff] %v4706
        %4723 = vst [vmem:[#allocation2 + $0x78] sm:$0xff] %v4707
        %p4724 = scmp.eq.s32.totalorder %s27, 7
        // Predicated region
        $region57: #{mlp_block_forward.1} parent=35 // pred_check
          %p4725 = pneg %p4724
        $region58: #{mlp_block_forward.1} parent=35 // pred_check_branch
          %4727 = sbr.rel (%p4725) target = $region60
        $region59: #{mlp_block_forward.1} parent=35 // pred_region
          %v4728 = vld [vmem:[#allocation2] sm:$0xff]
          %v4729 = vld [vmem:[#allocation2 + $0x8] sm:$0xff]
          %v4730 = vld [vmem:[#allocation2 + $0x10] sm:$0xff]
          %v4731 = vld [vmem:[#allocation2 + $0x18] sm:$0xff]
          %v4732 = vld [vmem:[#allocation2 + $0x20] sm:$0xff]
          %v4733 = vld [vmem:[#allocation2 + $0x28] sm:$0xff]
          %v4734 = vld [vmem:[#allocation2 + $0x30] sm:$0xff]
          %v4735 = vld [vmem:[#allocation2 + $0x38] sm:$0xff]
          %v4736 = vld [vmem:[#allocation2 + $0x40] sm:$0xff]
          %v4737 = vld [vmem:[#allocation2 + $0x48] sm:$0xff]
          %v4738 = vld [vmem:[#allocation2 + $0x50] sm:$0xff]
          %v4739 = vld [vmem:[#allocation2 + $0x58] sm:$0xff]
          %v4740 = vld [vmem:[#allocation2 + $0x60] sm:$0xff]
          %v4741 = vld [vmem:[#allocation2 + $0x68] sm:$0xff]
          %v4742 = vld [vmem:[#allocation2 + $0x70] sm:$0xff]
          %v4743 = vld [vmem:[#allocation2 + $0x78] sm:$0xff]
          %v4744 = vld [vmem:[%s274] sm:$0xff]
          %v4745 = vld [vmem:[%s274 + $0x8] sm:$0xff]
          %v4748 = vlaneseq
          %v4749 = vshrl.u32 %v4748, 7
          %v4750 = vsub.s32 0, %v4749
          %v4751 = vrot.slane %v4744, %v4750
          %v4752 = vlaneseq
          %v4753 = vshrl.u32 %v4752, 7
          %v4754 = vsub.s32 1, %v4753
          %v4755 = vrot.slane %v4744, %v4754
          %v4756 = vlaneseq
          %v4757 = vshrl.u32 %v4756, 7
          %v4758 = vsub.s32 2, %v4757
          %v4759 = vrot.slane %v4744, %v4758
          %v4760 = vlaneseq
          %v4761 = vshrl.u32 %v4760, 7
          %v4762 = vsub.s32 3, %v4761
          %v4763 = vrot.slane %v4744, %v4762
          %v4764 = vlaneseq
          %v4765 = vshrl.u32 %v4764, 7
          %v4766 = vsub.s32 4, %v4765
          %v4767 = vrot.slane %v4744, %v4766
          %v4768 = vlaneseq
          %v4769 = vshrl.u32 %v4768, 7
          %v4770 = vsub.s32 5, %v4769
          %v4771 = vrot.slane %v4744, %v4770
          %v4772 = vlaneseq
          %v4773 = vshrl.u32 %v4772, 7
          %v4774 = vsub.s32 6, %v4773
          %v4775 = vrot.slane %v4744, %v4774
          %v4776 = vlaneseq
          %v4777 = vshrl.u32 %v4776, 7
          %v4778 = vsub.s32 7, %v4777
          %v4779 = vrot.slane %v4744, %v4778
          %v4780 = vlaneseq
          %v4781 = vshrl.u32 %v4780, 7
          %v4782 = vsub.s32 0, %v4781
          %v4783 = vrot.slane %v4745, %v4782
          %v4784 = vlaneseq
          %v4785 = vshrl.u32 %v4784, 7
          %v4786 = vsub.s32 1, %v4785
          %v4787 = vrot.slane %v4745, %v4786
          %v4788 = vlaneseq
          %v4789 = vshrl.u32 %v4788, 7
          %v4790 = vsub.s32 2, %v4789
          %v4791 = vrot.slane %v4745, %v4790
          %v4792 = vlaneseq
          %v4793 = vshrl.u32 %v4792, 7
          %v4794 = vsub.s32 3, %v4793
          %v4795 = vrot.slane %v4745, %v4794
          %v4796 = vlaneseq
          %v4797 = vshrl.u32 %v4796, 7
          %v4798 = vsub.s32 4, %v4797
          %v4799 = vrot.slane %v4745, %v4798
          %v4800 = vlaneseq
          %v4801 = vshrl.u32 %v4800, 7
          %v4802 = vsub.s32 5, %v4801
          %v4803 = vrot.slane %v4745, %v4802
          %v4804 = vlaneseq
          %v4805 = vshrl.u32 %v4804, 7
          %v4806 = vsub.s32 6, %v4805
          %v4807 = vrot.slane %v4745, %v4806
          %v4808 = vlaneseq
          %v4809 = vshrl.u32 %v4808, 7
          %v4810 = vsub.s32 7, %v4809
          %v4811 = vrot.slane %v4745, %v4810
          %v4828 = vadd.f32 %v4728, %v4751
          %v4829 = vadd.f32 %v4729, %v4755
          %v4830 = vadd.f32 %v4730, %v4759
          %v4831 = vadd.f32 %v4731, %v4763
          %v4832 = vadd.f32 %v4732, %v4767
          %v4833 = vadd.f32 %v4733, %v4771
          %v4834 = vadd.f32 %v4734, %v4775
          %v4835 = vadd.f32 %v4735, %v4779
          %v4836 = vadd.f32 %v4736, %v4783
          %v4837 = vadd.f32 %v4737, %v4787
          %v4838 = vadd.f32 %v4738, %v4791
          %v4839 = vadd.f32 %v4739, %v4795
          %v4840 = vadd.f32 %v4740, %v4799
          %v4841 = vadd.f32 %v4741, %v4803
          %v4842 = vadd.f32 %v4742, %v4807
          %v4843 = vadd.f32 %v4743, %v4811
          %v4844 = vmax.f32 %v4828, 0.0
          %v4845 = vmax.f32 %v4829, 0.0
          %v4846 = vmax.f32 %v4830, 0.0
          %v4847 = vmax.f32 %v4831, 0.0
          %v4848 = vmax.f32 %v4832, 0.0
          %v4849 = vmax.f32 %v4833, 0.0
          %v4850 = vmax.f32 %v4834, 0.0
          %v4851 = vmax.f32 %v4835, 0.0
          %v4852 = vmax.f32 %v4836, 0.0
          %v4853 = vmax.f32 %v4837, 0.0
          %v4854 = vmax.f32 %v4838, 0.0
          %v4855 = vmax.f32 %v4839, 0.0
          %v4856 = vmax.f32 %v4840, 0.0
          %v4857 = vmax.f32 %v4841, 0.0
          %v4858 = vmax.f32 %v4842, 0.0
          %v4859 = vmax.f32 %v4843, 0.0
          %v4860 = vld [vmem:[%s283] sm:$0xff]
          %v4861 = vld [vmem:[%s283 + $0x8] sm:$0xff]
          %v4864 = vlaneseq
          %v4865 = vshrl.u32 %v4864, 7
          %v4866 = vsub.s32 0, %v4865
          %v4867 = vrot.slane %v4860, %v4866
          %v4868 = vlaneseq
          %v4869 = vshrl.u32 %v4868, 7
          %v4870 = vsub.s32 1, %v4869
          %v4871 = vrot.slane %v4860, %v4870
          %v4872 = vlaneseq
          %v4873 = vshrl.u32 %v4872, 7
          %v4874 = vsub.s32 2, %v4873
          %v4875 = vrot.slane %v4860, %v4874
          %v4876 = vlaneseq
          %v4877 = vshrl.u32 %v4876, 7
          %v4878 = vsub.s32 3, %v4877
          %v4879 = vrot.slane %v4860, %v4878
          %v4880 = vlaneseq
          %v4881 = vshrl.u32 %v4880, 7
          %v4882 = vsub.s32 4, %v4881
          %v4883 = vrot.slane %v4860, %v4882
          %v4884 = vlaneseq
          %v4885 = vshrl.u32 %v4884, 7
          %v4886 = vsub.s32 5, %v4885
          %v4887 = vrot.slane %v4860, %v4886
          %v4888 = vlaneseq
          %v4889 = vshrl.u32 %v4888, 7
          %v4890 = vsub.s32 6, %v4889
          %v4891 = vrot.slane %v4860, %v4890
          %v4892 = vlaneseq
          %v4893 = vshrl.u32 %v4892, 7
          %v4894 = vsub.s32 7, %v4893
          %v4895 = vrot.slane %v4860, %v4894
          %v4896 = vlaneseq
          %v4897 = vshrl.u32 %v4896, 7
          %v4898 = vsub.s32 0, %v4897
          %v4899 = vrot.slane %v4861, %v4898
          %v4900 = vlaneseq
          %v4901 = vshrl.u32 %v4900, 7
          %v4902 = vsub.s32 1, %v4901
          %v4903 = vrot.slane %v4861, %v4902
          %v4904 = vlaneseq
          %v4905 = vshrl.u32 %v4904, 7
          %v4906 = vsub.s32 2, %v4905
          %v4907 = vrot.slane %v4861, %v4906
          %v4908 = vlaneseq
          %v4909 = vshrl.u32 %v4908, 7
          %v4910 = vsub.s32 3, %v4909
          %v4911 = vrot.slane %v4861, %v4910
          %v4912 = vlaneseq
          %v4913 = vshrl.u32 %v4912, 7
          %v4914 = vsub.s32 4, %v4913
          %v4915 = vrot.slane %v4861, %v4914
          %v4916 = vlaneseq
          %v4917 = vshrl.u32 %v4916, 7
          %v4918 = vsub.s32 5, %v4917
          %v4919 = vrot.slane %v4861, %v4918
          %v4920 = vlaneseq
          %v4921 = vshrl.u32 %v4920, 7
          %v4922 = vsub.s32 6, %v4921
          %v4923 = vrot.slane %v4861, %v4922
          %v4924 = vlaneseq
          %v4925 = vshrl.u32 %v4924, 7
          %v4926 = vsub.s32 7, %v4925
          %v4927 = vrot.slane %v4861, %v4926
          %v4944 = vmul.f32 %v4844, %v4867
          %v4945 = vmul.f32 %v4845, %v4871
          %v4946 = vmul.f32 %v4846, %v4875
          %v4947 = vmul.f32 %v4847, %v4879
          %v4948 = vmul.f32 %v4848, %v4883
          %v4949 = vmul.f32 %v4849, %v4887
          %v4950 = vmul.f32 %v4850, %v4891
          %v4951 = vmul.f32 %v4851, %v4895
          %v4952 = vmul.f32 %v4852, %v4899
          %v4953 = vmul.f32 %v4853, %v4903
          %v4954 = vmul.f32 %v4854, %v4907
          %v4955 = vmul.f32 %v4855, %v4911
          %v4956 = vmul.f32 %v4856, %v4915
          %v4957 = vmul.f32 %v4857, %v4919
          %v4958 = vmul.f32 %v4858, %v4923
          %v4959 = vmul.f32 %v4859, %v4927
          %v4960 = vadd.f32 %v4944, %v4945
          %v4961 = vadd.f32 %v4960, %v4946
          %v4962 = vadd.f32 %v4961, %v4947
          %v4963 = vadd.f32 %v4962, %v4948
          %v4964 = vadd.f32 %v4963, %v4949
          %v4965 = vadd.f32 %v4964, %v4950
          %v4966 = vadd.f32 %v4965, %v4951
          %v4967 = vadd.f32 %v4966, %v4952
          %v4968 = vadd.f32 %v4967, %v4953
          %v4969 = vadd.f32 %v4968, %v4954
          %v4970 = vadd.f32 %v4969, %v4955
          %v4971 = vadd.f32 %v4970, %v4956
          %v4972 = vadd.f32 %v4971, %v4957
          %v4973 = vadd.f32 %v4972, %v4958
          %v4974 = vadd.f32 %v4973, %v4959
          %4975 = vadd.xlane.f32.xlu0 %v4974
          %v4976 = vpop.xlane.xlu0 %4975
          %vm4977 = vcmask 7168
          %4978 = vst.msk [vmem:[%s324] sm:$0xff] %vm4977, %v4976
        $region60: #{mlp_block_forward.1} parent=35 // pred_fallthru
          _
        %p4979 = scmp.lt.s32.totalorder %s26, 1
        %s4980 = scalar_select %p4979, %s26, 1
        %s4981 = smul.addr %s4980, 8
        %s4982 = scalar_lea.vmem %s4, %s4981
        // Predicated region
        $region61: #{mlp_block_forward.1} parent=35 // pred_check
          %p4983 = pneg %p153
        $region62: #{mlp_block_forward.1} parent=35 // pred_check_branch
          %4985 = sbr.rel (%p4983) target = $region64
        $region63: #{mlp_block_forward.1} parent=35 // pred_region
          _
        $region64: #{mlp_block_forward.1} parent=35 // pred_fallthru
          _
      $region36: #{mlp_block_forward.1} parent=5 // pred_fallthru
        _
      %p4986 = scmp.le.s32.totalorder 2, %s17
      // Predicated region
      $region65: #{mlp_block_forward.1} parent=5 // pred_check
        %p4987 = pneg %p4986
      $region66: #{mlp_block_forward.1} parent=5 // pred_check_branch
        %4989 = sbr.rel (%p4987) target = $region68
      $region67: #{mlp_block_forward.1} parent=5 // pred_region
        %s4990 = ssub.s32 %s17, 2
        // Predicated region
        $region69: #{mlp_block_forward.1} parent=67 // pred_check
          %p4991 = pneg %p159
        $region70: #{mlp_block_forward.1} parent=67 // pred_check_branch
          %4993 = sbr.rel (%p4991) target = $region72
        $region71: #{mlp_block_forward.1} parent=67 // pred_region
          %p4994 = scmp.lt.s32.totalorder %s28, 1
          %s4995 = scalar_select %p4994, %s28, 1
          %s4996 = smul.addr %s4995, 8
          %s4997 = scalar_lea.vmem %s4, %s4996
        $region72: #{mlp_block_forward.1} parent=67 // pred_fallthru
          _
      $region68: #{mlp_block_forward.1} parent=5 // pred_fallthru
        _
    $region6: #{mlp_block_forward.1} parent=1 // loop_footer
      %s21 = sadd.s32 1, %s17
    $region7: #{mlp_block_forward.1} parent=1 // loop_footer_branch
      %16 = sbr.rel target = $region3
    $region8: #{mlp_block_forward.1} parent=1 // loop_exit
      _
    %4998 = vsyncpa [#allocation4], 1
    %s4999 = scalar_lea.sflag [#allocation4], 1
    %5000 = vsyncpa %s4999, 1
    %5001 = vsyncpa [#allocation6], 1
    %s5002 = scalar_lea.sflag [#allocation6], 1
    %5003 = vsyncpa %s5002, 1
    %5004 = vsyncpa [#allocation9], 1
    %s5005 = scalar_lea.sflag [#allocation9], 1
    %5006 = vsyncpa %s5005, 1

</llo_original>
